<compile_context>
chip_gen: v7x
topology: tpu7x:2x2x1
jax: 0.10.0
libtpu: 0.0.40
codegen_flags: <defaults>
</compile_context>

<pallas_src>
import jax
import jax.numpy as jnp
from jax.experimental import pallas as pl
from jax.experimental.pallas import tpu as pltpu


# ----------------------------------------------------------------------------
# Kernel 1: fused Conv2d(k=2, s=2) + ReLU + MaxPool2d(2), lane-dense over Mp
#   p_ref: (4, K, tm)  -- axis 0 is the pool-window member d = dh*2 + dw,
#                          K = Cin*2*2 (feature order ci, kh, kw),
#                          tm = tile of pooled pixels (lane-dense)
#   w_ref: (Cout, K)   -- flattened conv weight
#   b_ref: (Cout, 1)
#   o_ref: (Cout, tm)
# ----------------------------------------------------------------------------
def conv_pool_kernel(p_ref, w_ref, b_ref, o_ref):
    w = w_ref[...]
    y0 = jnp.dot(w, p_ref[0], preferred_element_type=jnp.float32)
    y1 = jnp.dot(w, p_ref[1], preferred_element_type=jnp.float32)
    y2 = jnp.dot(w, p_ref[2], preferred_element_type=jnp.float32)
    y3 = jnp.dot(w, p_ref[3], preferred_element_type=jnp.float32)
    m = jnp.maximum(jnp.maximum(y0, y1), jnp.maximum(y2, y3))
    # Bias shared by the 4 pool members + monotone ReLU => hoist after the max.
    o_ref[...] = jnp.maximum(m + b_ref[...], 0.0)


def _pick_tile(mp, tm_max=2048):
    """Largest multiple of 128 dividing mp, capped so that (where possible)
    the grid has >= 2 steps to shard across both v7x TensorCores."""
    if mp % 128 != 0:
        return mp                       # full-extent block (still legal/correct)
    cap = min(tm_max, mp)
    if mp >= 256:
        cap = min(cap, mp // 2)
    best = 128
    t = 256
    while t <= cap:
        if mp % t == 0:
            best = t
        t += 128
    return best


def conv_block(patches, w_t, b_col, tm_max=2048):
    """patches: (4, K, Mp) f32; w_t: (Cout, K); b_col: (Cout, 1) -> (Cout, Mp)."""
    _, K, Mp = patches.shape
    Cout = w_t.shape[0]
    tm = _pick_tile(Mp, tm_max)
    return pl.pallas_call(
        conv_pool_kernel,
        out_shape=jax.ShapeDtypeStruct((Cout, Mp), jnp.float32),
        grid=(Mp // tm,),
        in_specs=[
            pl.BlockSpec((4, K, tm), lambda i: (0, 0, i)),
            pl.BlockSpec((Cout, K), lambda i: (0, 0)),
            pl.BlockSpec((Cout, 1), lambda i: (0, 0)),
        ],
        out_specs=pl.BlockSpec((Cout, tm), lambda i: (0, i)),
        compiler_params=pltpu.CompilerParams(dimension_semantics=("parallel",)),
    )(patches, w_t, b_col)


# ----------------------------------------------------------------------------
# Kernel 2: fused fc1 -> fc2 -> fc3 (no activations, matching forward()).
# All weights (~2.9 MB f32) live in VMEM; intermediates never hit HBM.
# ----------------------------------------------------------------------------
def fc_fused_kernel(x_ref, w1_ref, b1_ref, w2_ref, b2_ref, w3_ref, b3_ref, o_ref):
    h = jnp.dot(x_ref[...], w1_ref[...], preferred_element_type=jnp.float32) + b1_ref[...]
    h = jnp.dot(h, w2_ref[...], preferred_element_type=jnp.float32) + b2_ref[...]
    o_ref[...] = jnp.dot(h, w3_ref[...], preferred_element_type=jnp.float32) + b3_ref[...]


def fc_fused(x, w1, b1, w2, b2, w3, b3):
    B, K1 = x.shape
    N1 = w1.shape[1]
    N2 = w2.shape[1]
    N3 = w3.shape[1]
    return pl.pallas_call(
        fc_fused_kernel,
        out_shape=jax.ShapeDtypeStruct((B, N3), jnp.float32),
        grid=(1,),
        in_specs=[
            pl.BlockSpec((B, K1), lambda i: (0, 0)),
            pl.BlockSpec((K1, N1), lambda i: (0, 0)),
            pl.BlockSpec((1, N1), lambda i: (0, 0)),
            pl.BlockSpec((N1, N2), lambda i: (0, 0)),
            pl.BlockSpec((1, N2), lambda i: (0, 0)),
            pl.BlockSpec((N2, N3), lambda i: (0, 0)),
            pl.BlockSpec((1, N3), lambda i: (0, 0)),
        ],
        out_specs=pl.BlockSpec((B, N3), lambda i: (0, 0)),
    )(x, w1, b1, w2, b2, w3, b3)


# ----------------------------------------------------------------------------
# Patch extraction (single fused XLA reshape+transpose per conv block).
# Emits (4, K, Mp) with d = dh*2+dw, k ordered (ci, kh, kw), m ordered (b,hp,wp).
# ----------------------------------------------------------------------------
def _patches_from_nchw(x):
    """x: (B, C, H, W) -> (4, C*4, B*(H//4)*(W//4))."""
    B, C, H, W = x.shape
    Hp, Wp = H // 4, W // 4
    xr = x.reshape(B, C, Hp, 2, 2, Wp, 2, 2)          # (b, c, hp, dh, kh, wp, dw, kw)
    p = xr.transpose(3, 6, 1, 4, 7, 0, 2, 5).reshape(4, C * 4, B * Hp * Wp)
    return p, (B, Hp, Wp)


def _patches_from_cbhw(x):
    """x: (C, B, H, W) channel-major -> (4, C*4, B*(H//4)*(W//4))."""
    C, B, H, W = x.shape
    Hp, Wp = H // 4, W // 4
    xr = x.reshape(C, B, Hp, 2, 2, Wp, 2, 2)          # (c, b, hp, dh, kh, wp, dw, kw)
    p = xr.transpose(3, 6, 0, 4, 7, 1, 2, 5).reshape(4, C * 4, B * Hp * Wp)
    return p, (B, Hp, Wp)


# ----------------------------------------------------------------------------
# Full forward pass (expects pre-prepared / pre-transposed kernel params)
# ----------------------------------------------------------------------------
def cnn_forward(x_nchw, p):
    B = x_nchw.shape[0]

    # Conv block 1 (input NCHW).
    patches1, (B1, Hp1, Wp1) = _patches_from_nchw(x_nchw)
    y1 = conv_block(patches1, p["c1w_t"], p["c1b_c"])            # (5, B*64*64)
    y1 = y1.reshape(-1, B1, Hp1, Wp1)                            # channel-major (C,B,H,W)

    # Conv block 2 (input already channel-major -> no extra layout pass).
    patches2, (B2, Hp2, Wp2) = _patches_from_cbhw(y1)
    y2 = conv_block(patches2, p["c2w_t"], p["c2b_c"])            # (5, B*16*16)
    y2 = y2.reshape(-1, B2, Hp2, Wp2)                            # (5, B, 16, 16)

    # Match torch's x.view(B, -1) on an NCHW tensor: flatten order (c, h, w).
    x_flat = jnp.transpose(y2, (1, 0, 2, 3)).reshape(B, -1)      # (B, 1280), ~10 KB

    return fc_fused(x_flat,
                    p["f1w_t"], p["f1b_r"],
                    p["f2w_t"], p["f2b_r"],
                    p["f3w_t"], p["f3b_r"])


def prepare_params(p):
    """One-time repacking of PyTorch-layout params into kernel layouts."""
    cout1 = p["c1w"].shape[0]
    cout2 = p["c2w"].shape[0]
    return {
        "c1w_t": p["c1w"].reshape(cout1, -1),       # (Cout, K), feature order (ci,kh,kw)
        "c1b_c": p["c1b"].reshape(-1, 1),           # (Cout, 1)
        "c2w_t": p["c2w"].reshape(cout2, -1),
        "c2b_c": p["c2b"].reshape(-1, 1),
        "f1w_t": p["f1w"].T,                        # (1280, 512)
        "f1b_r": p["f1b"].reshape(1, -1),
        "f2w_t": p["f2w"].T,                        # (512, 128)
        "f2b_r": p["f2b"].reshape(1, -1),
        "f3w_t": p["f3w"].T,                        # (128, 1)
        "f3b_r": p["f3b"].reshape(1, -1),
    }


# ----------------------------------------------------------------------------
# Pure-XLA reference (correctness check of the Pallas path)
# ----------------------------------------------------------------------------
def cnn_reference(x_nchw, params):
    def conv_block_ref(x, w, b):
        y = jax.lax.conv_general_dilated(
            x, w, window_strides=(2, 2), padding="VALID",
            dimension_numbers=("NCHW", "OIHW", "NCHW"))
        y = jnp.maximum(y + b[None, :, None, None], 0.0)
        y = jax.lax.reduce_window(
            y, -jnp.inf, jax.lax.max, (1, 1, 2, 2), (1, 1, 2, 2), "VALID")
        return y

    x = conv_block_ref(x_nchw, params["c1w"], params["c1b"])
    x = conv_block_ref(x, params["c2w"], params["c2b"])
    B = x.shape[0]
    x = x.reshape(B, -1)
    x = x @ params["f1w"].T + params["f1b"]
    x = x @ params["f2w"].T + params["f2b"]
    x = x @ params["f3w"].T + params["f3b"]
    return x


def init_params(key):
    ks = jax.random.split(key, 10)
    return {
        # PyTorch shapes: Conv2d weight (Cout, Cin, kH, kW), Linear weight (out, in)
        "c1w": jax.random.normal(ks[0], (5, 5, 2, 2), jnp.float32) * 0.1,
        "c1b": jax.random.normal(ks[1], (5,), jnp.float32) * 0.1,
        "c2w": jax.random.normal(ks[2], (5, 5, 2, 2), jnp.float32) * 0.1,
        "c2b": jax.random.normal(ks[3], (5,), jnp.float32) * 0.1,
        "f1w": jax.random.normal(ks[4], (512, 1280), jnp.float32) * 0.02,
        "f1b": jax.random.normal(ks[5], (512,), jnp.float32) * 0.02,
        "f2w": jax.random.normal(ks[6], (128, 512), jnp.float32) * 0.02,
        "f2b": jax.random.normal(ks[7], (128,), jnp.float32) * 0.02,
        "f3w": jax.random.normal(ks[8], (1, 128), jnp.float32) * 0.02,
        "f3b": jax.random.normal(ks[9], (1,), jnp.float32) * 0.02,
    }


if __name__ == "__main__":
    key = jax.random.PRNGKey(0)
    pkey, xkey = jax.random.split(key)
    params = init_params(pkey)
    kparams = prepare_params(params)   # one-time weight repacking (no per-call .T)

    # fc1 expects 5*16*16 features -> 256x256 spatial input after two /4 blocks.
    x = jax.random.normal(xkey, (2, 5, 256, 256), jnp.float32)

    fwd = jax.jit(cnn_forward)
    out = jax.block_until_ready(fwd(x, kparams))
    assert out.shape == (2, 1), out.shape

    ref = jax.block_until_ready(jax.jit(cnn_reference)(x, params))
    assert jnp.allclose(out, ref, rtol=2e-2, atol=2e-3), (out, ref)

    print("KERNEL_OK")
</pallas_src>

<mosaic_0001>
module attributes {stable_mosaic.version = 11 : i64} {
  func.func @conv_pool_kernel(%arg0: i32, %arg1: memref<4x20x2048xf32, #tpu.memory_space<vmem>>, %arg2: memref<5x20xf32, #tpu.memory_space<vmem>>, %arg3: memref<5x1xf32, #tpu.memory_space<vmem>>, %arg4: memref<5x2048xf32, #tpu.memory_space<vmem>>) attributes {dimension_semantics = [#tpu.dimension_semantics<parallel>], iteration_bounds = array<i64: 4>, scalar_prefetch = 0 : i64, scratch_operands = 0 : i64, tpu.core_type = #tpu.core_type<tc>, window_params = [{transform_indices = @transform_0, window_bounds = array<i64: 4, 20, 2048>}, {pipeline_mode = #tpu.pipeline_mode<synchronous>, transform_indices = @transform_1, window_bounds = array<i64: 5, 20>}, {pipeline_mode = #tpu.pipeline_mode<synchronous>, transform_indices = @transform_2, window_bounds = array<i64: 5, 1>}, {transform_indices = @transform_3, window_bounds = array<i64: 5, 2048>}]} {
    %c0 = arith.constant 0 : index
    %c0_0 = arith.constant 0 : index
    %0 = vector.load %arg2[%c0, %c0_0] : memref<5x20xf32, #tpu.memory_space<vmem>>, vector<5x20xf32>
    %c0_1 = arith.constant 0 : index
    %c0_2 = arith.constant 0 : index
    %c0_3 = arith.constant 0 : index
    %1 = vector.load %arg1[%c0_1, %c0_2, %c0_3] : memref<4x20x2048xf32, #tpu.memory_space<vmem>>, vector<1x20x2048xf32>
    %2 = vector.shape_cast %1 : vector<1x20x2048xf32> to vector<20x2048xf32>
    %cst = arith.constant dense<0.000000e+00> : vector<5x2048xf32>
    %3 = tpu.matmul %0, %2, %cst {dimension_numbers = #tpu.dot_dimension_numbers<[1], [0], [0], [1], [0, 0, 1, 1], [], []>} : vector<5x20xf32>, vector<20x2048xf32>, vector<5x2048xf32> -> vector<5x2048xf32>
    %c1 = arith.constant 1 : index
    %c0_4 = arith.constant 0 : index
    %c0_5 = arith.constant 0 : index
    %4 = vector.load %arg1[%c1, %c0_4, %c0_5] : memref<4x20x2048xf32, #tpu.memory_space<vmem>>, vector<1x20x2048xf32>
    %5 = vector.shape_cast %4 : vector<1x20x2048xf32> to vector<20x2048xf32>
    %cst_6 = arith.constant dense<0.000000e+00> : vector<5x2048xf32>
    %6 = tpu.matmul %0, %5, %cst_6 {dimension_numbers = #tpu.dot_dimension_numbers<[1], [0], [0], [1], [0, 0, 1, 1], [], []>} : vector<5x20xf32>, vector<20x2048xf32>, vector<5x2048xf32> -> vector<5x2048xf32>
    %c2 = arith.constant 2 : index
    %c0_7 = arith.constant 0 : index
    %c0_8 = arith.constant 0 : index
    %7 = vector.load %arg1[%c2, %c0_7, %c0_8] : memref<4x20x2048xf32, #tpu.memory_space<vmem>>, vector<1x20x2048xf32>
    %8 = vector.shape_cast %7 : vector<1x20x2048xf32> to vector<20x2048xf32>
    %cst_9 = arith.constant dense<0.000000e+00> : vector<5x2048xf32>
    %9 = tpu.matmul %0, %8, %cst_9 {dimension_numbers = #tpu.dot_dimension_numbers<[1], [0], [0], [1], [0, 0, 1, 1], [], []>} : vector<5x20xf32>, vector<20x2048xf32>, vector<5x2048xf32> -> vector<5x2048xf32>
    %c3 = arith.constant 3 : index
    %c0_10 = arith.constant 0 : index
    %c0_11 = arith.constant 0 : index
    %10 = vector.load %arg1[%c3, %c0_10, %c0_11] : memref<4x20x2048xf32, #tpu.memory_space<vmem>>, vector<1x20x2048xf32>
    %11 = vector.shape_cast %10 : vector<1x20x2048xf32> to vector<20x2048xf32>
    %cst_12 = arith.constant dense<0.000000e+00> : vector<5x2048xf32>
    %12 = tpu.matmul %0, %11, %cst_12 {dimension_numbers = #tpu.dot_dimension_numbers<[1], [0], [0], [1], [0, 0, 1, 1], [], []>} : vector<5x20xf32>, vector<20x2048xf32>, vector<5x2048xf32> -> vector<5x2048xf32>
    %13 = arith.maximumf %3, %6 : vector<5x2048xf32>
    %14 = arith.maximumf %9, %12 : vector<5x2048xf32>
    %15 = arith.maximumf %13, %14 : vector<5x2048xf32>
    %c0_13 = arith.constant 0 : index
    %c0_14 = arith.constant 0 : index
    %16 = vector.load %arg3[%c0_13, %c0_14] : memref<5x1xf32, #tpu.memory_space<vmem>>, vector<5x1xf32>
    %17 = vector.broadcast %16 : vector<5x1xf32> to vector<5x2048xf32>
    %18 = arith.addf %15, %17 : vector<5x2048xf32>
    %cst_15 = arith.constant 0.000000e+00 : f32
    %19 = vector.broadcast %cst_15 : f32 to vector<5x2048xf32>
    %20 = arith.maximumf %18, %19 : vector<5x2048xf32>
    %c0_16 = arith.constant 0 : index
    %c0_17 = arith.constant 0 : index
    %21 = vector.load %arg4[%c0_16, %c0_17] : memref<5x2048xf32, #tpu.memory_space<vmem>>, vector<5x2048xf32>
    tpu.vector_store %arg4[%c0_16, %c0_17], %20 {strides = array<i32>} : memref<5x2048xf32, #tpu.memory_space<vmem>>, vector<5x2048xf32>,
    return
  }
  func.func @transform_0(%arg0: i32) -> (i32, i32, i32) {
    %c0_i32 = arith.constant 0 : i32
    %c0_i32_0 = arith.constant 0 : i32
    %c0_i32_1 = arith.constant 0 : i32
    return %c0_i32, %c0_i32_0, %arg0 : i32, i32, i32
  }
  func.func @transform_1(%arg0: i32) -> (i32, i32) {
    %c0_i32 = arith.constant 0 : i32
    %c0_i32_0 = arith.constant 0 : i32
    %c0_i32_1 = arith.constant 0 : i32
    return %c0_i32, %c0_i32_0 : i32, i32
  }
  func.func @transform_2(%arg0: i32) -> (i32, i32) {
    %c0_i32 = arith.constant 0 : i32
    %c0_i32_0 = arith.constant 0 : i32
    %c0_i32_1 = arith.constant 0 : i32
    return %c0_i32, %c0_i32_0 : i32, i32
  }
  func.func @transform_3(%arg0: i32) -> (i32, i32) {
    %c0_i32 = arith.constant 0 : i32
    %c0_i32_0 = arith.constant 0 : i32
    return %c0_i32, %arg0 : i32, i32
  }
}

module attributes {stable_mosaic.version = 11 : i64} {
  func.func @conv_pool_kernel(%arg0: i32, %arg1: memref<4x20x256xf32, #tpu.memory_space<vmem>>, %arg2: memref<5x20xf32, #tpu.memory_space<vmem>>, %arg3: memref<5x1xf32, #tpu.memory_space<vmem>>, %arg4: memref<5x256xf32, #tpu.memory_space<vmem>>) attributes {dimension_semantics = [#tpu.dimension_semantics<parallel>], iteration_bounds = array<i64: 2>, scalar_prefetch = 0 : i64, scratch_operands = 0 : i64, tpu.core_type = #tpu.core_type<tc>, window_params = [{transform_indices = @transform_0, window_bounds = array<i64: 4, 20, 256>}, {pipeline_mode = #tpu.pipeline_mode<synchronous>, transform_indices = @transform_1, window_bounds = array<i64: 5, 20>}, {pipeline_mode = #tpu.pipeline_mode<synchronous>, transform_indices = @transform_2, window_bounds = array<i64: 5, 1>}, {transform_indices = @transform_3, window_bounds = array<i64: 5, 256>}]} {
    %c0 = arith.constant 0 : index
    %c0_0 = arith.constant 0 : index
    %0 = vector.load %arg2[%c0, %c0_0] : memref<5x20xf32, #tpu.memory_space<vmem>>, vector<5x20xf32>
    %c0_1 = arith.constant 0 : index
    %c0_2 = arith.constant 0 : index
    %c0_3 = arith.constant 0 : index
    %1 = vector.load %arg1[%c0_1, %c0_2, %c0_3] : memref<4x20x256xf32, #tpu.memory_space<vmem>>, vector<1x20x256xf32>
    %2 = vector.shape_cast %1 : vector<1x20x256xf32> to vector<20x256xf32>
    %cst = arith.constant dense<0.000000e+00> : vector<5x256xf32>
    %3 = tpu.matmul %0, %2, %cst {dimension_numbers = #tpu.dot_dimension_numbers<[1], [0], [0], [1], [0, 0, 1, 1], [], []>} : vector<5x20xf32>, vector<20x256xf32>, vector<5x256xf32> -> vector<5x256xf32>
    %c1 = arith.constant 1 : index
    %c0_4 = arith.constant 0 : index
    %c0_5 = arith.constant 0 : index
    %4 = vector.load %arg1[%c1, %c0_4, %c0_5] : memref<4x20x256xf32, #tpu.memory_space<vmem>>, vector<1x20x256xf32>
    %5 = vector.shape_cast %4 : vector<1x20x256xf32> to vector<20x256xf32>
    %cst_6 = arith.constant dense<0.000000e+00> : vector<5x256xf32>
    %6 = tpu.matmul %0, %5, %cst_6 {dimension_numbers = #tpu.dot_dimension_numbers<[1], [0], [0], [1], [0, 0, 1, 1], [], []>} : vector<5x20xf32>, vector<20x256xf32>, vector<5x256xf32> -> vector<5x256xf32>
    %c2 = arith.constant 2 : index
    %c0_7 = arith.constant 0 : index
    %c0_8 = arith.constant 0 : index
    %7 = vector.load %arg1[%c2, %c0_7, %c0_8] : memref<4x20x256xf32, #tpu.memory_space<vmem>>, vector<1x20x256xf32>
    %8 = vector.shape_cast %7 : vector<1x20x256xf32> to vector<20x256xf32>
    %cst_9 = arith.constant dense<0.000000e+00> : vector<5x256xf32>
    %9 = tpu.matmul %0, %8, %cst_9 {dimension_numbers = #tpu.dot_dimension_numbers<[1], [0], [0], [1], [0, 0, 1, 1], [], []>} : vector<5x20xf32>, vector<20x256xf32>, vector<5x256xf32> -> vector<5x256xf32>
    %c3 = arith.constant 3 : index
    %c0_10 = arith.constant 0 : index
    %c0_11 = arith.constant 0 : index
    %10 = vector.load %arg1[%c3, %c0_10, %c0_11] : memref<4x20x256xf32, #tpu.memory_space<vmem>>, vector<1x20x256xf32>
    %11 = vector.shape_cast %10 : vector<1x20x256xf32> to vector<20x256xf32>
    %cst_12 = arith.constant dense<0.000000e+00> : vector<5x256xf32>
    %12 = tpu.matmul %0, %11, %cst_12 {dimension_numbers = #tpu.dot_dimension_numbers<[1], [0], [0], [1], [0, 0, 1, 1], [], []>} : vector<5x20xf32>, vector<20x256xf32>, vector<5x256xf32> -> vector<5x256xf32>
    %13 = arith.maximumf %3, %6 : vector<5x256xf32>
    %14 = arith.maximumf %9, %12 : vector<5x256xf32>
    %15 = arith.maximumf %13, %14 : vector<5x256xf32>
    %c0_13 = arith.constant 0 : index
    %c0_14 = arith.constant 0 : index
    %16 = vector.load %arg3[%c0_13, %c0_14] : memref<5x1xf32, #tpu.memory_space<vmem>>, vector<5x1xf32>
    %17 = vector.broadcast %16 : vector<5x1xf32> to vector<5x256xf32>
    %18 = arith.addf %15, %17 : vector<5x256xf32>
    %cst_15 = arith.constant 0.000000e+00 : f32
    %19 = vector.broadcast %cst_15 : f32 to vector<5x256xf32>
    %20 = arith.maximumf %18, %19 : vector<5x256xf32>
    %c0_16 = arith.constant 0 : index
    %c0_17 = arith.constant 0 : index
    %21 = vector.load %arg4[%c0_16, %c0_17] : memref<5x256xf32, #tpu.memory_space<vmem>>, vector<5x256xf32>
    tpu.vector_store %arg4[%c0_16, %c0_17], %20 {strides = array<i32>} : memref<5x256xf32, #tpu.memory_space<vmem>>, vector<5x256xf32>,
    return
  }
  func.func @transform_0(%arg0: i32) -> (i32, i32, i32) {
    %c0_i32 = arith.constant 0 : i32
    %c0_i32_0 = arith.constant 0 : i32
    %c0_i32_1 = arith.constant 0 : i32
    return %c0_i32, %c0_i32_0, %arg0 : i32, i32, i32
  }
  func.func @transform_1(%arg0: i32) -> (i32, i32) {
    %c0_i32 = arith.constant 0 : i32
    %c0_i32_0 = arith.constant 0 : i32
    %c0_i32_1 = arith.constant 0 : i32
    return %c0_i32, %c0_i32_0 : i32, i32
  }
  func.func @transform_2(%arg0: i32) -> (i32, i32) {
    %c0_i32 = arith.constant 0 : i32
    %c0_i32_0 = arith.constant 0 : i32
    %c0_i32_1 = arith.constant 0 : i32
    return %c0_i32, %c0_i32_0 : i32, i32
  }
  func.func @transform_3(%arg0: i32) -> (i32, i32) {
    %c0_i32 = arith.constant 0 : i32
    %c0_i32_0 = arith.constant 0 : i32
    return %c0_i32, %arg0 : i32, i32
  }
}

module attributes {stable_mosaic.version = 11 : i64} {
  func.func @fc_fused_kernel(%arg0: i32, %arg1: memref<2x1280xf32, #tpu.memory_space<vmem>>, %arg2: memref<1280x512xf32, #tpu.memory_space<vmem>>, %arg3: memref<1x512xf32, #tpu.memory_space<vmem>>, %arg4: memref<512x128xf32, #tpu.memory_space<vmem>>, %arg5: memref<1x128xf32, #tpu.memory_space<vmem>>, %arg6: memref<128x1xf32, #tpu.memory_space<vmem>>, %arg7: memref<1x1xf32, #tpu.memory_space<vmem>>, %arg8: memref<2x1xf32, #tpu.memory_space<vmem>>) attributes {dimension_semantics = [#tpu.dimension_semantics<arbitrary>], iteration_bounds = array<i64: 1>, scalar_prefetch = 0 : i64, scratch_operands = 0 : i64, tpu.core_type = #tpu.core_type<tc>, window_params = [{pipeline_mode = #tpu.pipeline_mode<synchronous>, transform_indices = @transform_0, window_bounds = array<i64: 2, 1280>}, {pipeline_mode = #tpu.pipeline_mode<synchronous>, transform_indices = @transform_1, window_bounds = array<i64: 1280, 512>}, {pipeline_mode = #tpu.pipeline_mode<synchronous>, transform_indices = @transform_2, window_bounds = array<i64: 1, 512>}, {pipeline_mode = #tpu.pipeline_mode<synchronous>, transform_indices = @transform_3, window_bounds = array<i64: 512, 128>}, {pipeline_mode = #tpu.pipeline_mode<synchronous>, transform_indices = @transform_4, window_bounds = array<i64: 1, 128>}, {pipeline_mode = #tpu.pipeline_mode<synchronous>, transform_indices = @transform_5, window_bounds = array<i64: 128, 1>}, {pipeline_mode = #tpu.pipeline_mode<synchronous>, transform_indices = @transform_6, window_bounds = array<i64: 1, 1>}, {pipeline_mode = #tpu.pipeline_mode<synchronous>, transform_indices = @transform_7, window_bounds = array<i64: 2, 1>}]} {
    %c0 = arith.constant 0 : index
    %c0_0 = arith.constant 0 : index
    %0 = vector.load %arg1[%c0, %c0_0] : memref<2x1280xf32, #tpu.memory_space<vmem>>, vector<2x1280xf32>
    %c0_1 = arith.constant 0 : index
    %c0_2 = arith.constant 0 : index
    %1 = vector.load %arg2[%c0_1, %c0_2] : memref<1280x512xf32, #tpu.memory_space<vmem>>, vector<1280x512xf32>
    %cst = arith.constant dense<0.000000e+00> : vector<2x512xf32>
    %2 = tpu.matmul %0, %1, %cst {dimension_numbers = #tpu.dot_dimension_numbers<[1], [0], [0], [1], [0, 0, 1, 1], [], []>} : vector<2x1280xf32>, vector<1280x512xf32>, vector<2x512xf32> -> vector<2x512xf32>
    %c0_3 = arith.constant 0 : index
    %c0_4 = arith.constant 0 : index
    %3 = vector.load %arg3[%c0_3, %c0_4] : memref<1x512xf32, #tpu.memory_space<vmem>>, vector<1x512xf32>
    %4 = vector.broadcast %3 : vector<1x512xf32> to vector<2x512xf32>
    %5 = arith.addf %2, %4 : vector<2x512xf32>
    %c0_5 = arith.constant 0 : index
    %c0_6 = arith.constant 0 : index
    %6 = vector.load %arg4[%c0_5, %c0_6] : memref<512x128xf32, #tpu.memory_space<vmem>>, vector<512x128xf32>
    %cst_7 = arith.constant dense<0.000000e+00> : vector<2x128xf32>
    %7 = tpu.matmul %5, %6, %cst_7 {dimension_numbers = #tpu.dot_dimension_numbers<[1], [0], [0], [1], [0, 0, 1, 1], [], []>} : vector<2x512xf32>, vector<512x128xf32>, vector<2x128xf32> -> vector<2x128xf32>
    %c0_8 = arith.constant 0 : index
    %c0_9 = arith.constant 0 : index
    %8 = vector.load %arg5[%c0_8, %c0_9] : memref<1x128xf32, #tpu.memory_space<vmem>>, vector<1x128xf32>
    %9 = vector.broadcast %8 : vector<1x128xf32> to vector<2x128xf32>
    %10 = arith.addf %7, %9 : vector<2x128xf32>
    %c0_10 = arith.constant 0 : index
    %c0_11 = arith.constant 0 : index
    %11 = vector.load %arg6[%c0_10, %c0_11] : memref<128x1xf32, #tpu.memory_space<vmem>>, vector<128x1xf32>
    %cst_12 = arith.constant dense<0.000000e+00> : vector<2x1xf32>
    %12 = tpu.matmul %10, %11, %cst_12 {dimension_numbers = #tpu.dot_dimension_numbers<[1], [0], [0], [1], [0, 0, 1, 1], [], []>} : vector<2x128xf32>, vector<128x1xf32>, vector<2x1xf32> -> vector<2x1xf32>
    %c0_13 = arith.constant 0 : index
    %c0_14 = arith.constant 0 : index
    %13 = vector.load %arg7[%c0_13, %c0_14] : memref<1x1xf32, #tpu.memory_space<vmem>>, vector<1x1xf32>
    %14 = vector.broadcast %13 : vector<1x1xf32> to vector<2x1xf32>
    %15 = arith.addf %12, %14 : vector<2x1xf32>
    %c0_15 = arith.constant 0 : index
    %c0_16 = arith.constant 0 : index
    %16 = vector.load %arg8[%c0_15, %c0_16] : memref<2x1xf32, #tpu.memory_space<vmem>>, vector<2x1xf32>
    tpu.vector_store %arg8[%c0_15, %c0_16], %15 {strides = array<i32>} : memref<2x1xf32, #tpu.memory_space<vmem>>, vector<2x1xf32>,
    return
  }
  func.func @transform_0(%arg0: i32) -> (i32, i32) {
    %c0_i32 = arith.constant 0 : i32
    %c0_i32_0 = arith.constant 0 : i32
    %c0_i32_1 = arith.constant 0 : i32
    return %c0_i32, %c0_i32_0 : i32, i32
  }
  func.func @transform_1(%arg0: i32) -> (i32, i32) {
    %c0_i32 = arith.constant 0 : i32
    %c0_i32_0 = arith.constant 0 : i32
    %c0_i32_1 = arith.constant 0 : i32
    return %c0_i32, %c0_i32_0 : i32, i32
  }
  func.func @transform_2(%arg0: i32) -> (i32, i32) {
    %c0_i32 = arith.constant 0 : i32
    %c0_i32_0 = arith.constant 0 : i32
    %c0_i32_1 = arith.constant 0 : i32
    return %c0_i32, %c0_i32_0 : i32, i32
  }
  func.func @transform_3(%arg0: i32) -> (i32, i32) {
    %c0_i32 = arith.constant 0 : i32
    %c0_i32_0 = arith.constant 0 : i32
    %c0_i32_1 = arith.constant 0 : i32
    return %c0_i32, %c0_i32_0 : i32, i32
  }
  func.func @transform_4(%arg0: i32) -> (i32, i32) {
    %c0_i32 = arith.constant 0 : i32
    %c0_i32_0 = arith.constant 0 : i32
    %c0_i32_1 = arith.constant 0 : i32
    return %c0_i32, %c0_i32_0 : i32, i32
  }
  func.func @transform_5(%arg0: i32) -> (i32, i32) {
    %c0_i32 = arith.constant 0 : i32
    %c0_i32_0 = arith.constant 0 : i32
    %c0_i32_1 = arith.constant 0 : i32
    return %c0_i32, %c0_i32_0 : i32, i32
  }
  func.func @transform_6(%arg0: i32) -> (i32, i32) {
    %c0_i32 = arith.constant 0 : i32
    %c0_i32_0 = arith.constant 0 : i32
    %c0_i32_1 = arith.constant 0 : i32
    return %c0_i32, %c0_i32_0 : i32, i32
  }
  func.func @transform_7(%arg0: i32) -> (i32, i32) {
    %c0_i32 = arith.constant 0 : i32
    %c0_i32_0 = arith.constant 0 : i32
    %c0_i32_1 = arith.constant 0 : i32
    return %c0_i32, %c0_i32_0 : i32, i32
  }
}

</mosaic_0001>

<llo_original>
// kernel: cnn_forward.3
$region0: #{cnn_forward.3}
  #allocation0 [shape = 'u32[]', space=smem, size = 0x4, offset = 0x4, fixed_abs, tag = 'smem constant byte address 0x4 - core index']
  #allocation1 [shape = 'u32[144,128]{1,0:T(1,128)}', space=vmem, size = 0x12000, scoped, tag = 'internal scratch']
  %s0 = inlined_call_operand.vmem [shape: f32[4,20,8192], index: 0, kind: input, shape index: {}]
  %s1 = inlined_call_operand.vmem [shape: f32[5,20], index: 1, kind: input, shape index: {}]
  %s2 = inlined_call_operand.vmem [shape: f32[5,1], index: 2, kind: input, shape index: {}]
  %s3 = inlined_call_operand.vmem [shape: f32[5,8192], index: 3, kind: output, shape index: {}]
  %s4 = sld [smem:[#allocation0]]
  $region68: #{cnn_forward.3} parent=0
    _
  %s6 = ssub.s32 1, %s4
  %s7 = scalar_select 0, %s6, %s4
  $region1: #{cnn_forward.3} parent=0
    #allocation2 [shape = 'u8[1572864]{0}', space=vmem, size = 0x180000, scoped, tag = 'input window, operand 0']
    loop: start=0, step=1, limit=6
    $region2: #{cnn_forward.3} parent=1 // loop_pre_header
      _
    $region3: #{cnn_forward.3} parent=1 // loop_header
      %s9 = sphi 0, %s13
      %p10 = scmp.ge.s32.totalorder %s9, 6
      %s19 = sphi 0, %s21
      %s22 = sphi 0, %s19
      %s23 = sphi 0, %s22
      %s39 = sphi 0, %s23
      %s43 = sphi 0, %s43
      %s45 = sphi 0, %s43
      %s46 = sphi 0, %s45
      %s60 = sphi 0, %s46
      %s64 = sphi 0, %s64
      %s66 = sphi 0, %s64
      %s67 = sphi 0, %s66
      %s81 = sphi 0, %s67
      %s87 = sphi 0, %s89
      %s90 = sphi 0, %s87
      %s91 = sphi 0, %s90
      %s107 = sphi 0, %s91
    $region4: #{cnn_forward.3} parent=1 // loop_header_branch
      %12 = sbr.rel (%p10) target = $region8
    $region5: #{cnn_forward.3} parent=1 // loop_body
      %s14 = ssub.s32 %s9, 1
      %s15 = ssub.s32 %s9, 2
      %s16 = sadd.s32 %s9, 1
      %s17 = ssub.s32 %s9, %s16
      %p18 = scmp.eq.s32.totalorder %s17, 0
      %s20 = sadd.s32 %s19, 1
      %s21 = scalar_select %p18, %s19, %s20
      %p24 = pneg %p18
      %p25 = scmp.eq.s32.totalorder %s9, 3
      %p26 = por %p24, %p25
      %p27 = scmp.ne.s32.totalorder %s19, %s22
      %p28 = scmp.eq.s32.totalorder %s9, 0
      %p29 = por %p27, %p28
      %p30 = scmp.ne.s32.totalorder %s19, %s22
      %p31 = scmp.eq.s32.totalorder %s14, 3
      %p32 = por %p30, %p31
      %p33 = scmp.ne.s32.totalorder %s22, %s23
      %p34 = scmp.eq.s32.totalorder %s14, 0
      %p35 = por %p33, %p34
      %p36 = scmp.ne.s32.totalorder %s22, %s23
      %p37 = scmp.eq.s32.totalorder %s15, 3
      %p38 = por %p36, %p37
      %p40 = scmp.ne.s32.totalorder %s23, %s39
      %p41 = scmp.eq.s32.totalorder %s15, 0
      %p42 = por %p40, %p41
      %s44 = sadd.s32 %s43, 1
      %p47 = scmp.eq.s32.totalorder %s9, 3
      %p48 = scmp.ne.s32.totalorder %s43, %s45
      %p49 = scmp.eq.s32.totalorder %s9, 0
      %p50 = por %p48, %p49
      %p51 = scmp.ne.s32.totalorder %s43, %s45
      %p52 = scmp.eq.s32.totalorder %s14, 3
      %p53 = por %p51, %p52
      %p54 = scmp.ne.s32.totalorder %s45, %s46
      %p55 = scmp.eq.s32.totalorder %s14, 0
      %p56 = por %p54, %p55
      %p57 = scmp.ne.s32.totalorder %s45, %s46
      %p58 = scmp.eq.s32.totalorder %s15, 3
      %p59 = por %p57, %p58
      %p61 = scmp.ne.s32.totalorder %s46, %s60
      %p62 = scmp.eq.s32.totalorder %s15, 0
      %p63 = por %p61, %p62
      %s65 = sadd.s32 %s64, 1
      %p68 = scmp.eq.s32.totalorder %s9, 3
      %p69 = scmp.ne.s32.totalorder %s64, %s66
      %p70 = scmp.eq.s32.totalorder %s9, 0
      %p71 = por %p69, %p70
      %p72 = scmp.ne.s32.totalorder %s64, %s66
      %p73 = scmp.eq.s32.totalorder %s14, 3
      %p74 = por %p72, %p73
      %p75 = scmp.ne.s32.totalorder %s66, %s67
      %p76 = scmp.eq.s32.totalorder %s14, 0
      %p77 = por %p75, %p76
      %p78 = scmp.ne.s32.totalorder %s66, %s67
      %p79 = scmp.eq.s32.totalorder %s15, 3
      %p80 = por %p78, %p79
      %p82 = scmp.ne.s32.totalorder %s67, %s81
      %p83 = scmp.eq.s32.totalorder %s15, 0
      %p84 = por %p82, %p83
      %s85 = ssub.s32 %s9, %s16
      %p86 = scmp.eq.s32.totalorder %s85, 0
      %s88 = sadd.s32 %s87, 1
      %s89 = scalar_select %p86, %s87, %s88
      %p92 = pneg %p86
      %p93 = scmp.eq.s32.totalorder %s9, 3
      %p94 = por %p92, %p93
      %p95 = scmp.ne.s32.totalorder %s87, %s90
      %p96 = scmp.eq.s32.totalorder %s9, 0
      %p97 = por %p95, %p96
      %p98 = scmp.ne.s32.totalorder %s87, %s90
      %p99 = scmp.eq.s32.totalorder %s14, 3
      %p100 = por %p98, %p99
      %p101 = scmp.ne.s32.totalorder %s90, %s91
      %p102 = scmp.eq.s32.totalorder %s14, 0
      %p103 = por %p101, %p102
      %p104 = scmp.ne.s32.totalorder %s90, %s91
      %p105 = scmp.eq.s32.totalorder %s15, 3
      %p106 = por %p104, %p105
      %p108 = scmp.ne.s32.totalorder %s91, %s107
      %p109 = scmp.eq.s32.totalorder %s15, 0
      %p110 = por %p108, %p109
      %p111 = scmp.le.s32.totalorder 1, %s9
      %p112 = scmp.lt.s32.totalorder %s9, 5
      %p113 = pnand %p111, %p112
      %p114 = pneg %p113
      // Predicated region
      $region9: #{cnn_forward.3} parent=5 // pred_check
        _
      $region10: #{cnn_forward.3} parent=5 // pred_check_branch
        %116 = sbr.rel (%p113) target = $region12
      $region11: #{cnn_forward.3} parent=5 // pred_region
        %s117 = ssub.s32 %s9, 1
        // Predicated region
        $region13: #{cnn_forward.3} parent=11 // pred_check
          %p118 = pneg %p56
        $region14: #{cnn_forward.3} parent=11 // pred_check_branch
          %120 = sbr.rel (%p118) target = $region16
        $region15: #{cnn_forward.3} parent=11 // pred_region
          _
        $region16: #{cnn_forward.3} parent=11 // pred_fallthru
          _
        // Predicated region
        $region17: #{cnn_forward.3} parent=11 // pred_check
          %p121 = pneg %p77
        $region18: #{cnn_forward.3} parent=11 // pred_check_branch
          %123 = sbr.rel (%p121) target = $region20
        $region19: #{cnn_forward.3} parent=11 // pred_region
          _
        $region20: #{cnn_forward.3} parent=11 // pred_fallthru
          _
      $region12: #{cnn_forward.3} parent=5 // pred_fallthru
        _
      %p124 = scmp.lt.s32.totalorder %s9, 4
      // Predicated region
      $region21: #{cnn_forward.3} parent=5 // pred_check
        %p125 = pneg %p124
      $region22: #{cnn_forward.3} parent=5 // pred_check_branch
        %127 = sbr.rel (%p125) target = $region24
      $region23: #{cnn_forward.3} parent=5 // pred_region
        // Predicated region
        $region25: #{cnn_forward.3} parent=23 // pred_check
          %p128 = pneg %p29
        $region26: #{cnn_forward.3} parent=23 // pred_check_branch
          %130 = sbr.rel (%p128) target = $region28
        $region27: #{cnn_forward.3} parent=23 // pred_region
          %s131 = sand.u32 %s19, 1
          %s132 = sand.u32 %s19, 1
          %s133 = smul.addr %s132, 1536
          %s134 = scalar_lea.vmem [#allocation2], %s133
          %s135 = smul.u32 16, %s9
          %s136 = smul.addr %s135, 8
          %s137 = scalar_lea.vmem %s0, %s136
          // Predicated region
          $region29: #{cnn_forward.3} parent=27 // pred_check
            _
          $region30: #{cnn_forward.3} parent=27 // pred_check_branch
            %139 = sbr.rel (0) target = $region32
          $region31: #{cnn_forward.3} parent=27 // pred_region
            // Predicated region
            $region33: #{cnn_forward.3} parent=31 // pred_check
              _
            $region34: #{cnn_forward.3} parent=31 // pred_check_branch
              %141 = sbr.rel (0) target = $region36
            $region35: #{cnn_forward.3} parent=31 // pred_region
              loop: start=0, step=1, limit=1
              $region37: #{cnn_forward.3} parent=35 // loop_pre_header
                _
              $region38: #{cnn_forward.3} parent=35 // loop_header
                %s143 = sphi 0, %s147
                %p144 = scmp.ge.s32.totalorder %s143, 1
                %s148 = sphi %s137, %s137
                %s149 = sphi %s134, %s134
              $region39: #{cnn_forward.3} parent=35 // loop_header_branch
                %146 = sbr.rel (%p144) target = $region43
              $region40: #{cnn_forward.3} parent=35 // loop_body
                %v150 = vld [vmem:[%s148] sm:$0xff]
                %151 = vst [vmem:[%s149] sm:$0xff] %v150
                %v152 = vld [vmem:[%s148 + $0x8] sm:$0xff]
                %153 = vst [vmem:[%s149 + $0x8] sm:$0xff] %v152
                %v154 = vld [vmem:[%s148 + $0x10] sm:$0xff]
                %155 = vst [vmem:[%s149 + $0x10] sm:$0xff] %v154
                %v156 = vld [vmem:[%s148 + $0x18] sm:$0xff]
                %157 = vst [vmem:[%s149 + $0x18] sm:$0xff] %v156
                %v158 = vld [vmem:[%s148 + $0x20] sm:$0xff]
                %159 = vst [vmem:[%s149 + $0x20] sm:$0xff] %v158
                %v160 = vld [vmem:[%s148 + $0x28] sm:$0xff]
                %161 = vst [vmem:[%s149 + $0x28] sm:$0xff] %v160
                %v162 = vld [vmem:[%s148 + $0x30] sm:$0xff]
                %163 = vst [vmem:[%s149 + $0x30] sm:$0xff] %v162
                %v164 = vld [vmem:[%s148 + $0x38] sm:$0xff]
                %165 = vst [vmem:[%s149 + $0x38] sm:$0xff] %v164
                %v166 = vld [vmem:[%s148 + $0x40] sm:$0xff]
                %167 = vst [vmem:[%s149 + $0x40] sm:$0xff] %v166
                %v168 = vld [vmem:[%s148 + $0x48] sm:$0xff]
                %169 = vst [vmem:[%s149 + $0x48] sm:$0xff] %v168
                %v170 = vld [vmem:[%s148 + $0x50] sm:$0xff]
                %171 = vst [vmem:[%s149 + $0x50] sm:$0xff] %v170
                %v172 = vld [vmem:[%s148 + $0x58] sm:$0xff]
                %173 = vst [vmem:[%s149 + $0x58] sm:$0xff] %v172
                %v174 = vld [vmem:[%s148 + $0x60] sm:$0xff]
                %175 = vst [vmem:[%s149 + $0x60] sm:$0xff] %v174
                %v176 = vld [vmem:[%s148 + $0x68] sm:$0xff]
                %177 = vst [vmem:[%s149 + $0x68] sm:$0xff] %v176
                %v178 = vld [vmem:[%s148 + $0x70] sm:$0xff]
                %179 = vst [vmem:[%s149 + $0x70] sm:$0xff] %v178
                %v180 = vld [vmem:[%s148 + $0x78] sm:$0xff]
                %181 = vst [vmem:[%s149 + $0x78] sm:$0xff] %v180
                %v182 = vld [vmem:[%s148 + $0x200] sm:$0xff]
                %183 = vst [vmem:[%s149 + $0x80] sm:$0xff] %v182
                %v184 = vld [vmem:[%s148 + $0x208] sm:$0xff]
                %185 = vst [vmem:[%s149 + $0x88] sm:$0xff] %v184
                %v186 = vld [vmem:[%s148 + $0x210] sm:$0xff]
                %187 = vst [vmem:[%s149 + $0x90] sm:$0xff] %v186
                %v188 = vld [vmem:[%s148 + $0x218] sm:$0xff]
                %189 = vst [vmem:[%s149 + $0x98] sm:$0xff] %v188
                %v190 = vld [vmem:[%s148 + $0x220] sm:$0xff]
                %191 = vst [vmem:[%s149 + $0xa0] sm:$0xff] %v190
                %v192 = vld [vmem:[%s148 + $0x228] sm:$0xff]
                %193 = vst [vmem:[%s149 + $0xa8] sm:$0xff] %v192
                %v194 = vld [vmem:[%s148 + $0x230] sm:$0xff]
                %195 = vst [vmem:[%s149 + $0xb0] sm:$0xff] %v194
                %v196 = vld [vmem:[%s148 + $0x238] sm:$0xff]
                %197 = vst [vmem:[%s149 + $0xb8] sm:$0xff] %v196
                %v198 = vld [vmem:[%s148 + $0x240] sm:$0xff]
                %199 = vst [vmem:[%s149 + $0xc0] sm:$0xff] %v198
                %v200 = vld [vmem:[%s148 + $0x248] sm:$0xff]
                %201 = vst [vmem:[%s149 + $0xc8] sm:$0xff] %v200
                %v202 = vld [vmem:[%s148 + $0x250] sm:$0xff]
                %203 = vst [vmem:[%s149 + $0xd0] sm:$0xff] %v202
                %v204 = vld [vmem:[%s148 + $0x258] sm:$0xff]
                %205 = vst [vmem:[%s149 + $0xd8] sm:$0xff] %v204
                %v206 = vld [vmem:[%s148 + $0x260] sm:$0xff]
                %207 = vst [vmem:[%s149 + $0xe0] sm:$0xff] %v206
                %v208 = vld [vmem:[%s148 + $0x268] sm:$0xff]
                %209 = vst [vmem:[%s149 + $0xe8] sm:$0xff] %v208
                %v210 = vld [vmem:[%s148 + $0x270] sm:$0xff]
                %211 = vst [vmem:[%s149 + $0xf0] sm:$0xff] %v210
                %v212 = vld [vmem:[%s148 + $0x278] sm:$0xff]
                %213 = vst [vmem:[%s149 + $0xf8] sm:$0xff] %v212
                %v214 = vld [vmem:[%s148 + $0x400] sm:$0xff]
                %215 = vst [vmem:[%s149 + $0x100] sm:$0xff] %v214
                %v216 = vld [vmem:[%s148 + $0x408] sm:$0xff]
                %217 = vst [vmem:[%s149 + $0x108] sm:$0xff] %v216
                %v218 = vld [vmem:[%s148 + $0x410] sm:$0xff]
                %219 = vst [vmem:[%s149 + $0x110] sm:$0xff] %v218
                %v220 = vld [vmem:[%s148 + $0x418] sm:$0xff]
                %221 = vst [vmem:[%s149 + $0x118] sm:$0xff] %v220
                %v222 = vld [vmem:[%s148 + $0x420] sm:$0xff]
                %223 = vst [vmem:[%s149 + $0x120] sm:$0xff] %v222
                %v224 = vld [vmem:[%s148 + $0x428] sm:$0xff]
                %225 = vst [vmem:[%s149 + $0x128] sm:$0xff] %v224
                %v226 = vld [vmem:[%s148 + $0x430] sm:$0xff]
                %227 = vst [vmem:[%s149 + $0x130] sm:$0xff] %v226
                %v228 = vld [vmem:[%s148 + $0x438] sm:$0xff]
                %229 = vst [vmem:[%s149 + $0x138] sm:$0xff] %v228
                %v230 = vld [vmem:[%s148 + $0x440] sm:$0xff]
                %231 = vst [vmem:[%s149 + $0x140] sm:$0xff] %v230
                %v232 = vld [vmem:[%s148 + $0x448] sm:$0xff]
                %233 = vst [vmem:[%s149 + $0x148] sm:$0xff] %v232
                %v234 = vld [vmem:[%s148 + $0x450] sm:$0xff]
                %235 = vst [vmem:[%s149 + $0x150] sm:$0xff] %v234
                %v236 = vld [vmem:[%s148 + $0x458] sm:$0xff]
                %237 = vst [vmem:[%s149 + $0x158] sm:$0xff] %v236
                %v238 = vld [vmem:[%s148 + $0x460] sm:$0xff]
                %239 = vst [vmem:[%s149 + $0x160] sm:$0xff] %v238
                %v240 = vld [vmem:[%s148 + $0x468] sm:$0xff]
                %241 = vst [vmem:[%s149 + $0x168] sm:$0xff] %v240
                %v242 = vld [vmem:[%s148 + $0x470] sm:$0xff]
                %243 = vst [vmem:[%s149 + $0x170] sm:$0xff] %v242
                %v244 = vld [vmem:[%s148 + $0x478] sm:$0xff]
                %245 = vst [vmem:[%s149 + $0x178] sm:$0xff] %v244
                %v246 = vld [vmem:[%s148 + $0x600] sm:$0xff]
                %247 = vst [vmem:[%s149 + $0x180] sm:$0xff] %v246
                %v248 = vld [vmem:[%s148 + $0x608] sm:$0xff]
                %249 = vst [vmem:[%s149 + $0x188] sm:$0xff] %v248
                %v250 = vld [vmem:[%s148 + $0x610] sm:$0xff]
                %251 = vst [vmem:[%s149 + $0x190] sm:$0xff] %v250
                %v252 = vld [vmem:[%s148 + $0x618] sm:$0xff]
                %253 = vst [vmem:[%s149 + $0x198] sm:$0xff] %v252
                %v254 = vld [vmem:[%s148 + $0x620] sm:$0xff]
                %255 = vst [vmem:[%s149 + $0x1a0] sm:$0xff] %v254
                %v256 = vld [vmem:[%s148 + $0x628] sm:$0xff]
                %257 = vst [vmem:[%s149 + $0x1a8] sm:$0xff] %v256
                %v258 = vld [vmem:[%s148 + $0x630] sm:$0xff]
                %259 = vst [vmem:[%s149 + $0x1b0] sm:$0xff] %v258
                %v260 = vld [vmem:[%s148 + $0x638] sm:$0xff]
                %261 = vst [vmem:[%s149 + $0x1b8] sm:$0xff] %v260
                %v262 = vld [vmem:[%s148 + $0x640] sm:$0xff]
                %263 = vst [vmem:[%s149 + $0x1c0] sm:$0xff] %v262
                %v264 = vld [vmem:[%s148 + $0x648] sm:$0xff]
                %265 = vst [vmem:[%s149 + $0x1c8] sm:$0xff] %v264
                %v266 = vld [vmem:[%s148 + $0x650] sm:$0xff]
                %267 = vst [vmem:[%s149 + $0x1d0] sm:$0xff] %v266
                %v268 = vld [vmem:[%s148 + $0x658] sm:$0xff]
                %269 = vst [vmem:[%s149 + $0x1d8] sm:$0xff] %v268
                %v270 = vld [vmem:[%s148 + $0x660] sm:$0xff]
                %271 = vst [vmem:[%s149 + $0x1e0] sm:$0xff] %v270
                %v272 = vld [vmem:[%s148 + $0x668] sm:$0xff]
                %273 = vst [vmem:[%s149 + $0x1e8] sm:$0xff] %v272
                %v274 = vld [vmem:[%s148 + $0x670] sm:$0xff]
                %275 = vst [vmem:[%s149 + $0x1f0] sm:$0xff] %v274
                %v276 = vld [vmem:[%s148 + $0x678] sm:$0xff]
                %277 = vst [vmem:[%s149 + $0x1f8] sm:$0xff] %v276
                %v278 = vld [vmem:[%s148 + $0x800] sm:$0xff]
                %279 = vst [vmem:[%s149 + $0x200] sm:$0xff] %v278
                %v280 = vld [vmem:[%s148 + $0x808] sm:$0xff]
                %281 = vst [vmem:[%s149 + $0x208] sm:$0xff] %v280
                %v282 = vld [vmem:[%s148 + $0x810] sm:$0xff]
                %283 = vst [vmem:[%s149 + $0x210] sm:$0xff] %v282
                %v284 = vld [vmem:[%s148 + $0x818] sm:$0xff]
                %285 = vst [vmem:[%s149 + $0x218] sm:$0xff] %v284
                %v286 = vld [vmem:[%s148 + $0x820] sm:$0xff]
                %287 = vst [vmem:[%s149 + $0x220] sm:$0xff] %v286
                %v288 = vld [vmem:[%s148 + $0x828] sm:$0xff]
                %289 = vst [vmem:[%s149 + $0x228] sm:$0xff] %v288
                %v290 = vld [vmem:[%s148 + $0x830] sm:$0xff]
                %291 = vst [vmem:[%s149 + $0x230] sm:$0xff] %v290
                %v292 = vld [vmem:[%s148 + $0x838] sm:$0xff]
                %293 = vst [vmem:[%s149 + $0x238] sm:$0xff] %v292
                %v294 = vld [vmem:[%s148 + $0x840] sm:$0xff]
                %295 = vst [vmem:[%s149 + $0x240] sm:$0xff] %v294
                %v296 = vld [vmem:[%s148 + $0x848] sm:$0xff]
                %297 = vst [vmem:[%s149 + $0x248] sm:$0xff] %v296
                %v298 = vld [vmem:[%s148 + $0x850] sm:$0xff]
                %299 = vst [vmem:[%s149 + $0x250] sm:$0xff] %v298
                %v300 = vld [vmem:[%s148 + $0x858] sm:$0xff]
                %301 = vst [vmem:[%s149 + $0x258] sm:$0xff] %v300
                %v302 = vld [vmem:[%s148 + $0x860] sm:$0xff]
                %303 = vst [vmem:[%s149 + $0x260] sm:$0xff] %v302
                %v304 = vld [vmem:[%s148 + $0x868] sm:$0xff]
                %305 = vst [vmem:[%s149 + $0x268] sm:$0xff] %v304
                %v306 = vld [vmem:[%s148 + $0x870] sm:$0xff]
                %307 = vst [vmem:[%s149 + $0x270] sm:$0xff] %v306
                %v308 = vld [vmem:[%s148 + $0x878] sm:$0xff]
                %309 = vst [vmem:[%s149 + $0x278] sm:$0xff] %v308
                %v310 = vld [vmem:[%s148 + $0xa00] sm:$0xff]
                %311 = vst [vmem:[%s149 + $0x280] sm:$0xff] %v310
                %v312 = vld [vmem:[%s148 + $0xa08] sm:$0xff]
                %313 = vst [vmem:[%s149 + $0x288] sm:$0xff] %v312
                %v314 = vld [vmem:[%s148 + $0xa10] sm:$0xff]
                %315 = vst [vmem:[%s149 + $0x290] sm:$0xff] %v314
                %v316 = vld [vmem:[%s148 + $0xa18] sm:$0xff]
                %317 = vst [vmem:[%s149 + $0x298] sm:$0xff] %v316
                %v318 = vld [vmem:[%s148 + $0xa20] sm:$0xff]
                %319 = vst [vmem:[%s149 + $0x2a0] sm:$0xff] %v318
                %v320 = vld [vmem:[%s148 + $0xa28] sm:$0xff]
                %321 = vst [vmem:[%s149 + $0x2a8] sm:$0xff] %v320
                %v322 = vld [vmem:[%s148 + $0xa30] sm:$0xff]
                %323 = vst [vmem:[%s149 + $0x2b0] sm:$0xff] %v322
                %v324 = vld [vmem:[%s148 + $0xa38] sm:$0xff]
                %325 = vst [vmem:[%s149 + $0x2b8] sm:$0xff] %v324
                %v326 = vld [vmem:[%s148 + $0xa40] sm:$0xff]
                %327 = vst [vmem:[%s149 + $0x2c0] sm:$0xff] %v326
                %v328 = vld [vmem:[%s148 + $0xa48] sm:$0xff]
                %329 = vst [vmem:[%s149 + $0x2c8] sm:$0xff] %v328
                %v330 = vld [vmem:[%s148 + $0xa50] sm:$0xff]
                %331 = vst [vmem:[%s149 + $0x2d0] sm:$0xff] %v330
                %v332 = vld [vmem:[%s148 + $0xa58] sm:$0xff]
                %333 = vst [vmem:[%s149 + $0x2d8] sm:$0xff] %v332
                %v334 = vld [vmem:[%s148 + $0xa60] sm:$0xff]
                %335 = vst [vmem:[%s149 + $0x2e0] sm:$0xff] %v334
                %v336 = vld [vmem:[%s148 + $0xa68] sm:$0xff]
                %337 = vst [vmem:[%s149 + $0x2e8] sm:$0xff] %v336
                %v338 = vld [vmem:[%s148 + $0xa70] sm:$0xff]
                %339 = vst [vmem:[%s149 + $0x2f0] sm:$0xff] %v338
                %v340 = vld [vmem:[%s148 + $0xa78] sm:$0xff]
                %341 = vst [vmem:[%s149 + $0x2f8] sm:$0xff] %v340
                %v342 = vld [vmem:[%s148 + $0xc00] sm:$0xff]
                %343 = vst [vmem:[%s149 + $0x300] sm:$0xff] %v342
                %v344 = vld [vmem:[%s148 + $0xc08] sm:$0xff]
                %345 = vst [vmem:[%s149 + $0x308] sm:$0xff] %v344
                %v346 = vld [vmem:[%s148 + $0xc10] sm:$0xff]
                %347 = vst [vmem:[%s149 + $0x310] sm:$0xff] %v346
                %v348 = vld [vmem:[%s148 + $0xc18] sm:$0xff]
                %349 = vst [vmem:[%s149 + $0x318] sm:$0xff] %v348
                %v350 = vld [vmem:[%s148 + $0xc20] sm:$0xff]
                %351 = vst [vmem:[%s149 + $0x320] sm:$0xff] %v350
                %v352 = vld [vmem:[%s148 + $0xc28] sm:$0xff]
                %353 = vst [vmem:[%s149 + $0x328] sm:$0xff] %v352
                %v354 = vld [vmem:[%s148 + $0xc30] sm:$0xff]
                %355 = vst [vmem:[%s149 + $0x330] sm:$0xff] %v354
                %v356 = vld [vmem:[%s148 + $0xc38] sm:$0xff]
                %357 = vst [vmem:[%s149 + $0x338] sm:$0xff] %v356
                %v358 = vld [vmem:[%s148 + $0xc40] sm:$0xff]
                %359 = vst [vmem:[%s149 + $0x340] sm:$0xff] %v358
                %v360 = vld [vmem:[%s148 + $0xc48] sm:$0xff]
                %361 = vst [vmem:[%s149 + $0x348] sm:$0xff] %v360
                %v362 = vld [vmem:[%s148 + $0xc50] sm:$0xff]
                %363 = vst [vmem:[%s149 + $0x350] sm:$0xff] %v362
                %v364 = vld [vmem:[%s148 + $0xc58] sm:$0xff]
                %365 = vst [vmem:[%s149 + $0x358] sm:$0xff] %v364
                %v366 = vld [vmem:[%s148 + $0xc60] sm:$0xff]
                %367 = vst [vmem:[%s149 + $0x360] sm:$0xff] %v366
                %v368 = vld [vmem:[%s148 + $0xc68] sm:$0xff]
                %369 = vst [vmem:[%s149 + $0x368] sm:$0xff] %v368
                %v370 = vld [vmem:[%s148 + $0xc70] sm:$0xff]
                %371 = vst [vmem:[%s149 + $0x370] sm:$0xff] %v370
                %v372 = vld [vmem:[%s148 + $0xc78] sm:$0xff]
                %373 = vst [vmem:[%s149 + $0x378] sm:$0xff] %v372
                %v374 = vld [vmem:[%s148 + $0xe00] sm:$0xff]
                %375 = vst [vmem:[%s149 + $0x380] sm:$0xff] %v374
                %v376 = vld [vmem:[%s148 + $0xe08] sm:$0xff]
                %377 = vst [vmem:[%s149 + $0x388] sm:$0xff] %v376
                %v378 = vld [vmem:[%s148 + $0xe10] sm:$0xff]
                %379 = vst [vmem:[%s149 + $0x390] sm:$0xff] %v378
                %v380 = vld [vmem:[%s148 + $0xe18] sm:$0xff]
                %381 = vst [vmem:[%s149 + $0x398] sm:$0xff] %v380
                %v382 = vld [vmem:[%s148 + $0xe20] sm:$0xff]
                %383 = vst [vmem:[%s149 + $0x3a0] sm:$0xff] %v382
                %v384 = vld [vmem:[%s148 + $0xe28] sm:$0xff]
                %385 = vst [vmem:[%s149 + $0x3a8] sm:$0xff] %v384
                %v386 = vld [vmem:[%s148 + $0xe30] sm:$0xff]
                %387 = vst [vmem:[%s149 + $0x3b0] sm:$0xff] %v386
                %v388 = vld [vmem:[%s148 + $0xe38] sm:$0xff]
                %389 = vst [vmem:[%s149 + $0x3b8] sm:$0xff] %v388
                %v390 = vld [vmem:[%s148 + $0xe40] sm:$0xff]
                %391 = vst [vmem:[%s149 + $0x3c0] sm:$0xff] %v390
                %v392 = vld [vmem:[%s148 + $0xe48] sm:$0xff]
                %393 = vst [vmem:[%s149 + $0x3c8] sm:$0xff] %v392
                %v394 = vld [vmem:[%s148 + $0xe50] sm:$0xff]
                %395 = vst [vmem:[%s149 + $0x3d0] sm:$0xff] %v394
                %v396 = vld [vmem:[%s148 + $0xe58] sm:$0xff]
                %397 = vst [vmem:[%s149 + $0x3d8] sm:$0xff] %v396
                %v398 = vld [vmem:[%s148 + $0xe60] sm:$0xff]
                %399 = vst [vmem:[%s149 + $0x3e0] sm:$0xff] %v398
                %v400 = vld [vmem:[%s148 + $0xe68] sm:$0xff]
                %401 = vst [vmem:[%s149 + $0x3e8] sm:$0xff] %v400
                %v402 = vld [vmem:[%s148 + $0xe70] sm:$0xff]
                %403 = vst [vmem:[%s149 + $0x3f0] sm:$0xff] %v402
                %v404 = vld [vmem:[%s148 + $0xe78] sm:$0xff]
                %405 = vst [vmem:[%s149 + $0x3f8] sm:$0xff] %v404
                %v406 = vld [vmem:[%s148 + $0x1000] sm:$0xff]
                %407 = vst [vmem:[%s149 + $0x400] sm:$0xff] %v406
                %v408 = vld [vmem:[%s148 + $0x1008] sm:$0xff]
                %409 = vst [vmem:[%s149 + $0x408] sm:$0xff] %v408
                %v410 = vld [vmem:[%s148 + $0x1010] sm:$0xff]
                %411 = vst [vmem:[%s149 + $0x410] sm:$0xff] %v410
                %v412 = vld [vmem:[%s148 + $0x1018] sm:$0xff]
                %413 = vst [vmem:[%s149 + $0x418] sm:$0xff] %v412
                %v414 = vld [vmem:[%s148 + $0x1020] sm:$0xff]
                %415 = vst [vmem:[%s149 + $0x420] sm:$0xff] %v414
                %v416 = vld [vmem:[%s148 + $0x1028] sm:$0xff]
                %417 = vst [vmem:[%s149 + $0x428] sm:$0xff] %v416
                %v418 = vld [vmem:[%s148 + $0x1030] sm:$0xff]
                %419 = vst [vmem:[%s149 + $0x430] sm:$0xff] %v418
                %v420 = vld [vmem:[%s148 + $0x1038] sm:$0xff]
                %421 = vst [vmem:[%s149 + $0x438] sm:$0xff] %v420
                %v422 = vld [vmem:[%s148 + $0x1040] sm:$0xff]
                %423 = vst [vmem:[%s149 + $0x440] sm:$0xff] %v422
                %v424 = vld [vmem:[%s148 + $0x1048] sm:$0xff]
                %425 = vst [vmem:[%s149 + $0x448] sm:$0xff] %v424
                %v426 = vld [vmem:[%s148 + $0x1050] sm:$0xff]
                %427 = vst [vmem:[%s149 + $0x450] sm:$0xff] %v426
                %v428 = vld [vmem:[%s148 + $0x1058] sm:$0xff]
                %429 = vst [vmem:[%s149 + $0x458] sm:$0xff] %v428
                %v430 = vld [vmem:[%s148 + $0x1060] sm:$0xff]
                %431 = vst [vmem:[%s149 + $0x460] sm:$0xff] %v430
                %v432 = vld [vmem:[%s148 + $0x1068] sm:$0xff]
                %433 = vst [vmem:[%s149 + $0x468] sm:$0xff] %v432
                %v434 = vld [vmem:[%s148 + $0x1070] sm:$0xff]
                %435 = vst [vmem:[%s149 + $0x470] sm:$0xff] %v434
                %v436 = vld [vmem:[%s148 + $0x1078] sm:$0xff]
                %437 = vst [vmem:[%s149 + $0x478] sm:$0xff] %v436
                %v438 = vld [vmem:[%s148 + $0x1200] sm:$0xff]
                %439 = vst [vmem:[%s149 + $0x480] sm:$0xff] %v438
                %v440 = vld [vmem:[%s148 + $0x1208] sm:$0xff]
                %441 = vst [vmem:[%s149 + $0x488] sm:$0xff] %v440
                %v442 = vld [vmem:[%s148 + $0x1210] sm:$0xff]
                %443 = vst [vmem:[%s149 + $0x490] sm:$0xff] %v442
                %v444 = vld [vmem:[%s148 + $0x1218] sm:$0xff]
                %445 = vst [vmem:[%s149 + $0x498] sm:$0xff] %v444
                %v446 = vld [vmem:[%s148 + $0x1220] sm:$0xff]
                %447 = vst [vmem:[%s149 + $0x4a0] sm:$0xff] %v446
                %v448 = vld [vmem:[%s148 + $0x1228] sm:$0xff]
                %449 = vst [vmem:[%s149 + $0x4a8] sm:$0xff] %v448
                %v450 = vld [vmem:[%s148 + $0x1230] sm:$0xff]
                %451 = vst [vmem:[%s149 + $0x4b0] sm:$0xff] %v450
                %v452 = vld [vmem:[%s148 + $0x1238] sm:$0xff]
                %453 = vst [vmem:[%s149 + $0x4b8] sm:$0xff] %v452
                %v454 = vld [vmem:[%s148 + $0x1240] sm:$0xff]
                %455 = vst [vmem:[%s149 + $0x4c0] sm:$0xff] %v454
                %v456 = vld [vmem:[%s148 + $0x1248] sm:$0xff]
                %457 = vst [vmem:[%s149 + $0x4c8] sm:$0xff] %v456
                %v458 = vld [vmem:[%s148 + $0x1250] sm:$0xff]
                %459 = vst [vmem:[%s149 + $0x4d0] sm:$0xff] %v458
                %v460 = vld [vmem:[%s148 + $0x1258] sm:$0xff]
                %461 = vst [vmem:[%s149 + $0x4d8] sm:$0xff] %v460
                %v462 = vld [vmem:[%s148 + $0x1260] sm:$0xff]
                %463 = vst [vmem:[%s149 + $0x4e0] sm:$0xff] %v462
                %v464 = vld [vmem:[%s148 + $0x1268] sm:$0xff]
                %465 = vst [vmem:[%s149 + $0x4e8] sm:$0xff] %v464
                %v466 = vld [vmem:[%s148 + $0x1270] sm:$0xff]
                %467 = vst [vmem:[%s149 + $0x4f0] sm:$0xff] %v466
                %v468 = vld [vmem:[%s148 + $0x1278] sm:$0xff]
                %469 = vst [vmem:[%s149 + $0x4f8] sm:$0xff] %v468
                %v470 = vld [vmem:[%s148 + $0x1400] sm:$0xff]
                %471 = vst [vmem:[%s149 + $0x500] sm:$0xff] %v470
                %v472 = vld [vmem:[%s148 + $0x1408] sm:$0xff]
                %473 = vst [vmem:[%s149 + $0x508] sm:$0xff] %v472
                %v474 = vld [vmem:[%s148 + $0x1410] sm:$0xff]
                %475 = vst [vmem:[%s149 + $0x510] sm:$0xff] %v474
                %v476 = vld [vmem:[%s148 + $0x1418] sm:$0xff]
                %477 = vst [vmem:[%s149 + $0x518] sm:$0xff] %v476
                %v478 = vld [vmem:[%s148 + $0x1420] sm:$0xff]
                %479 = vst [vmem:[%s149 + $0x520] sm:$0xff] %v478
                %v480 = vld [vmem:[%s148 + $0x1428] sm:$0xff]
                %481 = vst [vmem:[%s149 + $0x528] sm:$0xff] %v480
                %v482 = vld [vmem:[%s148 + $0x1430] sm:$0xff]
                %483 = vst [vmem:[%s149 + $0x530] sm:$0xff] %v482
                %v484 = vld [vmem:[%s148 + $0x1438] sm:$0xff]
                %485 = vst [vmem:[%s149 + $0x538] sm:$0xff] %v484
                %v486 = vld [vmem:[%s148 + $0x1440] sm:$0xff]
                %487 = vst [vmem:[%s149 + $0x540] sm:$0xff] %v486
                %v488 = vld [vmem:[%s148 + $0x1448] sm:$0xff]
                %489 = vst [vmem:[%s149 + $0x548] sm:$0xff] %v488
                %v490 = vld [vmem:[%s148 + $0x1450] sm:$0xff]
                %491 = vst [vmem:[%s149 + $0x550] sm:$0xff] %v490
                %v492 = vld [vmem:[%s148 + $0x1458] sm:$0xff]
                %493 = vst [vmem:[%s149 + $0x558] sm:$0xff] %v492
                %v494 = vld [vmem:[%s148 + $0x1460] sm:$0xff]
                %495 = vst [vmem:[%s149 + $0x560] sm:$0xff] %v494
                %v496 = vld [vmem:[%s148 + $0x1468] sm:$0xff]
                %497 = vst [vmem:[%s149 + $0x568] sm:$0xff] %v496
                %v498 = vld [vmem:[%s148 + $0x1470] sm:$0xff]
                %499 = vst [vmem:[%s149 + $0x570] sm:$0xff] %v498
                %v500 = vld [vmem:[%s148 + $0x1478] sm:$0xff]
                %501 = vst [vmem:[%s149 + $0x578] sm:$0xff] %v500
                %v502 = vld [vmem:[%s148 + $0x1600] sm:$0xff]
                %503 = vst [vmem:[%s149 + $0x580] sm:$0xff] %v502
                %v504 = vld [vmem:[%s148 + $0x1608] sm:$0xff]
                %505 = vst [vmem:[%s149 + $0x588] sm:$0xff] %v504
                %v506 = vld [vmem:[%s148 + $0x1610] sm:$0xff]
                %507 = vst [vmem:[%s149 + $0x590] sm:$0xff] %v506
                %v508 = vld [vmem:[%s148 + $0x1618] sm:$0xff]
                %509 = vst [vmem:[%s149 + $0x598] sm:$0xff] %v508
                %v510 = vld [vmem:[%s148 + $0x1620] sm:$0xff]
                %511 = vst [vmem:[%s149 + $0x5a0] sm:$0xff] %v510
                %v512 = vld [vmem:[%s148 + $0x1628] sm:$0xff]
                %513 = vst [vmem:[%s149 + $0x5a8] sm:$0xff] %v512
                %v514 = vld [vmem:[%s148 + $0x1630] sm:$0xff]
                %515 = vst [vmem:[%s149 + $0x5b0] sm:$0xff] %v514
                %v516 = vld [vmem:[%s148 + $0x1638] sm:$0xff]
                %517 = vst [vmem:[%s149 + $0x5b8] sm:$0xff] %v516
                %v518 = vld [vmem:[%s148 + $0x1640] sm:$0xff]
                %519 = vst [vmem:[%s149 + $0x5c0] sm:$0xff] %v518
                %v520 = vld [vmem:[%s148 + $0x1648] sm:$0xff]
                %521 = vst [vmem:[%s149 + $0x5c8] sm:$0xff] %v520
                %v522 = vld [vmem:[%s148 + $0x1650] sm:$0xff]
                %523 = vst [vmem:[%s149 + $0x5d0] sm:$0xff] %v522
                %v524 = vld [vmem:[%s148 + $0x1658] sm:$0xff]
                %525 = vst [vmem:[%s149 + $0x5d8] sm:$0xff] %v524
                %v526 = vld [vmem:[%s148 + $0x1660] sm:$0xff]
                %527 = vst [vmem:[%s149 + $0x5e0] sm:$0xff] %v526
                %v528 = vld [vmem:[%s148 + $0x1668] sm:$0xff]
                %529 = vst [vmem:[%s149 + $0x5e8] sm:$0xff] %v528
                %v530 = vld [vmem:[%s148 + $0x1670] sm:$0xff]
                %531 = vst [vmem:[%s149 + $0x5f0] sm:$0xff] %v530
                %v532 = vld [vmem:[%s148 + $0x1678] sm:$0xff]
                %533 = vst [vmem:[%s149 + $0x5f8] sm:$0xff] %v532
              $region41: #{cnn_forward.3} parent=35 // loop_footer
                %s147 = sadd.s32 1, %s143
              $region42: #{cnn_forward.3} parent=35 // loop_footer_branch
                %142 = sbr.rel target = $region38
              $region43: #{cnn_forward.3} parent=35 // loop_exit
                _
            $region36: #{cnn_forward.3} parent=31 // pred_fallthru
              _
            // Predicated region
            $region44: #{cnn_forward.3} parent=31 // pred_check
              _
            $region45: #{cnn_forward.3} parent=31 // pred_check_branch
              %535 = sbr.rel target = $region47
            $region46: #{cnn_forward.3} parent=31 // pred_region
              _
            $region47: #{cnn_forward.3} parent=31 // pred_fallthru
              _
          $region32: #{cnn_forward.3} parent=27 // pred_fallthru
            _
          %536 = vnop
        $region28: #{cnn_forward.3} parent=23 // pred_fallthru
          _
      $region24: #{cnn_forward.3} parent=5 // pred_fallthru
        _
      %p537 = scmp.le.s32.totalorder 1, %s9
      %p538 = scmp.lt.s32.totalorder %s9, 5
      %p539 = pnand %p537, %p538
      %p540 = pneg %p539
      // Predicated region
      $region48: #{cnn_forward.3} parent=5 // pred_check
        _
      $region49: #{cnn_forward.3} parent=5 // pred_check_branch
        %542 = sbr.rel (%p539) target = $region51
      $region50: #{cnn_forward.3} parent=5 // pred_region
        %s543 = ssub.s32 %s9, 1
        %s544 = sand.u32 %s22, 1
        %s545 = sand.u32 %s22, 1
        %s546 = smul.addr %s545, 1536
        %s547 = scalar_lea.vmem [#allocation2], %s546
        // Predicated region
        $region52: #{cnn_forward.3} parent=50 // pred_check
          %p548 = pneg %p35
        $region53: #{cnn_forward.3} parent=50 // pred_check_branch
          %550 = sbr.rel (%p548) target = $region55
        $region54: #{cnn_forward.3} parent=50 // pred_region
          _
        $region55: #{cnn_forward.3} parent=50 // pred_fallthru
          _
        %s551 = sand.u32 %s22, 1
        %s552 = sand.u32 %s22, 1
        %s553 = smul.addr %s552, 1536
        %s554 = scalar_lea.vmem [#allocation2], %s553
        %p555 = pneg %p35
        %p556 = pneg %p32
        %p557 = pneg %p56
        %p558 = pneg %p53
        %p559 = pneg %p77
        %p560 = pneg %p74
        %p561 = pneg %p103
        %p562 = pneg %p100
        %s563 = smul.u32 16, %s14
        %p564 = scmp.lt.s32.totalorder %s563, 63
        %s565 = scalar_select %p564, %s563, 63
        %s566 = smul.addr %s565, 8
        %s567 = scalar_lea.vmem %s3, %s566
        %s568 = smul.u32 16, %s14
        %s569 = smul.u32 16, %s14
        %p570 = scmp.lt.s32.totalorder %s569, 63
        %s571 = scalar_select %p570, %s569, 63
        %s572 = smul.addr %s571, 8
        %s573 = scalar_lea.vmem %s3, %s572
        %s574 = smul.u32 16, %s14
        %v575 = vld [vmem:[%s1] sm:$0x1f]
        %v576 = vld [vmem:[%s547] sm:$0xff]
        %v577 = vld [vmem:[%s547 + $0x8] sm:$0xff]
        %v578 = vld [vmem:[%s547 + $0x10] sm:$0xff]
        %v579 = vld [vmem:[%s547 + $0x18] sm:$0xff]
        %v580 = vld [vmem:[%s547 + $0x20] sm:$0xff]
        %v581 = vld [vmem:[%s547 + $0x28] sm:$0xff]
        %v582 = vld [vmem:[%s547 + $0x30] sm:$0xff]
        %v583 = vld [vmem:[%s547 + $0x38] sm:$0xff]
        %v584 = vld [vmem:[%s547 + $0x40] sm:$0xff]
        %v585 = vld [vmem:[%s547 + $0x48] sm:$0xff]
        %v586 = vld [vmem:[%s547 + $0x50] sm:$0xff]
        %v587 = vld [vmem:[%s547 + $0x58] sm:$0xff]
        %v588 = vld [vmem:[%s547 + $0x60] sm:$0xff]
        %v589 = vld [vmem:[%s547 + $0x68] sm:$0xff]
        %v590 = vld [vmem:[%s547 + $0x70] sm:$0xff]
        %v591 = vld [vmem:[%s547 + $0x78] sm:$0xff]
        %v592 = vld [vmem:[%s547 + $0x80] sm:$0xff]
        %v593 = vld [vmem:[%s547 + $0x88] sm:$0xff]
        %v594 = vld [vmem:[%s547 + $0x90] sm:$0xff]
        %v595 = vld [vmem:[%s547 + $0x98] sm:$0xff]
        %v596 = vld [vmem:[%s547 + $0xa0] sm:$0xff]
        %v597 = vld [vmem:[%s547 + $0xa8] sm:$0xff]
        %v598 = vld [vmem:[%s547 + $0xb0] sm:$0xff]
        %v599 = vld [vmem:[%s547 + $0xb8] sm:$0xff]
        %v600 = vld [vmem:[%s547 + $0xc0] sm:$0xff]
        %v601 = vld [vmem:[%s547 + $0xc8] sm:$0xff]
        %v602 = vld [vmem:[%s547 + $0xd0] sm:$0xff]
        %v603 = vld [vmem:[%s547 + $0xd8] sm:$0xff]
        %v604 = vld [vmem:[%s547 + $0xe0] sm:$0xff]
        %v605 = vld [vmem:[%s547 + $0xe8] sm:$0xff]
        %v606 = vld [vmem:[%s547 + $0xf0] sm:$0xff]
        %v607 = vld [vmem:[%s547 + $0xf8] sm:$0xff]
        %v608 = vld [vmem:[%s547 + $0x100] sm:$0xf]
        %v609 = vld [vmem:[%s547 + $0x108] sm:$0xf]
        %v610 = vld [vmem:[%s547 + $0x110] sm:$0xf]
        %v611 = vld [vmem:[%s547 + $0x118] sm:$0xf]
        %v612 = vld [vmem:[%s547 + $0x120] sm:$0xf]
        %v613 = vld [vmem:[%s547 + $0x128] sm:$0xf]
        %v614 = vld [vmem:[%s547 + $0x130] sm:$0xf]
        %v615 = vld [vmem:[%s547 + $0x138] sm:$0xf]
        %v616 = vld [vmem:[%s547 + $0x140] sm:$0xf]
        %v617 = vld [vmem:[%s547 + $0x148] sm:$0xf]
        %v618 = vld [vmem:[%s547 + $0x150] sm:$0xf]
        %v619 = vld [vmem:[%s547 + $0x158] sm:$0xf]
        %v620 = vld [vmem:[%s547 + $0x160] sm:$0xf]
        %v621 = vld [vmem:[%s547 + $0x168] sm:$0xf]
        %v622 = vld [vmem:[%s547 + $0x170] sm:$0xf]
        %v623 = vld [vmem:[%s547 + $0x178] sm:$0xf]
        %vm624 = vcmask 162816
        %v626 = vsel %vm624, %v575, 0
        %vm628 = vcmask 1043456
        %v630 = vsel %vm628, %v608, 0
        %v633 = vsel %vm628, %v609, 0
        %v636 = vsel %vm628, %v610, 0
        %v639 = vsel %vm628, %v611, 0
        %v642 = vsel %vm628, %v612, 0
        %v645 = vsel %vm628, %v613, 0
        %v648 = vsel %vm628, %v614, 0
        %v651 = vsel %vm628, %v615, 0
        %v654 = vsel %vm628, %v616, 0
        %v657 = vsel %vm628, %v617, 0
        %v660 = vsel %vm628, %v618, 0
        %v663 = vsel %vm628, %v619, 0
        %v666 = vsel %vm628, %v620, 0
        %v669 = vsel %vm628, %v621, 0
        %v672 = vsel %vm628, %v622, 0
        %v675 = vsel %vm628, %v623, 0
        %677 = vmatprep.subr.mxu0 %v577
        %678 = vmatpush1.msra.mxu0 %v576
        %679 = vmatprep.subr.mxu0 %v593
        %680 = vmatpush1.msra.mxu0 %v592
        %681 = vmatprep.subr.mxu0 %v633
        %682 = vmatpush1.msra.mxu0 %v630
        %683 = vmatprep.subr.mxu0 0.0
        %684 = vmatpush1.msra.mxu0 0.0
        %685 = vmatprep.subr.mxu0 0.0
        %686 = vmatpush1.msra.mxu0 0.0
        %687 = vmatprep.subr.mxu0 0.0
        %688 = vmatpush1.msra.mxu0 0.0
        %689 = vmatprep.subr.mxu0 0.0
        %690 = vmatpush1.msra.mxu0 0.0
        %691 = vmatprep.subr.mxu0 0.0
        %692 = vmatpush1.msra.mxu0 0.0
        %693 = vmatprep.subr.mxu0 0.0
        %694 = vmatpush1.msra.mxu0 0.0
        %695 = vmatprep.subr.mxu0 0.0
        %696 = vmatpush1.msra.mxu0 0.0
        %697 = vmatprep.subr.mxu0 0.0
        %698 = vmatpush1.msra.mxu0 0.0
        %699 = vmatprep.subr.mxu0 0.0
        %700 = vmatpush1.msra.mxu0 0.0
        %701 = vmatprep.subr.mxu0 0.0
        %702 = vmatpush1.msra.mxu0 0.0
        %703 = vmatprep.subr.mxu0 0.0
        %704 = vmatpush1.msra.mxu0 0.0
        %705 = vmatprep.subr.mxu0 0.0
        %706 = vmatpush1.msra.mxu0 0.0
        %707 = vmatprep.subr.mxu0 0.0
        %708 = vmatpush1.msra.mxu0 0.0
        %709 = vmatprep.subr.mxu0 0.0
        %710 = vmatpush1.msra.mxu0 0.0
        %711 = vmatprep.subr.mxu0 0.0
        %712 = vmatpush1.msra.mxu0 0.0
        %713 = vmatprep.subr.mxu0 0.0
        %714 = vmatpush1.msra.mxu0 0.0
        %715 = vmatprep.subr.mxu0 0.0
        %716 = vmatpush1.msra.mxu0 0.0
        %717 = vmatprep.subr.mxu0 0.0
        %718 = vmatpush1.msra.mxu0 0.0
        %719 = vmatprep.subr.mxu0 0.0
        %720 = vmatpush1.msra.mxu0 0.0
        %721 = vmatprep.subr.mxu0 0.0
        %722 = vmatpush1.msra.mxu0 0.0
        %723 = vmatprep.subr.mxu0 0.0
        %724 = vmatpush1.msra.mxu0 0.0
        %725 = vmatprep.subr.mxu0 0.0
        %726 = vmatpush1.msra.mxu0 0.0
        %727 = vmatprep.subr.mxu0 0.0
        %728 = vmatpush1.msra.mxu0 0.0
        %729 = vmatprep.subr.mxu0 0.0
        %730 = vmatpush1.msra.mxu0 0.0
        %731 = vmatprep.subr.mxu0 0.0
        %732 = vmatpush1.msra.mxu0 0.0
        %733 = vmatprep.subr.mxu0 0.0
        %734 = vmatpush1.msra.mxu0 0.0
        %735 = vmatprep.subr.mxu0 0.0
        %736 = vmatpush1.msra.mxu0 0.0
        %737 = vmatprep.subr.mxu0 0.0
        %738 = vmatpush1.msra.mxu0 0.0
        %739 = vmatprep.subr.mxu0 0.0
        %740 = vmatpush1.msra.mxu0 0.0
        %741 = vmatprep.mubr.f32.mxu0 0.0
        %742 = vmatmul.mubr.f32.gmra.mrb[0].mxu0 %v626
        %v743 = vpop.f32.mrb[0].mxu0
        %v744 = vadd.f32 0.0, %v743
        %v745 = vpop.f32.mrb[0].mxu0
        %v746 = vadd.f32 0.0, %v745
        %747 = vdwg.mxu0
        %748 = vmatprep.subr.mxu0 %v579
        %749 = vmatpush1.msra.mxu0 %v578
        %750 = vmatprep.subr.mxu0 %v595
        %751 = vmatpush1.msra.mxu0 %v594
        %752 = vmatprep.subr.mxu0 %v639
        %753 = vmatpush1.msra.mxu0 %v636
        %754 = vmatprep.subr.mxu0 0.0
        %755 = vmatpush1.msra.mxu0 0.0
        %756 = vmatprep.subr.mxu0 0.0
        %757 = vmatpush1.msra.mxu0 0.0
        %758 = vmatprep.subr.mxu0 0.0
        %759 = vmatpush1.msra.mxu0 0.0
        %760 = vmatprep.subr.mxu0 0.0
        %761 = vmatpush1.msra.mxu0 0.0
        %762 = vmatprep.subr.mxu0 0.0
        %763 = vmatpush1.msra.mxu0 0.0
        %764 = vmatprep.subr.mxu0 0.0
        %765 = vmatpush1.msra.mxu0 0.0
        %766 = vmatprep.subr.mxu0 0.0
        %767 = vmatpush1.msra.mxu0 0.0
        %768 = vmatprep.subr.mxu0 0.0
        %769 = vmatpush1.msra.mxu0 0.0
        %770 = vmatprep.subr.mxu0 0.0
        %771 = vmatpush1.msra.mxu0 0.0
        %772 = vmatprep.subr.mxu0 0.0
        %773 = vmatpush1.msra.mxu0 0.0
        %774 = vmatprep.subr.mxu0 0.0
        %775 = vmatpush1.msra.mxu0 0.0
        %776 = vmatprep.subr.mxu0 0.0
        %777 = vmatpush1.msra.mxu0 0.0
        %778 = vmatprep.subr.mxu0 0.0
        %779 = vmatpush1.msra.mxu0 0.0
        %780 = vmatprep.subr.mxu0 0.0
        %781 = vmatpush1.msra.mxu0 0.0
        %782 = vmatprep.subr.mxu0 0.0
        %783 = vmatpush1.msra.mxu0 0.0
        %784 = vmatprep.subr.mxu0 0.0
        %785 = vmatpush1.msra.mxu0 0.0
        %786 = vmatprep.subr.mxu0 0.0
        %787 = vmatpush1.msra.mxu0 0.0
        %788 = vmatprep.subr.mxu0 0.0
        %789 = vmatpush1.msra.mxu0 0.0
        %790 = vmatprep.subr.mxu0 0.0
        %791 = vmatpush1.msra.mxu0 0.0
        %792 = vmatprep.subr.mxu0 0.0
        %793 = vmatpush1.msra.mxu0 0.0
        %794 = vmatprep.subr.mxu0 0.0
        %795 = vmatpush1.msra.mxu0 0.0
        %796 = vmatprep.subr.mxu0 0.0
        %797 = vmatpush1.msra.mxu0 0.0
        %798 = vmatprep.subr.mxu0 0.0
        %799 = vmatpush1.msra.mxu0 0.0
        %800 = vmatprep.subr.mxu0 0.0
        %801 = vmatpush1.msra.mxu0 0.0
        %802 = vmatprep.subr.mxu0 0.0
        %803 = vmatpush1.msra.mxu0 0.0
        %804 = vmatprep.subr.mxu0 0.0
        %805 = vmatpush1.msra.mxu0 0.0
        %806 = vmatprep.subr.mxu0 0.0
        %807 = vmatpush1.msra.mxu0 0.0
        %808 = vmatprep.subr.mxu0 0.0
        %809 = vmatpush1.msra.mxu0 0.0
        %810 = vmatprep.subr.mxu0 0.0
        %811 = vmatpush1.msra.mxu0 0.0
        %812 = vmatprep.mubr.f32.mxu0 0.0
        %813 = vmatmul.mubr.f32.gmra.mrb[0].mxu0 %v626
        %v814 = vpop.f32.mrb[0].mxu0
        %v815 = vadd.f32 0.0, %v814
        %v816 = vpop.f32.mrb[0].mxu0
        %v817 = vadd.f32 0.0, %v816
        %818 = vdwg.mxu0
        %819 = vmatprep.subr.mxu0 %v581
        %820 = vmatpush1.msra.mxu0 %v580
        %821 = vmatprep.subr.mxu0 %v597
        %822 = vmatpush1.msra.mxu0 %v596
        %823 = vmatprep.subr.mxu0 %v645
        %824 = vmatpush1.msra.mxu0 %v642
        %825 = vmatprep.subr.mxu0 0.0
        %826 = vmatpush1.msra.mxu0 0.0
        %827 = vmatprep.subr.mxu0 0.0
        %828 = vmatpush1.msra.mxu0 0.0
        %829 = vmatprep.subr.mxu0 0.0
        %830 = vmatpush1.msra.mxu0 0.0
        %831 = vmatprep.subr.mxu0 0.0
        %832 = vmatpush1.msra.mxu0 0.0
        %833 = vmatprep.subr.mxu0 0.0
        %834 = vmatpush1.msra.mxu0 0.0
        %835 = vmatprep.subr.mxu0 0.0
        %836 = vmatpush1.msra.mxu0 0.0
        %837 = vmatprep.subr.mxu0 0.0
        %838 = vmatpush1.msra.mxu0 0.0
        %839 = vmatprep.subr.mxu0 0.0
        %840 = vmatpush1.msra.mxu0 0.0
        %841 = vmatprep.subr.mxu0 0.0
        %842 = vmatpush1.msra.mxu0 0.0
        %843 = vmatprep.subr.mxu0 0.0
        %844 = vmatpush1.msra.mxu0 0.0
        %845 = vmatprep.subr.mxu0 0.0
        %846 = vmatpush1.msra.mxu0 0.0
        %847 = vmatprep.subr.mxu0 0.0
        %848 = vmatpush1.msra.mxu0 0.0
        %849 = vmatprep.subr.mxu0 0.0
        %850 = vmatpush1.msra.mxu0 0.0
        %851 = vmatprep.subr.mxu0 0.0
        %852 = vmatpush1.msra.mxu0 0.0
        %853 = vmatprep.subr.mxu0 0.0
        %854 = vmatpush1.msra.mxu0 0.0
        %855 = vmatprep.subr.mxu0 0.0
        %856 = vmatpush1.msra.mxu0 0.0
        %857 = vmatprep.subr.mxu0 0.0
        %858 = vmatpush1.msra.mxu0 0.0
        %859 = vmatprep.subr.mxu0 0.0
        %860 = vmatpush1.msra.mxu0 0.0
        %861 = vmatprep.subr.mxu0 0.0
        %862 = vmatpush1.msra.mxu0 0.0
        %863 = vmatprep.subr.mxu0 0.0
        %864 = vmatpush1.msra.mxu0 0.0
        %865 = vmatprep.subr.mxu0 0.0
        %866 = vmatpush1.msra.mxu0 0.0
        %867 = vmatprep.subr.mxu0 0.0
        %868 = vmatpush1.msra.mxu0 0.0
        %869 = vmatprep.subr.mxu0 0.0
        %870 = vmatpush1.msra.mxu0 0.0
        %871 = vmatprep.subr.mxu0 0.0
        %872 = vmatpush1.msra.mxu0 0.0
        %873 = vmatprep.subr.mxu0 0.0
        %874 = vmatpush1.msra.mxu0 0.0
        %875 = vmatprep.subr.mxu0 0.0
        %876 = vmatpush1.msra.mxu0 0.0
        %877 = vmatprep.subr.mxu0 0.0
        %878 = vmatpush1.msra.mxu0 0.0
        %879 = vmatprep.subr.mxu0 0.0
        %880 = vmatpush1.msra.mxu0 0.0
        %881 = vmatprep.subr.mxu0 0.0
        %882 = vmatpush1.msra.mxu0 0.0
        %883 = vmatprep.mubr.f32.mxu0 0.0
        %884 = vmatmul.mubr.f32.gmra.mrb[0].mxu0 %v626
        %v885 = vpop.f32.mrb[0].mxu0
        %v886 = vadd.f32 0.0, %v885
        %v887 = vpop.f32.mrb[0].mxu0
        %v888 = vadd.f32 0.0, %v887
        %889 = vdwg.mxu0
        %890 = vmatprep.subr.mxu0 %v583
        %891 = vmatpush1.msra.mxu0 %v582
        %892 = vmatprep.subr.mxu0 %v599
        %893 = vmatpush1.msra.mxu0 %v598
        %894 = vmatprep.subr.mxu0 %v651
        %895 = vmatpush1.msra.mxu0 %v648
        %896 = vmatprep.subr.mxu0 0.0
        %897 = vmatpush1.msra.mxu0 0.0
        %898 = vmatprep.subr.mxu0 0.0
        %899 = vmatpush1.msra.mxu0 0.0
        %900 = vmatprep.subr.mxu0 0.0
        %901 = vmatpush1.msra.mxu0 0.0
        %902 = vmatprep.subr.mxu0 0.0
        %903 = vmatpush1.msra.mxu0 0.0
        %904 = vmatprep.subr.mxu0 0.0
        %905 = vmatpush1.msra.mxu0 0.0
        %906 = vmatprep.subr.mxu0 0.0
        %907 = vmatpush1.msra.mxu0 0.0
        %908 = vmatprep.subr.mxu0 0.0
        %909 = vmatpush1.msra.mxu0 0.0
        %910 = vmatprep.subr.mxu0 0.0
        %911 = vmatpush1.msra.mxu0 0.0
        %912 = vmatprep.subr.mxu0 0.0
        %913 = vmatpush1.msra.mxu0 0.0
        %914 = vmatprep.subr.mxu0 0.0
        %915 = vmatpush1.msra.mxu0 0.0
        %916 = vmatprep.subr.mxu0 0.0
        %917 = vmatpush1.msra.mxu0 0.0
        %918 = vmatprep.subr.mxu0 0.0
        %919 = vmatpush1.msra.mxu0 0.0
        %920 = vmatprep.subr.mxu0 0.0
        %921 = vmatpush1.msra.mxu0 0.0
        %922 = vmatprep.subr.mxu0 0.0
        %923 = vmatpush1.msra.mxu0 0.0
        %924 = vmatprep.subr.mxu0 0.0
        %925 = vmatpush1.msra.mxu0 0.0
        %926 = vmatprep.subr.mxu0 0.0
        %927 = vmatpush1.msra.mxu0 0.0
        %928 = vmatprep.subr.mxu0 0.0
        %929 = vmatpush1.msra.mxu0 0.0
        %930 = vmatprep.subr.mxu0 0.0
        %931 = vmatpush1.msra.mxu0 0.0
        %932 = vmatprep.subr.mxu0 0.0
        %933 = vmatpush1.msra.mxu0 0.0
        %934 = vmatprep.subr.mxu0 0.0
        %935 = vmatpush1.msra.mxu0 0.0
        %936 = vmatprep.subr.mxu0 0.0
        %937 = vmatpush1.msra.mxu0 0.0
        %938 = vmatprep.subr.mxu0 0.0
        %939 = vmatpush1.msra.mxu0 0.0
        %940 = vmatprep.subr.mxu0 0.0
        %941 = vmatpush1.msra.mxu0 0.0
        %942 = vmatprep.subr.mxu0 0.0
        %943 = vmatpush1.msra.mxu0 0.0
        %944 = vmatprep.subr.mxu0 0.0
        %945 = vmatpush1.msra.mxu0 0.0
        %946 = vmatprep.subr.mxu0 0.0
        %947 = vmatpush1.msra.mxu0 0.0
        %948 = vmatprep.subr.mxu0 0.0
        %949 = vmatpush1.msra.mxu0 0.0
        %950 = vmatprep.subr.mxu0 0.0
        %951 = vmatpush1.msra.mxu0 0.0
        %952 = vmatprep.subr.mxu0 0.0
        %953 = vmatpush1.msra.mxu0 0.0
        %954 = vmatprep.mubr.f32.mxu0 0.0
        %955 = vmatmul.mubr.f32.gmra.mrb[0].mxu0 %v626
        %v956 = vpop.f32.mrb[0].mxu0
        %v957 = vadd.f32 0.0, %v956
        %v958 = vpop.f32.mrb[0].mxu0
        %v959 = vadd.f32 0.0, %v958
        %960 = vdwg.mxu0
        %961 = vmatprep.subr.mxu0 %v585
        %962 = vmatpush1.msra.mxu0 %v584
        %963 = vmatprep.subr.mxu0 %v601
        %964 = vmatpush1.msra.mxu0 %v600
        %965 = vmatprep.subr.mxu0 %v657
        %966 = vmatpush1.msra.mxu0 %v654
        %967 = vmatprep.subr.mxu0 0.0
        %968 = vmatpush1.msra.mxu0 0.0
        %969 = vmatprep.subr.mxu0 0.0
        %970 = vmatpush1.msra.mxu0 0.0
        %971 = vmatprep.subr.mxu0 0.0
        %972 = vmatpush1.msra.mxu0 0.0
        %973 = vmatprep.subr.mxu0 0.0
        %974 = vmatpush1.msra.mxu0 0.0
        %975 = vmatprep.subr.mxu0 0.0
        %976 = vmatpush1.msra.mxu0 0.0
        %977 = vmatprep.subr.mxu0 0.0
        %978 = vmatpush1.msra.mxu0 0.0
        %979 = vmatprep.subr.mxu0 0.0
        %980 = vmatpush1.msra.mxu0 0.0
        %981 = vmatprep.subr.mxu0 0.0
        %982 = vmatpush1.msra.mxu0 0.0
        %983 = vmatprep.subr.mxu0 0.0
        %984 = vmatpush1.msra.mxu0 0.0
        %985 = vmatprep.subr.mxu0 0.0
        %986 = vmatpush1.msra.mxu0 0.0
        %987 = vmatprep.subr.mxu0 0.0
        %988 = vmatpush1.msra.mxu0 0.0
        %989 = vmatprep.subr.mxu0 0.0
        %990 = vmatpush1.msra.mxu0 0.0
        %991 = vmatprep.subr.mxu0 0.0
        %992 = vmatpush1.msra.mxu0 0.0
        %993 = vmatprep.subr.mxu0 0.0
        %994 = vmatpush1.msra.mxu0 0.0
        %995 = vmatprep.subr.mxu0 0.0
        %996 = vmatpush1.msra.mxu0 0.0
        %997 = vmatprep.subr.mxu0 0.0
        %998 = vmatpush1.msra.mxu0 0.0
        %999 = vmatprep.subr.mxu0 0.0
        %1000 = vmatpush1.msra.mxu0 0.0
        %1001 = vmatprep.subr.mxu0 0.0
        %1002 = vmatpush1.msra.mxu0 0.0
        %1003 = vmatprep.subr.mxu0 0.0
        %1004 = vmatpush1.msra.mxu0 0.0
        %1005 = vmatprep.subr.mxu0 0.0
        %1006 = vmatpush1.msra.mxu0 0.0
        %1007 = vmatprep.subr.mxu0 0.0
        %1008 = vmatpush1.msra.mxu0 0.0
        %1009 = vmatprep.subr.mxu0 0.0
        %1010 = vmatpush1.msra.mxu0 0.0
        %1011 = vmatprep.subr.mxu0 0.0
        %1012 = vmatpush1.msra.mxu0 0.0
        %1013 = vmatprep.subr.mxu0 0.0
        %1014 = vmatpush1.msra.mxu0 0.0
        %1015 = vmatprep.subr.mxu0 0.0
        %1016 = vmatpush1.msra.mxu0 0.0
        %1017 = vmatprep.subr.mxu0 0.0
        %1018 = vmatpush1.msra.mxu0 0.0
        %1019 = vmatprep.subr.mxu0 0.0
        %1020 = vmatpush1.msra.mxu0 0.0
        %1021 = vmatprep.subr.mxu0 0.0
        %1022 = vmatpush1.msra.mxu0 0.0
        %1023 = vmatprep.subr.mxu0 0.0
        %1024 = vmatpush1.msra.mxu0 0.0
        %1025 = vmatprep.mubr.f32.mxu0 0.0
        %1026 = vmatmul.mubr.f32.gmra.mrb[0].mxu0 %v626
        %v1027 = vpop.f32.mrb[0].mxu0
        %v1028 = vadd.f32 0.0, %v1027
        %v1029 = vpop.f32.mrb[0].mxu0
        %v1030 = vadd.f32 0.0, %v1029
        %1031 = vdwg.mxu0
        %1032 = vmatprep.subr.mxu0 %v587
        %1033 = vmatpush1.msra.mxu0 %v586
        %1034 = vmatprep.subr.mxu0 %v603
        %1035 = vmatpush1.msra.mxu0 %v602
        %1036 = vmatprep.subr.mxu0 %v663
        %1037 = vmatpush1.msra.mxu0 %v660
        %1038 = vmatprep.subr.mxu0 0.0
        %1039 = vmatpush1.msra.mxu0 0.0
        %1040 = vmatprep.subr.mxu0 0.0
        %1041 = vmatpush1.msra.mxu0 0.0
        %1042 = vmatprep.subr.mxu0 0.0
        %1043 = vmatpush1.msra.mxu0 0.0
        %1044 = vmatprep.subr.mxu0 0.0
        %1045 = vmatpush1.msra.mxu0 0.0
        %1046 = vmatprep.subr.mxu0 0.0
        %1047 = vmatpush1.msra.mxu0 0.0
        %1048 = vmatprep.subr.mxu0 0.0
        %1049 = vmatpush1.msra.mxu0 0.0
        %1050 = vmatprep.subr.mxu0 0.0
        %1051 = vmatpush1.msra.mxu0 0.0
        %1052 = vmatprep.subr.mxu0 0.0
        %1053 = vmatpush1.msra.mxu0 0.0
        %1054 = vmatprep.subr.mxu0 0.0
        %1055 = vmatpush1.msra.mxu0 0.0
        %1056 = vmatprep.subr.mxu0 0.0
        %1057 = vmatpush1.msra.mxu0 0.0
        %1058 = vmatprep.subr.mxu0 0.0
        %1059 = vmatpush1.msra.mxu0 0.0
        %1060 = vmatprep.subr.mxu0 0.0
        %1061 = vmatpush1.msra.mxu0 0.0
        %1062 = vmatprep.subr.mxu0 0.0
        %1063 = vmatpush1.msra.mxu0 0.0
        %1064 = vmatprep.subr.mxu0 0.0
        %1065 = vmatpush1.msra.mxu0 0.0
        %1066 = vmatprep.subr.mxu0 0.0
        %1067 = vmatpush1.msra.mxu0 0.0
        %1068 = vmatprep.subr.mxu0 0.0
        %1069 = vmatpush1.msra.mxu0 0.0
        %1070 = vmatprep.subr.mxu0 0.0
        %1071 = vmatpush1.msra.mxu0 0.0
        %1072 = vmatprep.subr.mxu0 0.0
        %1073 = vmatpush1.msra.mxu0 0.0
        %1074 = vmatprep.subr.mxu0 0.0
        %1075 = vmatpush1.msra.mxu0 0.0
        %1076 = vmatprep.subr.mxu0 0.0
        %1077 = vmatpush1.msra.mxu0 0.0
        %1078 = vmatprep.subr.mxu0 0.0
        %1079 = vmatpush1.msra.mxu0 0.0
        %1080 = vmatprep.subr.mxu0 0.0
        %1081 = vmatpush1.msra.mxu0 0.0
        %1082 = vmatprep.subr.mxu0 0.0
        %1083 = vmatpush1.msra.mxu0 0.0
        %1084 = vmatprep.subr.mxu0 0.0
        %1085 = vmatpush1.msra.mxu0 0.0
        %1086 = vmatprep.subr.mxu0 0.0
        %1087 = vmatpush1.msra.mxu0 0.0
        %1088 = vmatprep.subr.mxu0 0.0
        %1089 = vmatpush1.msra.mxu0 0.0
        %1090 = vmatprep.subr.mxu0 0.0
        %1091 = vmatpush1.msra.mxu0 0.0
        %1092 = vmatprep.subr.mxu0 0.0
        %1093 = vmatpush1.msra.mxu0 0.0
        %1094 = vmatprep.subr.mxu0 0.0
        %1095 = vmatpush1.msra.mxu0 0.0
        %1096 = vmatprep.mubr.f32.mxu0 0.0
        %1097 = vmatmul.mubr.f32.gmra.mrb[0].mxu0 %v626
        %v1098 = vpop.f32.mrb[0].mxu0
        %v1099 = vadd.f32 0.0, %v1098
        %v1100 = vpop.f32.mrb[0].mxu0
        %v1101 = vadd.f32 0.0, %v1100
        %1102 = vdwg.mxu0
        %1103 = vmatprep.subr.mxu0 %v589
        %1104 = vmatpush1.msra.mxu0 %v588
        %1105 = vmatprep.subr.mxu0 %v605
        %1106 = vmatpush1.msra.mxu0 %v604
        %1107 = vmatprep.subr.mxu0 %v669
        %1108 = vmatpush1.msra.mxu0 %v666
        %1109 = vmatprep.subr.mxu0 0.0
        %1110 = vmatpush1.msra.mxu0 0.0
        %1111 = vmatprep.subr.mxu0 0.0
        %1112 = vmatpush1.msra.mxu0 0.0
        %1113 = vmatprep.subr.mxu0 0.0
        %1114 = vmatpush1.msra.mxu0 0.0
        %1115 = vmatprep.subr.mxu0 0.0
        %1116 = vmatpush1.msra.mxu0 0.0
        %1117 = vmatprep.subr.mxu0 0.0
        %1118 = vmatpush1.msra.mxu0 0.0
        %1119 = vmatprep.subr.mxu0 0.0
        %1120 = vmatpush1.msra.mxu0 0.0
        %1121 = vmatprep.subr.mxu0 0.0
        %1122 = vmatpush1.msra.mxu0 0.0
        %1123 = vmatprep.subr.mxu0 0.0
        %1124 = vmatpush1.msra.mxu0 0.0
        %1125 = vmatprep.subr.mxu0 0.0
        %1126 = vmatpush1.msra.mxu0 0.0
        %1127 = vmatprep.subr.mxu0 0.0
        %1128 = vmatpush1.msra.mxu0 0.0
        %1129 = vmatprep.subr.mxu0 0.0
        %1130 = vmatpush1.msra.mxu0 0.0
        %1131 = vmatprep.subr.mxu0 0.0
        %1132 = vmatpush1.msra.mxu0 0.0
        %1133 = vmatprep.subr.mxu0 0.0
        %1134 = vmatpush1.msra.mxu0 0.0
        %1135 = vmatprep.subr.mxu0 0.0
        %1136 = vmatpush1.msra.mxu0 0.0
        %1137 = vmatprep.subr.mxu0 0.0
        %1138 = vmatpush1.msra.mxu0 0.0
        %1139 = vmatprep.subr.mxu0 0.0
        %1140 = vmatpush1.msra.mxu0 0.0
        %1141 = vmatprep.subr.mxu0 0.0
        %1142 = vmatpush1.msra.mxu0 0.0
        %1143 = vmatprep.subr.mxu0 0.0
        %1144 = vmatpush1.msra.mxu0 0.0
        %1145 = vmatprep.subr.mxu0 0.0
        %1146 = vmatpush1.msra.mxu0 0.0
        %1147 = vmatprep.subr.mxu0 0.0
        %1148 = vmatpush1.msra.mxu0 0.0
        %1149 = vmatprep.subr.mxu0 0.0
        %1150 = vmatpush1.msra.mxu0 0.0
        %1151 = vmatprep.subr.mxu0 0.0
        %1152 = vmatpush1.msra.mxu0 0.0
        %1153 = vmatprep.subr.mxu0 0.0
        %1154 = vmatpush1.msra.mxu0 0.0
        %1155 = vmatprep.subr.mxu0 0.0
        %1156 = vmatpush1.msra.mxu0 0.0
        %1157 = vmatprep.subr.mxu0 0.0
        %1158 = vmatpush1.msra.mxu0 0.0
        %1159 = vmatprep.subr.mxu0 0.0
        %1160 = vmatpush1.msra.mxu0 0.0
        %1161 = vmatprep.subr.mxu0 0.0
        %1162 = vmatpush1.msra.mxu0 0.0
        %1163 = vmatprep.subr.mxu0 0.0
        %1164 = vmatpush1.msra.mxu0 0.0
        %1165 = vmatprep.subr.mxu0 0.0
        %1166 = vmatpush1.msra.mxu0 0.0
        %1167 = vmatprep.mubr.f32.mxu0 0.0
        %1168 = vmatmul.mubr.f32.gmra.mrb[0].mxu0 %v626
        %v1169 = vpop.f32.mrb[0].mxu0
        %v1170 = vadd.f32 0.0, %v1169
        %v1171 = vpop.f32.mrb[0].mxu0
        %v1172 = vadd.f32 0.0, %v1171
        %1173 = vdwg.mxu0
        %1174 = vmatprep.subr.mxu0 %v591
        %1175 = vmatpush1.msra.mxu0 %v590
        %1176 = vmatprep.subr.mxu0 %v607
        %1177 = vmatpush1.msra.mxu0 %v606
        %1178 = vmatprep.subr.mxu0 %v675
        %1179 = vmatpush1.msra.mxu0 %v672
        %1180 = vmatprep.subr.mxu0 0.0
        %1181 = vmatpush1.msra.mxu0 0.0
        %1182 = vmatprep.subr.mxu0 0.0
        %1183 = vmatpush1.msra.mxu0 0.0
        %1184 = vmatprep.subr.mxu0 0.0
        %1185 = vmatpush1.msra.mxu0 0.0
        %1186 = vmatprep.subr.mxu0 0.0
        %1187 = vmatpush1.msra.mxu0 0.0
        %1188 = vmatprep.subr.mxu0 0.0
        %1189 = vmatpush1.msra.mxu0 0.0
        %1190 = vmatprep.subr.mxu0 0.0
        %1191 = vmatpush1.msra.mxu0 0.0
        %1192 = vmatprep.subr.mxu0 0.0
        %1193 = vmatpush1.msra.mxu0 0.0
        %1194 = vmatprep.subr.mxu0 0.0
        %1195 = vmatpush1.msra.mxu0 0.0
        %1196 = vmatprep.subr.mxu0 0.0
        %1197 = vmatpush1.msra.mxu0 0.0
        %1198 = vmatprep.subr.mxu0 0.0
        %1199 = vmatpush1.msra.mxu0 0.0
        %1200 = vmatprep.subr.mxu0 0.0
        %1201 = vmatpush1.msra.mxu0 0.0
        %1202 = vmatprep.subr.mxu0 0.0
        %1203 = vmatpush1.msra.mxu0 0.0
        %1204 = vmatprep.subr.mxu0 0.0
        %1205 = vmatpush1.msra.mxu0 0.0
        %1206 = vmatprep.subr.mxu0 0.0
        %1207 = vmatpush1.msra.mxu0 0.0
        %1208 = vmatprep.subr.mxu0 0.0
        %1209 = vmatpush1.msra.mxu0 0.0
        %1210 = vmatprep.subr.mxu0 0.0
        %1211 = vmatpush1.msra.mxu0 0.0
        %1212 = vmatprep.subr.mxu0 0.0
        %1213 = vmatpush1.msra.mxu0 0.0
        %1214 = vmatprep.subr.mxu0 0.0
        %1215 = vmatpush1.msra.mxu0 0.0
        %1216 = vmatprep.subr.mxu0 0.0
        %1217 = vmatpush1.msra.mxu0 0.0
        %1218 = vmatprep.subr.mxu0 0.0
        %1219 = vmatpush1.msra.mxu0 0.0
        %1220 = vmatprep.subr.mxu0 0.0
        %1221 = vmatpush1.msra.mxu0 0.0
        %1222 = vmatprep.subr.mxu0 0.0
        %1223 = vmatpush1.msra.mxu0 0.0
        %1224 = vmatprep.subr.mxu0 0.0
        %1225 = vmatpush1.msra.mxu0 0.0
        %1226 = vmatprep.subr.mxu0 0.0
        %1227 = vmatpush1.msra.mxu0 0.0
        %1228 = vmatprep.subr.mxu0 0.0
        %1229 = vmatpush1.msra.mxu0 0.0
        %1230 = vmatprep.subr.mxu0 0.0
        %1231 = vmatpush1.msra.mxu0 0.0
        %1232 = vmatprep.subr.mxu0 0.0
        %1233 = vmatpush1.msra.mxu0 0.0
        %1234 = vmatprep.subr.mxu0 0.0
        %1235 = vmatpush1.msra.mxu0 0.0
        %1236 = vmatprep.subr.mxu0 0.0
        %1237 = vmatpush1.msra.mxu0 0.0
        %1238 = vmatprep.mubr.f32.mxu0 0.0
        %1239 = vmatmul.mubr.f32.gmra.mrb[0].mxu0 %v626
        %v1240 = vpop.f32.mrb[0].mxu0
        %v1241 = vadd.f32 0.0, %v1240
        %v1242 = vpop.f32.mrb[0].mxu0
        %v1243 = vadd.f32 0.0, %v1242
        %1244 = vdwg.mxu0
        %s1245 = scalar_lea.vmem %s547, 384 [#allocation2]
        %v1246 = vld [vmem:[%s1245] sm:$0xff]
        %v1247 = vld [vmem:[%s1245 + $0x8] sm:$0xff]
        %v1248 = vld [vmem:[%s1245 + $0x10] sm:$0xff]
        %v1249 = vld [vmem:[%s1245 + $0x18] sm:$0xff]
        %v1250 = vld [vmem:[%s1245 + $0x20] sm:$0xff]
        %v1251 = vld [vmem:[%s1245 + $0x28] sm:$0xff]
        %v1252 = vld [vmem:[%s1245 + $0x30] sm:$0xff]
        %v1253 = vld [vmem:[%s1245 + $0x38] sm:$0xff]
        %v1254 = vld [vmem:[%s1245 + $0x40] sm:$0xff]
        %v1255 = vld [vmem:[%s1245 + $0x48] sm:$0xff]
        %v1256 = vld [vmem:[%s1245 + $0x50] sm:$0xff]
        %v1257 = vld [vmem:[%s1245 + $0x58] sm:$0xff]
        %v1258 = vld [vmem:[%s1245 + $0x60] sm:$0xff]
        %v1259 = vld [vmem:[%s1245 + $0x68] sm:$0xff]
        %v1260 = vld [vmem:[%s1245 + $0x70] sm:$0xff]
        %v1261 = vld [vmem:[%s1245 + $0x78] sm:$0xff]
        %v1262 = vld [vmem:[%s1245 + $0x80] sm:$0xff]
        %v1263 = vld [vmem:[%s1245 + $0x88] sm:$0xff]
        %v1264 = vld [vmem:[%s1245 + $0x90] sm:$0xff]
        %v1265 = vld [vmem:[%s1245 + $0x98] sm:$0xff]
        %v1266 = vld [vmem:[%s1245 + $0xa0] sm:$0xff]
        %v1267 = vld [vmem:[%s1245 + $0xa8] sm:$0xff]
        %v1268 = vld [vmem:[%s1245 + $0xb0] sm:$0xff]
        %v1269 = vld [vmem:[%s1245 + $0xb8] sm:$0xff]
        %v1270 = vld [vmem:[%s1245 + $0xc0] sm:$0xff]
        %v1271 = vld [vmem:[%s1245 + $0xc8] sm:$0xff]
        %v1272 = vld [vmem:[%s1245 + $0xd0] sm:$0xff]
        %v1273 = vld [vmem:[%s1245 + $0xd8] sm:$0xff]
        %v1274 = vld [vmem:[%s1245 + $0xe0] sm:$0xff]
        %v1275 = vld [vmem:[%s1245 + $0xe8] sm:$0xff]
        %v1276 = vld [vmem:[%s1245 + $0xf0] sm:$0xff]
        %v1277 = vld [vmem:[%s1245 + $0xf8] sm:$0xff]
        %v1278 = vld [vmem:[%s1245 + $0x100] sm:$0xf]
        %v1279 = vld [vmem:[%s1245 + $0x108] sm:$0xf]
        %v1280 = vld [vmem:[%s1245 + $0x110] sm:$0xf]
        %v1281 = vld [vmem:[%s1245 + $0x118] sm:$0xf]
        %v1282 = vld [vmem:[%s1245 + $0x120] sm:$0xf]
        %v1283 = vld [vmem:[%s1245 + $0x128] sm:$0xf]
        %v1284 = vld [vmem:[%s1245 + $0x130] sm:$0xf]
        %v1285 = vld [vmem:[%s1245 + $0x138] sm:$0xf]
        %v1286 = vld [vmem:[%s1245 + $0x140] sm:$0xf]
        %v1287 = vld [vmem:[%s1245 + $0x148] sm:$0xf]
        %v1288 = vld [vmem:[%s1245 + $0x150] sm:$0xf]
        %v1289 = vld [vmem:[%s1245 + $0x158] sm:$0xf]
        %v1290 = vld [vmem:[%s1245 + $0x160] sm:$0xf]
        %v1291 = vld [vmem:[%s1245 + $0x168] sm:$0xf]
        %v1292 = vld [vmem:[%s1245 + $0x170] sm:$0xf]
        %v1293 = vld [vmem:[%s1245 + $0x178] sm:$0xf]
        %v1295 = vsel %vm628, %v1278, 0
        %v1298 = vsel %vm628, %v1279, 0
        %v1301 = vsel %vm628, %v1280, 0
        %v1304 = vsel %vm628, %v1281, 0
        %v1307 = vsel %vm628, %v1282, 0
        %v1310 = vsel %vm628, %v1283, 0
        %v1313 = vsel %vm628, %v1284, 0
        %v1316 = vsel %vm628, %v1285, 0
        %v1319 = vsel %vm628, %v1286, 0
        %v1322 = vsel %vm628, %v1287, 0
        %v1325 = vsel %vm628, %v1288, 0
        %v1328 = vsel %vm628, %v1289, 0
        %v1331 = vsel %vm628, %v1290, 0
        %v1334 = vsel %vm628, %v1291, 0
        %v1337 = vsel %vm628, %v1292, 0
        %v1340 = vsel %vm628, %v1293, 0
        %1342 = vmatprep.subr.mxu0 %v1247
        %1343 = vmatpush1.msra.mxu0 %v1246
        %1344 = vmatprep.subr.mxu0 %v1263
        %1345 = vmatpush1.msra.mxu0 %v1262
        %1346 = vmatprep.subr.mxu0 %v1298
        %1347 = vmatpush1.msra.mxu0 %v1295
        %1348 = vmatprep.subr.mxu0 0.0
        %1349 = vmatpush1.msra.mxu0 0.0
        %1350 = vmatprep.subr.mxu0 0.0
        %1351 = vmatpush1.msra.mxu0 0.0
        %1352 = vmatprep.subr.mxu0 0.0
        %1353 = vmatpush1.msra.mxu0 0.0
        %1354 = vmatprep.subr.mxu0 0.0
        %1355 = vmatpush1.msra.mxu0 0.0
        %1356 = vmatprep.subr.mxu0 0.0
        %1357 = vmatpush1.msra.mxu0 0.0
        %1358 = vmatprep.subr.mxu0 0.0
        %1359 = vmatpush1.msra.mxu0 0.0
        %1360 = vmatprep.subr.mxu0 0.0
        %1361 = vmatpush1.msra.mxu0 0.0
        %1362 = vmatprep.subr.mxu0 0.0
        %1363 = vmatpush1.msra.mxu0 0.0
        %1364 = vmatprep.subr.mxu0 0.0
        %1365 = vmatpush1.msra.mxu0 0.0
        %1366 = vmatprep.subr.mxu0 0.0
        %1367 = vmatpush1.msra.mxu0 0.0
        %1368 = vmatprep.subr.mxu0 0.0
        %1369 = vmatpush1.msra.mxu0 0.0
        %1370 = vmatprep.subr.mxu0 0.0
        %1371 = vmatpush1.msra.mxu0 0.0
        %1372 = vmatprep.subr.mxu0 0.0
        %1373 = vmatpush1.msra.mxu0 0.0
        %1374 = vmatprep.subr.mxu0 0.0
        %1375 = vmatpush1.msra.mxu0 0.0
        %1376 = vmatprep.subr.mxu0 0.0
        %1377 = vmatpush1.msra.mxu0 0.0
        %1378 = vmatprep.subr.mxu0 0.0
        %1379 = vmatpush1.msra.mxu0 0.0
        %1380 = vmatprep.subr.mxu0 0.0
        %1381 = vmatpush1.msra.mxu0 0.0
        %1382 = vmatprep.subr.mxu0 0.0
        %1383 = vmatpush1.msra.mxu0 0.0
        %1384 = vmatprep.subr.mxu0 0.0
        %1385 = vmatpush1.msra.mxu0 0.0
        %1386 = vmatprep.subr.mxu0 0.0
        %1387 = vmatpush1.msra.mxu0 0.0
        %1388 = vmatprep.subr.mxu0 0.0
        %1389 = vmatpush1.msra.mxu0 0.0
        %1390 = vmatprep.subr.mxu0 0.0
        %1391 = vmatpush1.msra.mxu0 0.0
        %1392 = vmatprep.subr.mxu0 0.0
        %1393 = vmatpush1.msra.mxu0 0.0
        %1394 = vmatprep.subr.mxu0 0.0
        %1395 = vmatpush1.msra.mxu0 0.0
        %1396 = vmatprep.subr.mxu0 0.0
        %1397 = vmatpush1.msra.mxu0 0.0
        %1398 = vmatprep.subr.mxu0 0.0
        %1399 = vmatpush1.msra.mxu0 0.0
        %1400 = vmatprep.subr.mxu0 0.0
        %1401 = vmatpush1.msra.mxu0 0.0
        %1402 = vmatprep.subr.mxu0 0.0
        %1403 = vmatpush1.msra.mxu0 0.0
        %1404 = vmatprep.subr.mxu0 0.0
        %1405 = vmatpush1.msra.mxu0 0.0
        %1406 = vmatprep.mubr.f32.mxu0 0.0
        %1407 = vmatmul.mubr.f32.gmra.mrb[0].mxu0 %v626
        %v1408 = vpop.f32.mrb[0].mxu0
        %v1409 = vadd.f32 0.0, %v1408
        %v1410 = vpop.f32.mrb[0].mxu0
        %v1411 = vadd.f32 0.0, %v1410
        %1412 = vdwg.mxu0
        %1413 = vmatprep.subr.mxu0 %v1249
        %1414 = vmatpush1.msra.mxu0 %v1248
        %1415 = vmatprep.subr.mxu0 %v1265
        %1416 = vmatpush1.msra.mxu0 %v1264
        %1417 = vmatprep.subr.mxu0 %v1304
        %1418 = vmatpush1.msra.mxu0 %v1301
        %1419 = vmatprep.subr.mxu0 0.0
        %1420 = vmatpush1.msra.mxu0 0.0
        %1421 = vmatprep.subr.mxu0 0.0
        %1422 = vmatpush1.msra.mxu0 0.0
        %1423 = vmatprep.subr.mxu0 0.0
        %1424 = vmatpush1.msra.mxu0 0.0
        %1425 = vmatprep.subr.mxu0 0.0
        %1426 = vmatpush1.msra.mxu0 0.0
        %1427 = vmatprep.subr.mxu0 0.0
        %1428 = vmatpush1.msra.mxu0 0.0
        %1429 = vmatprep.subr.mxu0 0.0
        %1430 = vmatpush1.msra.mxu0 0.0
        %1431 = vmatprep.subr.mxu0 0.0
        %1432 = vmatpush1.msra.mxu0 0.0
        %1433 = vmatprep.subr.mxu0 0.0
        %1434 = vmatpush1.msra.mxu0 0.0
        %1435 = vmatprep.subr.mxu0 0.0
        %1436 = vmatpush1.msra.mxu0 0.0
        %1437 = vmatprep.subr.mxu0 0.0
        %1438 = vmatpush1.msra.mxu0 0.0
        %1439 = vmatprep.subr.mxu0 0.0
        %1440 = vmatpush1.msra.mxu0 0.0
        %1441 = vmatprep.subr.mxu0 0.0
        %1442 = vmatpush1.msra.mxu0 0.0
        %1443 = vmatprep.subr.mxu0 0.0
        %1444 = vmatpush1.msra.mxu0 0.0
        %1445 = vmatprep.subr.mxu0 0.0
        %1446 = vmatpush1.msra.mxu0 0.0
        %1447 = vmatprep.subr.mxu0 0.0
        %1448 = vmatpush1.msra.mxu0 0.0
        %1449 = vmatprep.subr.mxu0 0.0
        %1450 = vmatpush1.msra.mxu0 0.0
        %1451 = vmatprep.subr.mxu0 0.0
        %1452 = vmatpush1.msra.mxu0 0.0
        %1453 = vmatprep.subr.mxu0 0.0
        %1454 = vmatpush1.msra.mxu0 0.0
        %1455 = vmatprep.subr.mxu0 0.0
        %1456 = vmatpush1.msra.mxu0 0.0
        %1457 = vmatprep.subr.mxu0 0.0
        %1458 = vmatpush1.msra.mxu0 0.0
        %1459 = vmatprep.subr.mxu0 0.0
        %1460 = vmatpush1.msra.mxu0 0.0
        %1461 = vmatprep.subr.mxu0 0.0
        %1462 = vmatpush1.msra.mxu0 0.0
        %1463 = vmatprep.subr.mxu0 0.0
        %1464 = vmatpush1.msra.mxu0 0.0
        %1465 = vmatprep.subr.mxu0 0.0
        %1466 = vmatpush1.msra.mxu0 0.0
        %1467 = vmatprep.subr.mxu0 0.0
        %1468 = vmatpush1.msra.mxu0 0.0
        %1469 = vmatprep.subr.mxu0 0.0
        %1470 = vmatpush1.msra.mxu0 0.0
        %1471 = vmatprep.subr.mxu0 0.0
        %1472 = vmatpush1.msra.mxu0 0.0
        %1473 = vmatprep.subr.mxu0 0.0
        %1474 = vmatpush1.msra.mxu0 0.0
        %1475 = vmatprep.subr.mxu0 0.0
        %1476 = vmatpush1.msra.mxu0 0.0
        %1477 = vmatprep.mubr.f32.mxu0 0.0
        %1478 = vmatmul.mubr.f32.gmra.mrb[0].mxu0 %v626
        %v1479 = vpop.f32.mrb[0].mxu0
        %v1480 = vadd.f32 0.0, %v1479
        %v1481 = vpop.f32.mrb[0].mxu0
        %v1482 = vadd.f32 0.0, %v1481
        %1483 = vdwg.mxu0
        %1484 = vmatprep.subr.mxu0 %v1251
        %1485 = vmatpush1.msra.mxu0 %v1250
        %1486 = vmatprep.subr.mxu0 %v1267
        %1487 = vmatpush1.msra.mxu0 %v1266
        %1488 = vmatprep.subr.mxu0 %v1310
        %1489 = vmatpush1.msra.mxu0 %v1307
        %1490 = vmatprep.subr.mxu0 0.0
        %1491 = vmatpush1.msra.mxu0 0.0
        %1492 = vmatprep.subr.mxu0 0.0
        %1493 = vmatpush1.msra.mxu0 0.0
        %1494 = vmatprep.subr.mxu0 0.0
        %1495 = vmatpush1.msra.mxu0 0.0
        %1496 = vmatprep.subr.mxu0 0.0
        %1497 = vmatpush1.msra.mxu0 0.0
        %1498 = vmatprep.subr.mxu0 0.0
        %1499 = vmatpush1.msra.mxu0 0.0
        %1500 = vmatprep.subr.mxu0 0.0
        %1501 = vmatpush1.msra.mxu0 0.0
        %1502 = vmatprep.subr.mxu0 0.0
        %1503 = vmatpush1.msra.mxu0 0.0
        %1504 = vmatprep.subr.mxu0 0.0
        %1505 = vmatpush1.msra.mxu0 0.0
        %1506 = vmatprep.subr.mxu0 0.0
        %1507 = vmatpush1.msra.mxu0 0.0
        %1508 = vmatprep.subr.mxu0 0.0
        %1509 = vmatpush1.msra.mxu0 0.0
        %1510 = vmatprep.subr.mxu0 0.0
        %1511 = vmatpush1.msra.mxu0 0.0
        %1512 = vmatprep.subr.mxu0 0.0
        %1513 = vmatpush1.msra.mxu0 0.0
        %1514 = vmatprep.subr.mxu0 0.0
        %1515 = vmatpush1.msra.mxu0 0.0
        %1516 = vmatprep.subr.mxu0 0.0
        %1517 = vmatpush1.msra.mxu0 0.0
        %1518 = vmatprep.subr.mxu0 0.0
        %1519 = vmatpush1.msra.mxu0 0.0
        %1520 = vmatprep.subr.mxu0 0.0
        %1521 = vmatpush1.msra.mxu0 0.0
        %1522 = vmatprep.subr.mxu0 0.0
        %1523 = vmatpush1.msra.mxu0 0.0
        %1524 = vmatprep.subr.mxu0 0.0
        %1525 = vmatpush1.msra.mxu0 0.0
        %1526 = vmatprep.subr.mxu0 0.0
        %1527 = vmatpush1.msra.mxu0 0.0
        %1528 = vmatprep.subr.mxu0 0.0
        %1529 = vmatpush1.msra.mxu0 0.0
        %1530 = vmatprep.subr.mxu0 0.0
        %1531 = vmatpush1.msra.mxu0 0.0
        %1532 = vmatprep.subr.mxu0 0.0
        %1533 = vmatpush1.msra.mxu0 0.0
        %1534 = vmatprep.subr.mxu0 0.0
        %1535 = vmatpush1.msra.mxu0 0.0
        %1536 = vmatprep.subr.mxu0 0.0
        %1537 = vmatpush1.msra.mxu0 0.0
        %1538 = vmatprep.subr.mxu0 0.0
        %1539 = vmatpush1.msra.mxu0 0.0
        %1540 = vmatprep.subr.mxu0 0.0
        %1541 = vmatpush1.msra.mxu0 0.0
        %1542 = vmatprep.subr.mxu0 0.0
        %1543 = vmatpush1.msra.mxu0 0.0
        %1544 = vmatprep.subr.mxu0 0.0
        %1545 = vmatpush1.msra.mxu0 0.0
        %1546 = vmatprep.subr.mxu0 0.0
        %1547 = vmatpush1.msra.mxu0 0.0
        %1548 = vmatprep.mubr.f32.mxu0 0.0
        %1549 = vmatmul.mubr.f32.gmra.mrb[0].mxu0 %v626
        %v1550 = vpop.f32.mrb[0].mxu0
        %v1551 = vadd.f32 0.0, %v1550
        %v1552 = vpop.f32.mrb[0].mxu0
        %v1553 = vadd.f32 0.0, %v1552
        %1554 = vdwg.mxu0
        %1555 = vmatprep.subr.mxu0 %v1253
        %1556 = vmatpush1.msra.mxu0 %v1252
        %1557 = vmatprep.subr.mxu0 %v1269
        %1558 = vmatpush1.msra.mxu0 %v1268
        %1559 = vmatprep.subr.mxu0 %v1316
        %1560 = vmatpush1.msra.mxu0 %v1313
        %1561 = vmatprep.subr.mxu0 0.0
        %1562 = vmatpush1.msra.mxu0 0.0
        %1563 = vmatprep.subr.mxu0 0.0
        %1564 = vmatpush1.msra.mxu0 0.0
        %1565 = vmatprep.subr.mxu0 0.0
        %1566 = vmatpush1.msra.mxu0 0.0
        %1567 = vmatprep.subr.mxu0 0.0
        %1568 = vmatpush1.msra.mxu0 0.0
        %1569 = vmatprep.subr.mxu0 0.0
        %1570 = vmatpush1.msra.mxu0 0.0
        %1571 = vmatprep.subr.mxu0 0.0
        %1572 = vmatpush1.msra.mxu0 0.0
        %1573 = vmatprep.subr.mxu0 0.0
        %1574 = vmatpush1.msra.mxu0 0.0
        %1575 = vmatprep.subr.mxu0 0.0
        %1576 = vmatpush1.msra.mxu0 0.0
        %1577 = vmatprep.subr.mxu0 0.0
        %1578 = vmatpush1.msra.mxu0 0.0
        %1579 = vmatprep.subr.mxu0 0.0
        %1580 = vmatpush1.msra.mxu0 0.0
        %1581 = vmatprep.subr.mxu0 0.0
        %1582 = vmatpush1.msra.mxu0 0.0
        %1583 = vmatprep.subr.mxu0 0.0
        %1584 = vmatpush1.msra.mxu0 0.0
        %1585 = vmatprep.subr.mxu0 0.0
        %1586 = vmatpush1.msra.mxu0 0.0
        %1587 = vmatprep.subr.mxu0 0.0
        %1588 = vmatpush1.msra.mxu0 0.0
        %1589 = vmatprep.subr.mxu0 0.0
        %1590 = vmatpush1.msra.mxu0 0.0
        %1591 = vmatprep.subr.mxu0 0.0
        %1592 = vmatpush1.msra.mxu0 0.0
        %1593 = vmatprep.subr.mxu0 0.0
        %1594 = vmatpush1.msra.mxu0 0.0
        %1595 = vmatprep.subr.mxu0 0.0
        %1596 = vmatpush1.msra.mxu0 0.0
        %1597 = vmatprep.subr.mxu0 0.0
        %1598 = vmatpush1.msra.mxu0 0.0
        %1599 = vmatprep.subr.mxu0 0.0
        %1600 = vmatpush1.msra.mxu0 0.0
        %1601 = vmatprep.subr.mxu0 0.0
        %1602 = vmatpush1.msra.mxu0 0.0
        %1603 = vmatprep.subr.mxu0 0.0
        %1604 = vmatpush1.msra.mxu0 0.0
        %1605 = vmatprep.subr.mxu0 0.0
        %1606 = vmatpush1.msra.mxu0 0.0
        %1607 = vmatprep.subr.mxu0 0.0
        %1608 = vmatpush1.msra.mxu0 0.0
        %1609 = vmatprep.subr.mxu0 0.0
        %1610 = vmatpush1.msra.mxu0 0.0
        %1611 = vmatprep.subr.mxu0 0.0
        %1612 = vmatpush1.msra.mxu0 0.0
        %1613 = vmatprep.subr.mxu0 0.0
        %1614 = vmatpush1.msra.mxu0 0.0
        %1615 = vmatprep.subr.mxu0 0.0
        %1616 = vmatpush1.msra.mxu0 0.0
        %1617 = vmatprep.subr.mxu0 0.0
        %1618 = vmatpush1.msra.mxu0 0.0
        %1619 = vmatprep.mubr.f32.mxu0 0.0
        %1620 = vmatmul.mubr.f32.gmra.mrb[0].mxu0 %v626
        %v1621 = vpop.f32.mrb[0].mxu0
        %v1622 = vadd.f32 0.0, %v1621
        %v1623 = vpop.f32.mrb[0].mxu0
        %v1624 = vadd.f32 0.0, %v1623
        %1625 = vdwg.mxu0
        %1626 = vmatprep.subr.mxu0 %v1255
        %1627 = vmatpush1.msra.mxu0 %v1254
        %1628 = vmatprep.subr.mxu0 %v1271
        %1629 = vmatpush1.msra.mxu0 %v1270
        %1630 = vmatprep.subr.mxu0 %v1322
        %1631 = vmatpush1.msra.mxu0 %v1319
        %1632 = vmatprep.subr.mxu0 0.0
        %1633 = vmatpush1.msra.mxu0 0.0
        %1634 = vmatprep.subr.mxu0 0.0
        %1635 = vmatpush1.msra.mxu0 0.0
        %1636 = vmatprep.subr.mxu0 0.0
        %1637 = vmatpush1.msra.mxu0 0.0
        %1638 = vmatprep.subr.mxu0 0.0
        %1639 = vmatpush1.msra.mxu0 0.0
        %1640 = vmatprep.subr.mxu0 0.0
        %1641 = vmatpush1.msra.mxu0 0.0
        %1642 = vmatprep.subr.mxu0 0.0
        %1643 = vmatpush1.msra.mxu0 0.0
        %1644 = vmatprep.subr.mxu0 0.0
        %1645 = vmatpush1.msra.mxu0 0.0
        %1646 = vmatprep.subr.mxu0 0.0
        %1647 = vmatpush1.msra.mxu0 0.0
        %1648 = vmatprep.subr.mxu0 0.0
        %1649 = vmatpush1.msra.mxu0 0.0
        %1650 = vmatprep.subr.mxu0 0.0
        %1651 = vmatpush1.msra.mxu0 0.0
        %1652 = vmatprep.subr.mxu0 0.0
        %1653 = vmatpush1.msra.mxu0 0.0
        %1654 = vmatprep.subr.mxu0 0.0
        %1655 = vmatpush1.msra.mxu0 0.0
        %1656 = vmatprep.subr.mxu0 0.0
        %1657 = vmatpush1.msra.mxu0 0.0
        %1658 = vmatprep.subr.mxu0 0.0
        %1659 = vmatpush1.msra.mxu0 0.0
        %1660 = vmatprep.subr.mxu0 0.0
        %1661 = vmatpush1.msra.mxu0 0.0
        %1662 = vmatprep.subr.mxu0 0.0
        %1663 = vmatpush1.msra.mxu0 0.0
        %1664 = vmatprep.subr.mxu0 0.0
        %1665 = vmatpush1.msra.mxu0 0.0
        %1666 = vmatprep.subr.mxu0 0.0
        %1667 = vmatpush1.msra.mxu0 0.0
        %1668 = vmatprep.subr.mxu0 0.0
        %1669 = vmatpush1.msra.mxu0 0.0
        %1670 = vmatprep.subr.mxu0 0.0
        %1671 = vmatpush1.msra.mxu0 0.0
        %1672 = vmatprep.subr.mxu0 0.0
        %1673 = vmatpush1.msra.mxu0 0.0
        %1674 = vmatprep.subr.mxu0 0.0
        %1675 = vmatpush1.msra.mxu0 0.0
        %1676 = vmatprep.subr.mxu0 0.0
        %1677 = vmatpush1.msra.mxu0 0.0
        %1678 = vmatprep.subr.mxu0 0.0
        %1679 = vmatpush1.msra.mxu0 0.0
        %1680 = vmatprep.subr.mxu0 0.0
        %1681 = vmatpush1.msra.mxu0 0.0
        %1682 = vmatprep.subr.mxu0 0.0
        %1683 = vmatpush1.msra.mxu0 0.0
        %1684 = vmatprep.subr.mxu0 0.0
        %1685 = vmatpush1.msra.mxu0 0.0
        %1686 = vmatprep.subr.mxu0 0.0
        %1687 = vmatpush1.msra.mxu0 0.0
        %1688 = vmatprep.subr.mxu0 0.0
        %1689 = vmatpush1.msra.mxu0 0.0
        %1690 = vmatprep.mubr.f32.mxu0 0.0
        %1691 = vmatmul.mubr.f32.gmra.mrb[0].mxu0 %v626
        %v1692 = vpop.f32.mrb[0].mxu0
        %v1693 = vadd.f32 0.0, %v1692
        %v1694 = vpop.f32.mrb[0].mxu0
        %v1695 = vadd.f32 0.0, %v1694
        %1696 = vdwg.mxu0
        %1697 = vmatprep.subr.mxu0 %v1257
        %1698 = vmatpush1.msra.mxu0 %v1256
        %1699 = vmatprep.subr.mxu0 %v1273
        %1700 = vmatpush1.msra.mxu0 %v1272
        %1701 = vmatprep.subr.mxu0 %v1328
        %1702 = vmatpush1.msra.mxu0 %v1325
        %1703 = vmatprep.subr.mxu0 0.0
        %1704 = vmatpush1.msra.mxu0 0.0
        %1705 = vmatprep.subr.mxu0 0.0
        %1706 = vmatpush1.msra.mxu0 0.0
        %1707 = vmatprep.subr.mxu0 0.0
        %1708 = vmatpush1.msra.mxu0 0.0
        %1709 = vmatprep.subr.mxu0 0.0
        %1710 = vmatpush1.msra.mxu0 0.0
        %1711 = vmatprep.subr.mxu0 0.0
        %1712 = vmatpush1.msra.mxu0 0.0
        %1713 = vmatprep.subr.mxu0 0.0
        %1714 = vmatpush1.msra.mxu0 0.0
        %1715 = vmatprep.subr.mxu0 0.0
        %1716 = vmatpush1.msra.mxu0 0.0
        %1717 = vmatprep.subr.mxu0 0.0
        %1718 = vmatpush1.msra.mxu0 0.0
        %1719 = vmatprep.subr.mxu0 0.0
        %1720 = vmatpush1.msra.mxu0 0.0
        %1721 = vmatprep.subr.mxu0 0.0
        %1722 = vmatpush1.msra.mxu0 0.0
        %1723 = vmatprep.subr.mxu0 0.0
        %1724 = vmatpush1.msra.mxu0 0.0
        %1725 = vmatprep.subr.mxu0 0.0
        %1726 = vmatpush1.msra.mxu0 0.0
        %1727 = vmatprep.subr.mxu0 0.0
        %1728 = vmatpush1.msra.mxu0 0.0
        %1729 = vmatprep.subr.mxu0 0.0
        %1730 = vmatpush1.msra.mxu0 0.0
        %1731 = vmatprep.subr.mxu0 0.0
        %1732 = vmatpush1.msra.mxu0 0.0
        %1733 = vmatprep.subr.mxu0 0.0
        %1734 = vmatpush1.msra.mxu0 0.0
        %1735 = vmatprep.subr.mxu0 0.0
        %1736 = vmatpush1.msra.mxu0 0.0
        %1737 = vmatprep.subr.mxu0 0.0
        %1738 = vmatpush1.msra.mxu0 0.0
        %1739 = vmatprep.subr.mxu0 0.0
        %1740 = vmatpush1.msra.mxu0 0.0
        %1741 = vmatprep.subr.mxu0 0.0
        %1742 = vmatpush1.msra.mxu0 0.0
        %1743 = vmatprep.subr.mxu0 0.0
        %1744 = vmatpush1.msra.mxu0 0.0
        %1745 = vmatprep.subr.mxu0 0.0
        %1746 = vmatpush1.msra.mxu0 0.0
        %1747 = vmatprep.subr.mxu0 0.0
        %1748 = vmatpush1.msra.mxu0 0.0
        %1749 = vmatprep.subr.mxu0 0.0
        %1750 = vmatpush1.msra.mxu0 0.0
        %1751 = vmatprep.subr.mxu0 0.0
        %1752 = vmatpush1.msra.mxu0 0.0
        %1753 = vmatprep.subr.mxu0 0.0
        %1754 = vmatpush1.msra.mxu0 0.0
        %1755 = vmatprep.subr.mxu0 0.0
        %1756 = vmatpush1.msra.mxu0 0.0
        %1757 = vmatprep.subr.mxu0 0.0
        %1758 = vmatpush1.msra.mxu0 0.0
        %1759 = vmatprep.subr.mxu0 0.0
        %1760 = vmatpush1.msra.mxu0 0.0
        %1761 = vmatprep.mubr.f32.mxu0 0.0
        %1762 = vmatmul.mubr.f32.gmra.mrb[0].mxu0 %v626
        %v1763 = vpop.f32.mrb[0].mxu0
        %v1764 = vadd.f32 0.0, %v1763
        %v1765 = vpop.f32.mrb[0].mxu0
        %v1766 = vadd.f32 0.0, %v1765
        %1767 = vdwg.mxu0
        %1768 = vmatprep.subr.mxu0 %v1259
        %1769 = vmatpush1.msra.mxu0 %v1258
        %1770 = vmatprep.subr.mxu0 %v1275
        %1771 = vmatpush1.msra.mxu0 %v1274
        %1772 = vmatprep.subr.mxu0 %v1334
        %1773 = vmatpush1.msra.mxu0 %v1331
        %1774 = vmatprep.subr.mxu0 0.0
        %1775 = vmatpush1.msra.mxu0 0.0
        %1776 = vmatprep.subr.mxu0 0.0
        %1777 = vmatpush1.msra.mxu0 0.0
        %1778 = vmatprep.subr.mxu0 0.0
        %1779 = vmatpush1.msra.mxu0 0.0
        %1780 = vmatprep.subr.mxu0 0.0
        %1781 = vmatpush1.msra.mxu0 0.0
        %1782 = vmatprep.subr.mxu0 0.0
        %1783 = vmatpush1.msra.mxu0 0.0
        %1784 = vmatprep.subr.mxu0 0.0
        %1785 = vmatpush1.msra.mxu0 0.0
        %1786 = vmatprep.subr.mxu0 0.0
        %1787 = vmatpush1.msra.mxu0 0.0
        %1788 = vmatprep.subr.mxu0 0.0
        %1789 = vmatpush1.msra.mxu0 0.0
        %1790 = vmatprep.subr.mxu0 0.0
        %1791 = vmatpush1.msra.mxu0 0.0
        %1792 = vmatprep.subr.mxu0 0.0
        %1793 = vmatpush1.msra.mxu0 0.0
        %1794 = vmatprep.subr.mxu0 0.0
        %1795 = vmatpush1.msra.mxu0 0.0
        %1796 = vmatprep.subr.mxu0 0.0
        %1797 = vmatpush1.msra.mxu0 0.0
        %1798 = vmatprep.subr.mxu0 0.0
        %1799 = vmatpush1.msra.mxu0 0.0
        %1800 = vmatprep.subr.mxu0 0.0
        %1801 = vmatpush1.msra.mxu0 0.0
        %1802 = vmatprep.subr.mxu0 0.0
        %1803 = vmatpush1.msra.mxu0 0.0
        %1804 = vmatprep.subr.mxu0 0.0
        %1805 = vmatpush1.msra.mxu0 0.0
        %1806 = vmatprep.subr.mxu0 0.0
        %1807 = vmatpush1.msra.mxu0 0.0
        %1808 = vmatprep.subr.mxu0 0.0
        %1809 = vmatpush1.msra.mxu0 0.0
        %1810 = vmatprep.subr.mxu0 0.0
        %1811 = vmatpush1.msra.mxu0 0.0
        %1812 = vmatprep.subr.mxu0 0.0
        %1813 = vmatpush1.msra.mxu0 0.0
        %1814 = vmatprep.subr.mxu0 0.0
        %1815 = vmatpush1.msra.mxu0 0.0
        %1816 = vmatprep.subr.mxu0 0.0
        %1817 = vmatpush1.msra.mxu0 0.0
        %1818 = vmatprep.subr.mxu0 0.0
        %1819 = vmatpush1.msra.mxu0 0.0
        %1820 = vmatprep.subr.mxu0 0.0
        %1821 = vmatpush1.msra.mxu0 0.0
        %1822 = vmatprep.subr.mxu0 0.0
        %1823 = vmatpush1.msra.mxu0 0.0
        %1824 = vmatprep.subr.mxu0 0.0
        %1825 = vmatpush1.msra.mxu0 0.0
        %1826 = vmatprep.subr.mxu0 0.0
        %1827 = vmatpush1.msra.mxu0 0.0
        %1828 = vmatprep.subr.mxu0 0.0
        %1829 = vmatpush1.msra.mxu0 0.0
        %1830 = vmatprep.subr.mxu0 0.0
        %1831 = vmatpush1.msra.mxu0 0.0
        %1832 = vmatprep.mubr.f32.mxu0 0.0
        %1833 = vmatmul.mubr.f32.gmra.mrb[0].mxu0 %v626
        %v1834 = vpop.f32.mrb[0].mxu0
        %v1835 = vadd.f32 0.0, %v1834
        %v1836 = vpop.f32.mrb[0].mxu0
        %v1837 = vadd.f32 0.0, %v1836
        %1838 = vdwg.mxu0
        %1839 = vmatprep.subr.mxu0 %v1261
        %1840 = vmatpush1.msra.mxu0 %v1260
        %1841 = vmatprep.subr.mxu0 %v1277
        %1842 = vmatpush1.msra.mxu0 %v1276
        %1843 = vmatprep.subr.mxu0 %v1340
        %1844 = vmatpush1.msra.mxu0 %v1337
        %1845 = vmatprep.subr.mxu0 0.0
        %1846 = vmatpush1.msra.mxu0 0.0
        %1847 = vmatprep.subr.mxu0 0.0
        %1848 = vmatpush1.msra.mxu0 0.0
        %1849 = vmatprep.subr.mxu0 0.0
        %1850 = vmatpush1.msra.mxu0 0.0
        %1851 = vmatprep.subr.mxu0 0.0
        %1852 = vmatpush1.msra.mxu0 0.0
        %1853 = vmatprep.subr.mxu0 0.0
        %1854 = vmatpush1.msra.mxu0 0.0
        %1855 = vmatprep.subr.mxu0 0.0
        %1856 = vmatpush1.msra.mxu0 0.0
        %1857 = vmatprep.subr.mxu0 0.0
        %1858 = vmatpush1.msra.mxu0 0.0
        %1859 = vmatprep.subr.mxu0 0.0
        %1860 = vmatpush1.msra.mxu0 0.0
        %1861 = vmatprep.subr.mxu0 0.0
        %1862 = vmatpush1.msra.mxu0 0.0
        %1863 = vmatprep.subr.mxu0 0.0
        %1864 = vmatpush1.msra.mxu0 0.0
        %1865 = vmatprep.subr.mxu0 0.0
        %1866 = vmatpush1.msra.mxu0 0.0
        %1867 = vmatprep.subr.mxu0 0.0
        %1868 = vmatpush1.msra.mxu0 0.0
        %1869 = vmatprep.subr.mxu0 0.0
        %1870 = vmatpush1.msra.mxu0 0.0
        %1871 = vmatprep.subr.mxu0 0.0
        %1872 = vmatpush1.msra.mxu0 0.0
        %1873 = vmatprep.subr.mxu0 0.0
        %1874 = vmatpush1.msra.mxu0 0.0
        %1875 = vmatprep.subr.mxu0 0.0
        %1876 = vmatpush1.msra.mxu0 0.0
        %1877 = vmatprep.subr.mxu0 0.0
        %1878 = vmatpush1.msra.mxu0 0.0
        %1879 = vmatprep.subr.mxu0 0.0
        %1880 = vmatpush1.msra.mxu0 0.0
        %1881 = vmatprep.subr.mxu0 0.0
        %1882 = vmatpush1.msra.mxu0 0.0
        %1883 = vmatprep.subr.mxu0 0.0
        %1884 = vmatpush1.msra.mxu0 0.0
        %1885 = vmatprep.subr.mxu0 0.0
        %1886 = vmatpush1.msra.mxu0 0.0
        %1887 = vmatprep.subr.mxu0 0.0
        %1888 = vmatpush1.msra.mxu0 0.0
        %1889 = vmatprep.subr.mxu0 0.0
        %1890 = vmatpush1.msra.mxu0 0.0
        %1891 = vmatprep.subr.mxu0 0.0
        %1892 = vmatpush1.msra.mxu0 0.0
        %1893 = vmatprep.subr.mxu0 0.0
        %1894 = vmatpush1.msra.mxu0 0.0
        %1895 = vmatprep.subr.mxu0 0.0
        %1896 = vmatpush1.msra.mxu0 0.0
        %1897 = vmatprep.subr.mxu0 0.0
        %1898 = vmatpush1.msra.mxu0 0.0
        %1899 = vmatprep.subr.mxu0 0.0
        %1900 = vmatpush1.msra.mxu0 0.0
        %1901 = vmatprep.subr.mxu0 0.0
        %1902 = vmatpush1.msra.mxu0 0.0
        %1903 = vmatprep.mubr.f32.mxu0 0.0
        %1904 = vmatmul.mubr.f32.gmra.mrb[0].mxu0 %v626
        %v1905 = vpop.f32.mrb[0].mxu0
        %v1906 = vadd.f32 0.0, %v1905
        %v1907 = vpop.f32.mrb[0].mxu0
        %v1908 = vadd.f32 0.0, %v1907
        %1909 = vdwg.mxu0
        %s1910 = scalar_lea.vmem %s547, 768 [#allocation2]
        %v1911 = vld [vmem:[%s1910] sm:$0xff]
        %v1912 = vld [vmem:[%s1910 + $0x8] sm:$0xff]
        %v1913 = vld [vmem:[%s1910 + $0x10] sm:$0xff]
        %v1914 = vld [vmem:[%s1910 + $0x18] sm:$0xff]
        %v1915 = vld [vmem:[%s1910 + $0x20] sm:$0xff]
        %v1916 = vld [vmem:[%s1910 + $0x28] sm:$0xff]
        %v1917 = vld [vmem:[%s1910 + $0x30] sm:$0xff]
        %v1918 = vld [vmem:[%s1910 + $0x38] sm:$0xff]
        %v1919 = vld [vmem:[%s1910 + $0x40] sm:$0xff]
        %v1920 = vld [vmem:[%s1910 + $0x48] sm:$0xff]
        %v1921 = vld [vmem:[%s1910 + $0x50] sm:$0xff]
        %v1922 = vld [vmem:[%s1910 + $0x58] sm:$0xff]
        %v1923 = vld [vmem:[%s1910 + $0x60] sm:$0xff]
        %v1924 = vld [vmem:[%s1910 + $0x68] sm:$0xff]
        %v1925 = vld [vmem:[%s1910 + $0x70] sm:$0xff]
        %v1926 = vld [vmem:[%s1910 + $0x78] sm:$0xff]
        %v1927 = vld [vmem:[%s1910 + $0x80] sm:$0xff]
        %v1928 = vld [vmem:[%s1910 + $0x88] sm:$0xff]
        %v1929 = vld [vmem:[%s1910 + $0x90] sm:$0xff]
        %v1930 = vld [vmem:[%s1910 + $0x98] sm:$0xff]
        %v1931 = vld [vmem:[%s1910 + $0xa0] sm:$0xff]
        %v1932 = vld [vmem:[%s1910 + $0xa8] sm:$0xff]
        %v1933 = vld [vmem:[%s1910 + $0xb0] sm:$0xff]
        %v1934 = vld [vmem:[%s1910 + $0xb8] sm:$0xff]
        %v1935 = vld [vmem:[%s1910 + $0xc0] sm:$0xff]
        %v1936 = vld [vmem:[%s1910 + $0xc8] sm:$0xff]
        %v1937 = vld [vmem:[%s1910 + $0xd0] sm:$0xff]
        %v1938 = vld [vmem:[%s1910 + $0xd8] sm:$0xff]
        %v1939 = vld [vmem:[%s1910 + $0xe0] sm:$0xff]
        %v1940 = vld [vmem:[%s1910 + $0xe8] sm:$0xff]
        %v1941 = vld [vmem:[%s1910 + $0xf0] sm:$0xff]
        %v1942 = vld [vmem:[%s1910 + $0xf8] sm:$0xff]
        %v1943 = vld [vmem:[%s1910 + $0x100] sm:$0xf]
        %v1944 = vld [vmem:[%s1910 + $0x108] sm:$0xf]
        %v1945 = vld [vmem:[%s1910 + $0x110] sm:$0xf]
        %v1946 = vld [vmem:[%s1910 + $0x118] sm:$0xf]
        %v1947 = vld [vmem:[%s1910 + $0x120] sm:$0xf]
        %v1948 = vld [vmem:[%s1910 + $0x128] sm:$0xf]
        %v1949 = vld [vmem:[%s1910 + $0x130] sm:$0xf]
        %v1950 = vld [vmem:[%s1910 + $0x138] sm:$0xf]
        %v1951 = vld [vmem:[%s1910 + $0x140] sm:$0xf]
        %v1952 = vld [vmem:[%s1910 + $0x148] sm:$0xf]
        %v1953 = vld [vmem:[%s1910 + $0x150] sm:$0xf]
        %v1954 = vld [vmem:[%s1910 + $0x158] sm:$0xf]
        %v1955 = vld [vmem:[%s1910 + $0x160] sm:$0xf]
        %v1956 = vld [vmem:[%s1910 + $0x168] sm:$0xf]
        %v1957 = vld [vmem:[%s1910 + $0x170] sm:$0xf]
        %v1958 = vld [vmem:[%s1910 + $0x178] sm:$0xf]
        %v1960 = vsel %vm628, %v1943, 0
        %v1963 = vsel %vm628, %v1944, 0
        %v1966 = vsel %vm628, %v1945, 0
        %v1969 = vsel %vm628, %v1946, 0
        %v1972 = vsel %vm628, %v1947, 0
        %v1975 = vsel %vm628, %v1948, 0
        %v1978 = vsel %vm628, %v1949, 0
        %v1981 = vsel %vm628, %v1950, 0
        %v1984 = vsel %vm628, %v1951, 0
        %v1987 = vsel %vm628, %v1952, 0
        %v1990 = vsel %vm628, %v1953, 0
        %v1993 = vsel %vm628, %v1954, 0
        %v1996 = vsel %vm628, %v1955, 0
        %v1999 = vsel %vm628, %v1956, 0
        %v2002 = vsel %vm628, %v1957, 0
        %v2005 = vsel %vm628, %v1958, 0
        %2007 = vmatprep.subr.mxu0 %v1912
        %2008 = vmatpush1.msra.mxu0 %v1911
        %2009 = vmatprep.subr.mxu0 %v1928
        %2010 = vmatpush1.msra.mxu0 %v1927
        %2011 = vmatprep.subr.mxu0 %v1963
        %2012 = vmatpush1.msra.mxu0 %v1960
        %2013 = vmatprep.subr.mxu0 0.0
        %2014 = vmatpush1.msra.mxu0 0.0
        %2015 = vmatprep.subr.mxu0 0.0
        %2016 = vmatpush1.msra.mxu0 0.0
        %2017 = vmatprep.subr.mxu0 0.0
        %2018 = vmatpush1.msra.mxu0 0.0
        %2019 = vmatprep.subr.mxu0 0.0
        %2020 = vmatpush1.msra.mxu0 0.0
        %2021 = vmatprep.subr.mxu0 0.0
        %2022 = vmatpush1.msra.mxu0 0.0
        %2023 = vmatprep.subr.mxu0 0.0
        %2024 = vmatpush1.msra.mxu0 0.0
        %2025 = vmatprep.subr.mxu0 0.0
        %2026 = vmatpush1.msra.mxu0 0.0
        %2027 = vmatprep.subr.mxu0 0.0
        %2028 = vmatpush1.msra.mxu0 0.0
        %2029 = vmatprep.subr.mxu0 0.0
        %2030 = vmatpush1.msra.mxu0 0.0
        %2031 = vmatprep.subr.mxu0 0.0
        %2032 = vmatpush1.msra.mxu0 0.0
        %2033 = vmatprep.subr.mxu0 0.0
        %2034 = vmatpush1.msra.mxu0 0.0
        %2035 = vmatprep.subr.mxu0 0.0
        %2036 = vmatpush1.msra.mxu0 0.0
        %2037 = vmatprep.subr.mxu0 0.0
        %2038 = vmatpush1.msra.mxu0 0.0
        %2039 = vmatprep.subr.mxu0 0.0
        %2040 = vmatpush1.msra.mxu0 0.0
        %2041 = vmatprep.subr.mxu0 0.0
        %2042 = vmatpush1.msra.mxu0 0.0
        %2043 = vmatprep.subr.mxu0 0.0
        %2044 = vmatpush1.msra.mxu0 0.0
        %2045 = vmatprep.subr.mxu0 0.0
        %2046 = vmatpush1.msra.mxu0 0.0
        %2047 = vmatprep.subr.mxu0 0.0
        %2048 = vmatpush1.msra.mxu0 0.0
        %2049 = vmatprep.subr.mxu0 0.0
        %2050 = vmatpush1.msra.mxu0 0.0
        %2051 = vmatprep.subr.mxu0 0.0
        %2052 = vmatpush1.msra.mxu0 0.0
        %2053 = vmatprep.subr.mxu0 0.0
        %2054 = vmatpush1.msra.mxu0 0.0
        %2055 = vmatprep.subr.mxu0 0.0
        %2056 = vmatpush1.msra.mxu0 0.0
        %2057 = vmatprep.subr.mxu0 0.0
        %2058 = vmatpush1.msra.mxu0 0.0
        %2059 = vmatprep.subr.mxu0 0.0
        %2060 = vmatpush1.msra.mxu0 0.0
        %2061 = vmatprep.subr.mxu0 0.0
        %2062 = vmatpush1.msra.mxu0 0.0
        %2063 = vmatprep.subr.mxu0 0.0
        %2064 = vmatpush1.msra.mxu0 0.0
        %2065 = vmatprep.subr.mxu0 0.0
        %2066 = vmatpush1.msra.mxu0 0.0
        %2067 = vmatprep.subr.mxu0 0.0
        %2068 = vmatpush1.msra.mxu0 0.0
        %2069 = vmatprep.subr.mxu0 0.0
        %2070 = vmatpush1.msra.mxu0 0.0
        %2071 = vmatprep.mubr.f32.mxu0 0.0
        %2072 = vmatmul.mubr.f32.gmra.mrb[0].mxu0 %v626
        %v2073 = vpop.f32.mrb[0].mxu0
        %v2074 = vadd.f32 0.0, %v2073
        %v2075 = vpop.f32.mrb[0].mxu0
        %v2076 = vadd.f32 0.0, %v2075
        %2077 = vdwg.mxu0
        %2078 = vmatprep.subr.mxu0 %v1914
        %2079 = vmatpush1.msra.mxu0 %v1913
        %2080 = vmatprep.subr.mxu0 %v1930
        %2081 = vmatpush1.msra.mxu0 %v1929
        %2082 = vmatprep.subr.mxu0 %v1969
        %2083 = vmatpush1.msra.mxu0 %v1966
        %2084 = vmatprep.subr.mxu0 0.0
        %2085 = vmatpush1.msra.mxu0 0.0
        %2086 = vmatprep.subr.mxu0 0.0
        %2087 = vmatpush1.msra.mxu0 0.0
        %2088 = vmatprep.subr.mxu0 0.0
        %2089 = vmatpush1.msra.mxu0 0.0
        %2090 = vmatprep.subr.mxu0 0.0
        %2091 = vmatpush1.msra.mxu0 0.0
        %2092 = vmatprep.subr.mxu0 0.0
        %2093 = vmatpush1.msra.mxu0 0.0
        %2094 = vmatprep.subr.mxu0 0.0
        %2095 = vmatpush1.msra.mxu0 0.0
        %2096 = vmatprep.subr.mxu0 0.0
        %2097 = vmatpush1.msra.mxu0 0.0
        %2098 = vmatprep.subr.mxu0 0.0
        %2099 = vmatpush1.msra.mxu0 0.0
        %2100 = vmatprep.subr.mxu0 0.0
        %2101 = vmatpush1.msra.mxu0 0.0
        %2102 = vmatprep.subr.mxu0 0.0
        %2103 = vmatpush1.msra.mxu0 0.0
        %2104 = vmatprep.subr.mxu0 0.0
        %2105 = vmatpush1.msra.mxu0 0.0
        %2106 = vmatprep.subr.mxu0 0.0
        %2107 = vmatpush1.msra.mxu0 0.0
        %2108 = vmatprep.subr.mxu0 0.0
        %2109 = vmatpush1.msra.mxu0 0.0
        %2110 = vmatprep.subr.mxu0 0.0
        %2111 = vmatpush1.msra.mxu0 0.0
        %2112 = vmatprep.subr.mxu0 0.0
        %2113 = vmatpush1.msra.mxu0 0.0
        %2114 = vmatprep.subr.mxu0 0.0
        %2115 = vmatpush1.msra.mxu0 0.0
        %2116 = vmatprep.subr.mxu0 0.0
        %2117 = vmatpush1.msra.mxu0 0.0
        %2118 = vmatprep.subr.mxu0 0.0
        %2119 = vmatpush1.msra.mxu0 0.0
        %2120 = vmatprep.subr.mxu0 0.0
        %2121 = vmatpush1.msra.mxu0 0.0
        %2122 = vmatprep.subr.mxu0 0.0
        %2123 = vmatpush1.msra.mxu0 0.0
        %2124 = vmatprep.subr.mxu0 0.0
        %2125 = vmatpush1.msra.mxu0 0.0
        %2126 = vmatprep.subr.mxu0 0.0
        %2127 = vmatpush1.msra.mxu0 0.0
        %2128 = vmatprep.subr.mxu0 0.0
        %2129 = vmatpush1.msra.mxu0 0.0
        %2130 = vmatprep.subr.mxu0 0.0
        %2131 = vmatpush1.msra.mxu0 0.0
        %2132 = vmatprep.subr.mxu0 0.0
        %2133 = vmatpush1.msra.mxu0 0.0
        %2134 = vmatprep.subr.mxu0 0.0
        %2135 = vmatpush1.msra.mxu0 0.0
        %2136 = vmatprep.subr.mxu0 0.0
        %2137 = vmatpush1.msra.mxu0 0.0
        %2138 = vmatprep.subr.mxu0 0.0
        %2139 = vmatpush1.msra.mxu0 0.0
        %2140 = vmatprep.subr.mxu0 0.0
        %2141 = vmatpush1.msra.mxu0 0.0
        %2142 = vmatprep.mubr.f32.mxu0 0.0
        %2143 = vmatmul.mubr.f32.gmra.mrb[0].mxu0 %v626
        %v2144 = vpop.f32.mrb[0].mxu0
        %v2145 = vadd.f32 0.0, %v2144
        %v2146 = vpop.f32.mrb[0].mxu0
        %v2147 = vadd.f32 0.0, %v2146
        %2148 = vdwg.mxu0
        %2149 = vmatprep.subr.mxu0 %v1916
        %2150 = vmatpush1.msra.mxu0 %v1915
        %2151 = vmatprep.subr.mxu0 %v1932
        %2152 = vmatpush1.msra.mxu0 %v1931
        %2153 = vmatprep.subr.mxu0 %v1975
        %2154 = vmatpush1.msra.mxu0 %v1972
        %2155 = vmatprep.subr.mxu0 0.0
        %2156 = vmatpush1.msra.mxu0 0.0
        %2157 = vmatprep.subr.mxu0 0.0
        %2158 = vmatpush1.msra.mxu0 0.0
        %2159 = vmatprep.subr.mxu0 0.0
        %2160 = vmatpush1.msra.mxu0 0.0
        %2161 = vmatprep.subr.mxu0 0.0
        %2162 = vmatpush1.msra.mxu0 0.0
        %2163 = vmatprep.subr.mxu0 0.0
        %2164 = vmatpush1.msra.mxu0 0.0
        %2165 = vmatprep.subr.mxu0 0.0
        %2166 = vmatpush1.msra.mxu0 0.0
        %2167 = vmatprep.subr.mxu0 0.0
        %2168 = vmatpush1.msra.mxu0 0.0
        %2169 = vmatprep.subr.mxu0 0.0
        %2170 = vmatpush1.msra.mxu0 0.0
        %2171 = vmatprep.subr.mxu0 0.0
        %2172 = vmatpush1.msra.mxu0 0.0
        %2173 = vmatprep.subr.mxu0 0.0
        %2174 = vmatpush1.msra.mxu0 0.0
        %2175 = vmatprep.subr.mxu0 0.0
        %2176 = vmatpush1.msra.mxu0 0.0
        %2177 = vmatprep.subr.mxu0 0.0
        %2178 = vmatpush1.msra.mxu0 0.0
        %2179 = vmatprep.subr.mxu0 0.0
        %2180 = vmatpush1.msra.mxu0 0.0
        %2181 = vmatprep.subr.mxu0 0.0
        %2182 = vmatpush1.msra.mxu0 0.0
        %2183 = vmatprep.subr.mxu0 0.0
        %2184 = vmatpush1.msra.mxu0 0.0
        %2185 = vmatprep.subr.mxu0 0.0
        %2186 = vmatpush1.msra.mxu0 0.0
        %2187 = vmatprep.subr.mxu0 0.0
        %2188 = vmatpush1.msra.mxu0 0.0
        %2189 = vmatprep.subr.mxu0 0.0
        %2190 = vmatpush1.msra.mxu0 0.0
        %2191 = vmatprep.subr.mxu0 0.0
        %2192 = vmatpush1.msra.mxu0 0.0
        %2193 = vmatprep.subr.mxu0 0.0
        %2194 = vmatpush1.msra.mxu0 0.0
        %2195 = vmatprep.subr.mxu0 0.0
        %2196 = vmatpush1.msra.mxu0 0.0
        %2197 = vmatprep.subr.mxu0 0.0
        %2198 = vmatpush1.msra.mxu0 0.0
        %2199 = vmatprep.subr.mxu0 0.0
        %2200 = vmatpush1.msra.mxu0 0.0
        %2201 = vmatprep.subr.mxu0 0.0
        %2202 = vmatpush1.msra.mxu0 0.0
        %2203 = vmatprep.subr.mxu0 0.0
        %2204 = vmatpush1.msra.mxu0 0.0
        %2205 = vmatprep.subr.mxu0 0.0
        %2206 = vmatpush1.msra.mxu0 0.0
        %2207 = vmatprep.subr.mxu0 0.0
        %2208 = vmatpush1.msra.mxu0 0.0
        %2209 = vmatprep.subr.mxu0 0.0
        %2210 = vmatpush1.msra.mxu0 0.0
        %2211 = vmatprep.subr.mxu0 0.0
        %2212 = vmatpush1.msra.mxu0 0.0
        %2213 = vmatprep.mubr.f32.mxu0 0.0
        %2214 = vmatmul.mubr.f32.gmra.mrb[0].mxu0 %v626
        %v2215 = vpop.f32.mrb[0].mxu0
        %v2216 = vadd.f32 0.0, %v2215
        %v2217 = vpop.f32.mrb[0].mxu0
        %v2218 = vadd.f32 0.0, %v2217
        %2219 = vdwg.mxu0
        %2220 = vmatprep.subr.mxu0 %v1918
        %2221 = vmatpush1.msra.mxu0 %v1917
        %2222 = vmatprep.subr.mxu0 %v1934
        %2223 = vmatpush1.msra.mxu0 %v1933
        %2224 = vmatprep.subr.mxu0 %v1981
        %2225 = vmatpush1.msra.mxu0 %v1978
        %2226 = vmatprep.subr.mxu0 0.0
        %2227 = vmatpush1.msra.mxu0 0.0
        %2228 = vmatprep.subr.mxu0 0.0
        %2229 = vmatpush1.msra.mxu0 0.0
        %2230 = vmatprep.subr.mxu0 0.0
        %2231 = vmatpush1.msra.mxu0 0.0
        %2232 = vmatprep.subr.mxu0 0.0
        %2233 = vmatpush1.msra.mxu0 0.0
        %2234 = vmatprep.subr.mxu0 0.0
        %2235 = vmatpush1.msra.mxu0 0.0
        %2236 = vmatprep.subr.mxu0 0.0
        %2237 = vmatpush1.msra.mxu0 0.0
        %2238 = vmatprep.subr.mxu0 0.0
        %2239 = vmatpush1.msra.mxu0 0.0
        %2240 = vmatprep.subr.mxu0 0.0
        %2241 = vmatpush1.msra.mxu0 0.0
        %2242 = vmatprep.subr.mxu0 0.0
        %2243 = vmatpush1.msra.mxu0 0.0
        %2244 = vmatprep.subr.mxu0 0.0
        %2245 = vmatpush1.msra.mxu0 0.0
        %2246 = vmatprep.subr.mxu0 0.0
        %2247 = vmatpush1.msra.mxu0 0.0
        %2248 = vmatprep.subr.mxu0 0.0
        %2249 = vmatpush1.msra.mxu0 0.0
        %2250 = vmatprep.subr.mxu0 0.0
        %2251 = vmatpush1.msra.mxu0 0.0
        %2252 = vmatprep.subr.mxu0 0.0
        %2253 = vmatpush1.msra.mxu0 0.0
        %2254 = vmatprep.subr.mxu0 0.0
        %2255 = vmatpush1.msra.mxu0 0.0
        %2256 = vmatprep.subr.mxu0 0.0
        %2257 = vmatpush1.msra.mxu0 0.0
        %2258 = vmatprep.subr.mxu0 0.0
        %2259 = vmatpush1.msra.mxu0 0.0
        %2260 = vmatprep.subr.mxu0 0.0
        %2261 = vmatpush1.msra.mxu0 0.0
        %2262 = vmatprep.subr.mxu0 0.0
        %2263 = vmatpush1.msra.mxu0 0.0
        %2264 = vmatprep.subr.mxu0 0.0
        %2265 = vmatpush1.msra.mxu0 0.0
        %2266 = vmatprep.subr.mxu0 0.0
        %2267 = vmatpush1.msra.mxu0 0.0
        %2268 = vmatprep.subr.mxu0 0.0
        %2269 = vmatpush1.msra.mxu0 0.0
        %2270 = vmatprep.subr.mxu0 0.0
        %2271 = vmatpush1.msra.mxu0 0.0
        %2272 = vmatprep.subr.mxu0 0.0
        %2273 = vmatpush1.msra.mxu0 0.0
        %2274 = vmatprep.subr.mxu0 0.0
        %2275 = vmatpush1.msra.mxu0 0.0
        %2276 = vmatprep.subr.mxu0 0.0
        %2277 = vmatpush1.msra.mxu0 0.0
        %2278 = vmatprep.subr.mxu0 0.0
        %2279 = vmatpush1.msra.mxu0 0.0
        %2280 = vmatprep.subr.mxu0 0.0
        %2281 = vmatpush1.msra.mxu0 0.0
        %2282 = vmatprep.subr.mxu0 0.0
        %2283 = vmatpush1.msra.mxu0 0.0
        %2284 = vmatprep.mubr.f32.mxu0 0.0
        %2285 = vmatmul.mubr.f32.gmra.mrb[0].mxu0 %v626
        %v2286 = vpop.f32.mrb[0].mxu0
        %v2287 = vadd.f32 0.0, %v2286
        %v2288 = vpop.f32.mrb[0].mxu0
        %v2289 = vadd.f32 0.0, %v2288
        %2290 = vdwg.mxu0
        %2291 = vmatprep.subr.mxu0 %v1920
        %2292 = vmatpush1.msra.mxu0 %v1919
        %2293 = vmatprep.subr.mxu0 %v1936
        %2294 = vmatpush1.msra.mxu0 %v1935
        %2295 = vmatprep.subr.mxu0 %v1987
        %2296 = vmatpush1.msra.mxu0 %v1984
        %2297 = vmatprep.subr.mxu0 0.0
        %2298 = vmatpush1.msra.mxu0 0.0
        %2299 = vmatprep.subr.mxu0 0.0
        %2300 = vmatpush1.msra.mxu0 0.0
        %2301 = vmatprep.subr.mxu0 0.0
        %2302 = vmatpush1.msra.mxu0 0.0
        %2303 = vmatprep.subr.mxu0 0.0
        %2304 = vmatpush1.msra.mxu0 0.0
        %2305 = vmatprep.subr.mxu0 0.0
        %2306 = vmatpush1.msra.mxu0 0.0
        %2307 = vmatprep.subr.mxu0 0.0
        %2308 = vmatpush1.msra.mxu0 0.0
        %2309 = vmatprep.subr.mxu0 0.0
        %2310 = vmatpush1.msra.mxu0 0.0
        %2311 = vmatprep.subr.mxu0 0.0
        %2312 = vmatpush1.msra.mxu0 0.0
        %2313 = vmatprep.subr.mxu0 0.0
        %2314 = vmatpush1.msra.mxu0 0.0
        %2315 = vmatprep.subr.mxu0 0.0
        %2316 = vmatpush1.msra.mxu0 0.0
        %2317 = vmatprep.subr.mxu0 0.0
        %2318 = vmatpush1.msra.mxu0 0.0
        %2319 = vmatprep.subr.mxu0 0.0
        %2320 = vmatpush1.msra.mxu0 0.0
        %2321 = vmatprep.subr.mxu0 0.0
        %2322 = vmatpush1.msra.mxu0 0.0
        %2323 = vmatprep.subr.mxu0 0.0
        %2324 = vmatpush1.msra.mxu0 0.0
        %2325 = vmatprep.subr.mxu0 0.0
        %2326 = vmatpush1.msra.mxu0 0.0
        %2327 = vmatprep.subr.mxu0 0.0
        %2328 = vmatpush1.msra.mxu0 0.0
        %2329 = vmatprep.subr.mxu0 0.0
        %2330 = vmatpush1.msra.mxu0 0.0
        %2331 = vmatprep.subr.mxu0 0.0
        %2332 = vmatpush1.msra.mxu0 0.0
        %2333 = vmatprep.subr.mxu0 0.0
        %2334 = vmatpush1.msra.mxu0 0.0
        %2335 = vmatprep.subr.mxu0 0.0
        %2336 = vmatpush1.msra.mxu0 0.0
        %2337 = vmatprep.subr.mxu0 0.0
        %2338 = vmatpush1.msra.mxu0 0.0
        %2339 = vmatprep.subr.mxu0 0.0
        %2340 = vmatpush1.msra.mxu0 0.0
        %2341 = vmatprep.subr.mxu0 0.0
        %2342 = vmatpush1.msra.mxu0 0.0
        %2343 = vmatprep.subr.mxu0 0.0
        %2344 = vmatpush1.msra.mxu0 0.0
        %2345 = vmatprep.subr.mxu0 0.0
        %2346 = vmatpush1.msra.mxu0 0.0
        %2347 = vmatprep.subr.mxu0 0.0
        %2348 = vmatpush1.msra.mxu0 0.0
        %2349 = vmatprep.subr.mxu0 0.0
        %2350 = vmatpush1.msra.mxu0 0.0
        %2351 = vmatprep.subr.mxu0 0.0
        %2352 = vmatpush1.msra.mxu0 0.0
        %2353 = vmatprep.subr.mxu0 0.0
        %2354 = vmatpush1.msra.mxu0 0.0
        %2355 = vmatprep.mubr.f32.mxu0 0.0
        %2356 = vmatmul.mubr.f32.gmra.mrb[0].mxu0 %v626
        %v2357 = vpop.f32.mrb[0].mxu0
        %v2358 = vadd.f32 0.0, %v2357
        %v2359 = vpop.f32.mrb[0].mxu0
        %v2360 = vadd.f32 0.0, %v2359
        %2361 = vdwg.mxu0
        %2362 = vmatprep.subr.mxu0 %v1922
        %2363 = vmatpush1.msra.mxu0 %v1921
        %2364 = vmatprep.subr.mxu0 %v1938
        %2365 = vmatpush1.msra.mxu0 %v1937
        %2366 = vmatprep.subr.mxu0 %v1993
        %2367 = vmatpush1.msra.mxu0 %v1990
        %2368 = vmatprep.subr.mxu0 0.0
        %2369 = vmatpush1.msra.mxu0 0.0
        %2370 = vmatprep.subr.mxu0 0.0
        %2371 = vmatpush1.msra.mxu0 0.0
        %2372 = vmatprep.subr.mxu0 0.0
        %2373 = vmatpush1.msra.mxu0 0.0
        %2374 = vmatprep.subr.mxu0 0.0
        %2375 = vmatpush1.msra.mxu0 0.0
        %2376 = vmatprep.subr.mxu0 0.0
        %2377 = vmatpush1.msra.mxu0 0.0
        %2378 = vmatprep.subr.mxu0 0.0
        %2379 = vmatpush1.msra.mxu0 0.0
        %2380 = vmatprep.subr.mxu0 0.0
        %2381 = vmatpush1.msra.mxu0 0.0
        %2382 = vmatprep.subr.mxu0 0.0
        %2383 = vmatpush1.msra.mxu0 0.0
        %2384 = vmatprep.subr.mxu0 0.0
        %2385 = vmatpush1.msra.mxu0 0.0
        %2386 = vmatprep.subr.mxu0 0.0
        %2387 = vmatpush1.msra.mxu0 0.0
        %2388 = vmatprep.subr.mxu0 0.0
        %2389 = vmatpush1.msra.mxu0 0.0
        %2390 = vmatprep.subr.mxu0 0.0
        %2391 = vmatpush1.msra.mxu0 0.0
        %2392 = vmatprep.subr.mxu0 0.0
        %2393 = vmatpush1.msra.mxu0 0.0
        %2394 = vmatprep.subr.mxu0 0.0
        %2395 = vmatpush1.msra.mxu0 0.0
        %2396 = vmatprep.subr.mxu0 0.0
        %2397 = vmatpush1.msra.mxu0 0.0
        %2398 = vmatprep.subr.mxu0 0.0
        %2399 = vmatpush1.msra.mxu0 0.0
        %2400 = vmatprep.subr.mxu0 0.0
        %2401 = vmatpush1.msra.mxu0 0.0
        %2402 = vmatprep.subr.mxu0 0.0
        %2403 = vmatpush1.msra.mxu0 0.0
        %2404 = vmatprep.subr.mxu0 0.0
        %2405 = vmatpush1.msra.mxu0 0.0
        %2406 = vmatprep.subr.mxu0 0.0
        %2407 = vmatpush1.msra.mxu0 0.0
        %2408 = vmatprep.subr.mxu0 0.0
        %2409 = vmatpush1.msra.mxu0 0.0
        %2410 = vmatprep.subr.mxu0 0.0
        %2411 = vmatpush1.msra.mxu0 0.0
        %2412 = vmatprep.subr.mxu0 0.0
        %2413 = vmatpush1.msra.mxu0 0.0
        %2414 = vmatprep.subr.mxu0 0.0
        %2415 = vmatpush1.msra.mxu0 0.0
        %2416 = vmatprep.subr.mxu0 0.0
        %2417 = vmatpush1.msra.mxu0 0.0
        %2418 = vmatprep.subr.mxu0 0.0
        %2419 = vmatpush1.msra.mxu0 0.0
        %2420 = vmatprep.subr.mxu0 0.0
        %2421 = vmatpush1.msra.mxu0 0.0
        %2422 = vmatprep.subr.mxu0 0.0
        %2423 = vmatpush1.msra.mxu0 0.0
        %2424 = vmatprep.subr.mxu0 0.0
        %2425 = vmatpush1.msra.mxu0 0.0
        %2426 = vmatprep.mubr.f32.mxu0 0.0
        %2427 = vmatmul.mubr.f32.gmra.mrb[0].mxu0 %v626
        %v2428 = vpop.f32.mrb[0].mxu0
        %v2429 = vadd.f32 0.0, %v2428
        %v2430 = vpop.f32.mrb[0].mxu0
        %v2431 = vadd.f32 0.0, %v2430
        %2432 = vdwg.mxu0
        %2433 = vmatprep.subr.mxu0 %v1924
        %2434 = vmatpush1.msra.mxu0 %v1923
        %2435 = vmatprep.subr.mxu0 %v1940
        %2436 = vmatpush1.msra.mxu0 %v1939
        %2437 = vmatprep.subr.mxu0 %v1999
        %2438 = vmatpush1.msra.mxu0 %v1996
        %2439 = vmatprep.subr.mxu0 0.0
        %2440 = vmatpush1.msra.mxu0 0.0
        %2441 = vmatprep.subr.mxu0 0.0
        %2442 = vmatpush1.msra.mxu0 0.0
        %2443 = vmatprep.subr.mxu0 0.0
        %2444 = vmatpush1.msra.mxu0 0.0
        %2445 = vmatprep.subr.mxu0 0.0
        %2446 = vmatpush1.msra.mxu0 0.0
        %2447 = vmatprep.subr.mxu0 0.0
        %2448 = vmatpush1.msra.mxu0 0.0
        %2449 = vmatprep.subr.mxu0 0.0
        %2450 = vmatpush1.msra.mxu0 0.0
        %2451 = vmatprep.subr.mxu0 0.0
        %2452 = vmatpush1.msra.mxu0 0.0
        %2453 = vmatprep.subr.mxu0 0.0
        %2454 = vmatpush1.msra.mxu0 0.0
        %2455 = vmatprep.subr.mxu0 0.0
        %2456 = vmatpush1.msra.mxu0 0.0
        %2457 = vmatprep.subr.mxu0 0.0
        %2458 = vmatpush1.msra.mxu0 0.0
        %2459 = vmatprep.subr.mxu0 0.0
        %2460 = vmatpush1.msra.mxu0 0.0
        %2461 = vmatprep.subr.mxu0 0.0
        %2462 = vmatpush1.msra.mxu0 0.0
        %2463 = vmatprep.subr.mxu0 0.0
        %2464 = vmatpush1.msra.mxu0 0.0
        %2465 = vmatprep.subr.mxu0 0.0
        %2466 = vmatpush1.msra.mxu0 0.0
        %2467 = vmatprep.subr.mxu0 0.0
        %2468 = vmatpush1.msra.mxu0 0.0
        %2469 = vmatprep.subr.mxu0 0.0
        %2470 = vmatpush1.msra.mxu0 0.0
        %2471 = vmatprep.subr.mxu0 0.0
        %2472 = vmatpush1.msra.mxu0 0.0
        %2473 = vmatprep.subr.mxu0 0.0
        %2474 = vmatpush1.msra.mxu0 0.0
        %2475 = vmatprep.subr.mxu0 0.0
        %2476 = vmatpush1.msra.mxu0 0.0
        %2477 = vmatprep.subr.mxu0 0.0
        %2478 = vmatpush1.msra.mxu0 0.0
        %2479 = vmatprep.subr.mxu0 0.0
        %2480 = vmatpush1.msra.mxu0 0.0
        %2481 = vmatprep.subr.mxu0 0.0
        %2482 = vmatpush1.msra.mxu0 0.0
        %2483 = vmatprep.subr.mxu0 0.0
        %2484 = vmatpush1.msra.mxu0 0.0
        %2485 = vmatprep.subr.mxu0 0.0
        %2486 = vmatpush1.msra.mxu0 0.0
        %2487 = vmatprep.subr.mxu0 0.0
        %2488 = vmatpush1.msra.mxu0 0.0
        %2489 = vmatprep.subr.mxu0 0.0
        %2490 = vmatpush1.msra.mxu0 0.0
        %2491 = vmatprep.subr.mxu0 0.0
        %2492 = vmatpush1.msra.mxu0 0.0
        %2493 = vmatprep.subr.mxu0 0.0
        %2494 = vmatpush1.msra.mxu0 0.0
        %2495 = vmatprep.subr.mxu0 0.0
        %2496 = vmatpush1.msra.mxu0 0.0
        %2497 = vmatprep.mubr.f32.mxu0 0.0
        %2498 = vmatmul.mubr.f32.gmra.mrb[0].mxu0 %v626
        %v2499 = vpop.f32.mrb[0].mxu0
        %v2500 = vadd.f32 0.0, %v2499
        %v2501 = vpop.f32.mrb[0].mxu0
        %v2502 = vadd.f32 0.0, %v2501
        %2503 = vdwg.mxu0
        %2504 = vmatprep.subr.mxu0 %v1926
        %2505 = vmatpush1.msra.mxu0 %v1925
        %2506 = vmatprep.subr.mxu0 %v1942
        %2507 = vmatpush1.msra.mxu0 %v1941
        %2508 = vmatprep.subr.mxu0 %v2005
        %2509 = vmatpush1.msra.mxu0 %v2002
        %2510 = vmatprep.subr.mxu0 0.0
        %2511 = vmatpush1.msra.mxu0 0.0
        %2512 = vmatprep.subr.mxu0 0.0
        %2513 = vmatpush1.msra.mxu0 0.0
        %2514 = vmatprep.subr.mxu0 0.0
        %2515 = vmatpush1.msra.mxu0 0.0
        %2516 = vmatprep.subr.mxu0 0.0
        %2517 = vmatpush1.msra.mxu0 0.0
        %2518 = vmatprep.subr.mxu0 0.0
        %2519 = vmatpush1.msra.mxu0 0.0
        %2520 = vmatprep.subr.mxu0 0.0
        %2521 = vmatpush1.msra.mxu0 0.0
        %2522 = vmatprep.subr.mxu0 0.0
        %2523 = vmatpush1.msra.mxu0 0.0
        %2524 = vmatprep.subr.mxu0 0.0
        %2525 = vmatpush1.msra.mxu0 0.0
        %2526 = vmatprep.subr.mxu0 0.0
        %2527 = vmatpush1.msra.mxu0 0.0
        %2528 = vmatprep.subr.mxu0 0.0
        %2529 = vmatpush1.msra.mxu0 0.0
        %2530 = vmatprep.subr.mxu0 0.0
        %2531 = vmatpush1.msra.mxu0 0.0
        %2532 = vmatprep.subr.mxu0 0.0
        %2533 = vmatpush1.msra.mxu0 0.0
        %2534 = vmatprep.subr.mxu0 0.0
        %2535 = vmatpush1.msra.mxu0 0.0
        %2536 = vmatprep.subr.mxu0 0.0
        %2537 = vmatpush1.msra.mxu0 0.0
        %2538 = vmatprep.subr.mxu0 0.0
        %2539 = vmatpush1.msra.mxu0 0.0
        %2540 = vmatprep.subr.mxu0 0.0
        %2541 = vmatpush1.msra.mxu0 0.0
        %2542 = vmatprep.subr.mxu0 0.0
        %2543 = vmatpush1.msra.mxu0 0.0
        %2544 = vmatprep.subr.mxu0 0.0
        %2545 = vmatpush1.msra.mxu0 0.0
        %2546 = vmatprep.subr.mxu0 0.0
        %2547 = vmatpush1.msra.mxu0 0.0
        %2548 = vmatprep.subr.mxu0 0.0
        %2549 = vmatpush1.msra.mxu0 0.0
        %2550 = vmatprep.subr.mxu0 0.0
        %2551 = vmatpush1.msra.mxu0 0.0
        %2552 = vmatprep.subr.mxu0 0.0
        %2553 = vmatpush1.msra.mxu0 0.0
        %2554 = vmatprep.subr.mxu0 0.0
        %2555 = vmatpush1.msra.mxu0 0.0
        %2556 = vmatprep.subr.mxu0 0.0
        %2557 = vmatpush1.msra.mxu0 0.0
        %2558 = vmatprep.subr.mxu0 0.0
        %2559 = vmatpush1.msra.mxu0 0.0
        %2560 = vmatprep.subr.mxu0 0.0
        %2561 = vmatpush1.msra.mxu0 0.0
        %2562 = vmatprep.subr.mxu0 0.0
        %2563 = vmatpush1.msra.mxu0 0.0
        %2564 = vmatprep.subr.mxu0 0.0
        %2565 = vmatpush1.msra.mxu0 0.0
        %2566 = vmatprep.subr.mxu0 0.0
        %2567 = vmatpush1.msra.mxu0 0.0
        %2568 = vmatprep.mubr.f32.mxu0 0.0
        %2569 = vmatmul.mubr.f32.gmra.mrb[0].mxu0 %v626
        %v2570 = vpop.f32.mrb[0].mxu0
        %v2571 = vadd.f32 0.0, %v2570
        %v2572 = vpop.f32.mrb[0].mxu0
        %v2573 = vadd.f32 0.0, %v2572
        %2574 = vdwg.mxu0
        %s2575 = scalar_lea.vmem %s547, 1152 [#allocation2]
        %v2576 = vld [vmem:[%s2575] sm:$0xff]
        %v2577 = vld [vmem:[%s2575 + $0x8] sm:$0xff]
        %v2578 = vld [vmem:[%s2575 + $0x10] sm:$0xff]
        %v2579 = vld [vmem:[%s2575 + $0x18] sm:$0xff]
        %v2580 = vld [vmem:[%s2575 + $0x20] sm:$0xff]
        %v2581 = vld [vmem:[%s2575 + $0x28] sm:$0xff]
        %v2582 = vld [vmem:[%s2575 + $0x30] sm:$0xff]
        %v2583 = vld [vmem:[%s2575 + $0x38] sm:$0xff]
        %v2584 = vld [vmem:[%s2575 + $0x40] sm:$0xff]
        %v2585 = vld [vmem:[%s2575 + $0x48] sm:$0xff]
        %v2586 = vld [vmem:[%s2575 + $0x50] sm:$0xff]
        %v2587 = vld [vmem:[%s2575 + $0x58] sm:$0xff]
        %v2588 = vld [vmem:[%s2575 + $0x60] sm:$0xff]
        %v2589 = vld [vmem:[%s2575 + $0x68] sm:$0xff]
        %v2590 = vld [vmem:[%s2575 + $0x70] sm:$0xff]
        %v2591 = vld [vmem:[%s2575 + $0x78] sm:$0xff]
        %v2592 = vld [vmem:[%s2575 + $0x80] sm:$0xff]
        %v2593 = vld [vmem:[%s2575 + $0x88] sm:$0xff]
        %v2594 = vld [vmem:[%s2575 + $0x90] sm:$0xff]
        %v2595 = vld [vmem:[%s2575 + $0x98] sm:$0xff]
        %v2596 = vld [vmem:[%s2575 + $0xa0] sm:$0xff]
        %v2597 = vld [vmem:[%s2575 + $0xa8] sm:$0xff]
        %v2598 = vld [vmem:[%s2575 + $0xb0] sm:$0xff]
        %v2599 = vld [vmem:[%s2575 + $0xb8] sm:$0xff]
        %v2600 = vld [vmem:[%s2575 + $0xc0] sm:$0xff]
        %v2601 = vld [vmem:[%s2575 + $0xc8] sm:$0xff]
        %v2602 = vld [vmem:[%s2575 + $0xd0] sm:$0xff]
        %v2603 = vld [vmem:[%s2575 + $0xd8] sm:$0xff]
        %v2604 = vld [vmem:[%s2575 + $0xe0] sm:$0xff]
        %v2605 = vld [vmem:[%s2575 + $0xe8] sm:$0xff]
        %v2606 = vld [vmem:[%s2575 + $0xf0] sm:$0xff]
        %v2607 = vld [vmem:[%s2575 + $0xf8] sm:$0xff]
        %v2608 = vld [vmem:[%s2575 + $0x100] sm:$0xf]
        %v2609 = vld [vmem:[%s2575 + $0x108] sm:$0xf]
        %v2610 = vld [vmem:[%s2575 + $0x110] sm:$0xf]
        %v2611 = vld [vmem:[%s2575 + $0x118] sm:$0xf]
        %v2612 = vld [vmem:[%s2575 + $0x120] sm:$0xf]
        %v2613 = vld [vmem:[%s2575 + $0x128] sm:$0xf]
        %v2614 = vld [vmem:[%s2575 + $0x130] sm:$0xf]
        %v2615 = vld [vmem:[%s2575 + $0x138] sm:$0xf]
        %v2616 = vld [vmem:[%s2575 + $0x140] sm:$0xf]
        %v2617 = vld [vmem:[%s2575 + $0x148] sm:$0xf]
        %v2618 = vld [vmem:[%s2575 + $0x150] sm:$0xf]
        %v2619 = vld [vmem:[%s2575 + $0x158] sm:$0xf]
        %v2620 = vld [vmem:[%s2575 + $0x160] sm:$0xf]
        %v2621 = vld [vmem:[%s2575 + $0x168] sm:$0xf]
        %v2622 = vld [vmem:[%s2575 + $0x170] sm:$0xf]
        %v2623 = vld [vmem:[%s2575 + $0x178] sm:$0xf]
        %v2625 = vsel %vm628, %v2608, 0
        %v2628 = vsel %vm628, %v2609, 0
        %v2631 = vsel %vm628, %v2610, 0
        %v2634 = vsel %vm628, %v2611, 0
        %v2637 = vsel %vm628, %v2612, 0
        %v2640 = vsel %vm628, %v2613, 0
        %v2643 = vsel %vm628, %v2614, 0
        %v2646 = vsel %vm628, %v2615, 0
        %v2649 = vsel %vm628, %v2616, 0
        %v2652 = vsel %vm628, %v2617, 0
        %v2655 = vsel %vm628, %v2618, 0
        %v2658 = vsel %vm628, %v2619, 0
        %v2661 = vsel %vm628, %v2620, 0
        %v2664 = vsel %vm628, %v2621, 0
        %v2667 = vsel %vm628, %v2622, 0
        %v2670 = vsel %vm628, %v2623, 0
        %2672 = vmatprep.subr.mxu0 %v2577
        %2673 = vmatpush1.msra.mxu0 %v2576
        %2674 = vmatprep.subr.mxu0 %v2593
        %2675 = vmatpush1.msra.mxu0 %v2592
        %2676 = vmatprep.subr.mxu0 %v2628
        %2677 = vmatpush1.msra.mxu0 %v2625
        %2678 = vmatprep.subr.mxu0 0.0
        %2679 = vmatpush1.msra.mxu0 0.0
        %2680 = vmatprep.subr.mxu0 0.0
        %2681 = vmatpush1.msra.mxu0 0.0
        %2682 = vmatprep.subr.mxu0 0.0
        %2683 = vmatpush1.msra.mxu0 0.0
        %2684 = vmatprep.subr.mxu0 0.0
        %2685 = vmatpush1.msra.mxu0 0.0
        %2686 = vmatprep.subr.mxu0 0.0
        %2687 = vmatpush1.msra.mxu0 0.0
        %2688 = vmatprep.subr.mxu0 0.0
        %2689 = vmatpush1.msra.mxu0 0.0
        %2690 = vmatprep.subr.mxu0 0.0
        %2691 = vmatpush1.msra.mxu0 0.0
        %2692 = vmatprep.subr.mxu0 0.0
        %2693 = vmatpush1.msra.mxu0 0.0
        %2694 = vmatprep.subr.mxu0 0.0
        %2695 = vmatpush1.msra.mxu0 0.0
        %2696 = vmatprep.subr.mxu0 0.0
        %2697 = vmatpush1.msra.mxu0 0.0
        %2698 = vmatprep.subr.mxu0 0.0
        %2699 = vmatpush1.msra.mxu0 0.0
        %2700 = vmatprep.subr.mxu0 0.0
        %2701 = vmatpush1.msra.mxu0 0.0
        %2702 = vmatprep.subr.mxu0 0.0
        %2703 = vmatpush1.msra.mxu0 0.0
        %2704 = vmatprep.subr.mxu0 0.0
        %2705 = vmatpush1.msra.mxu0 0.0
        %2706 = vmatprep.subr.mxu0 0.0
        %2707 = vmatpush1.msra.mxu0 0.0
        %2708 = vmatprep.subr.mxu0 0.0
        %2709 = vmatpush1.msra.mxu0 0.0
        %2710 = vmatprep.subr.mxu0 0.0
        %2711 = vmatpush1.msra.mxu0 0.0
        %2712 = vmatprep.subr.mxu0 0.0
        %2713 = vmatpush1.msra.mxu0 0.0
        %2714 = vmatprep.subr.mxu0 0.0
        %2715 = vmatpush1.msra.mxu0 0.0
        %2716 = vmatprep.subr.mxu0 0.0
        %2717 = vmatpush1.msra.mxu0 0.0
        %2718 = vmatprep.subr.mxu0 0.0
        %2719 = vmatpush1.msra.mxu0 0.0
        %2720 = vmatprep.subr.mxu0 0.0
        %2721 = vmatpush1.msra.mxu0 0.0
        %2722 = vmatprep.subr.mxu0 0.0
        %2723 = vmatpush1.msra.mxu0 0.0
        %2724 = vmatprep.subr.mxu0 0.0
        %2725 = vmatpush1.msra.mxu0 0.0
        %2726 = vmatprep.subr.mxu0 0.0
        %2727 = vmatpush1.msra.mxu0 0.0
        %2728 = vmatprep.subr.mxu0 0.0
        %2729 = vmatpush1.msra.mxu0 0.0
        %2730 = vmatprep.subr.mxu0 0.0
        %2731 = vmatpush1.msra.mxu0 0.0
        %2732 = vmatprep.subr.mxu0 0.0
        %2733 = vmatpush1.msra.mxu0 0.0
        %2734 = vmatprep.subr.mxu0 0.0
        %2735 = vmatpush1.msra.mxu0 0.0
        %2736 = vmatprep.mubr.f32.mxu0 0.0
        %2737 = vmatmul.mubr.f32.gmra.mrb[0].mxu0 %v626
        %v2738 = vpop.f32.mrb[0].mxu0
        %v2739 = vadd.f32 0.0, %v2738
        %v2740 = vpop.f32.mrb[0].mxu0
        %v2741 = vadd.f32 0.0, %v2740
        %2742 = vdwg.mxu0
        %2743 = vmatprep.subr.mxu0 %v2579
        %2744 = vmatpush1.msra.mxu0 %v2578
        %2745 = vmatprep.subr.mxu0 %v2595
        %2746 = vmatpush1.msra.mxu0 %v2594
        %2747 = vmatprep.subr.mxu0 %v2634
        %2748 = vmatpush1.msra.mxu0 %v2631
        %2749 = vmatprep.subr.mxu0 0.0
        %2750 = vmatpush1.msra.mxu0 0.0
        %2751 = vmatprep.subr.mxu0 0.0
        %2752 = vmatpush1.msra.mxu0 0.0
        %2753 = vmatprep.subr.mxu0 0.0
        %2754 = vmatpush1.msra.mxu0 0.0
        %2755 = vmatprep.subr.mxu0 0.0
        %2756 = vmatpush1.msra.mxu0 0.0
        %2757 = vmatprep.subr.mxu0 0.0
        %2758 = vmatpush1.msra.mxu0 0.0
        %2759 = vmatprep.subr.mxu0 0.0
        %2760 = vmatpush1.msra.mxu0 0.0
        %2761 = vmatprep.subr.mxu0 0.0
        %2762 = vmatpush1.msra.mxu0 0.0
        %2763 = vmatprep.subr.mxu0 0.0
        %2764 = vmatpush1.msra.mxu0 0.0
        %2765 = vmatprep.subr.mxu0 0.0
        %2766 = vmatpush1.msra.mxu0 0.0
        %2767 = vmatprep.subr.mxu0 0.0
        %2768 = vmatpush1.msra.mxu0 0.0
        %2769 = vmatprep.subr.mxu0 0.0
        %2770 = vmatpush1.msra.mxu0 0.0
        %2771 = vmatprep.subr.mxu0 0.0
        %2772 = vmatpush1.msra.mxu0 0.0
        %2773 = vmatprep.subr.mxu0 0.0
        %2774 = vmatpush1.msra.mxu0 0.0
        %2775 = vmatprep.subr.mxu0 0.0
        %2776 = vmatpush1.msra.mxu0 0.0
        %2777 = vmatprep.subr.mxu0 0.0
        %2778 = vmatpush1.msra.mxu0 0.0
        %2779 = vmatprep.subr.mxu0 0.0
        %2780 = vmatpush1.msra.mxu0 0.0
        %2781 = vmatprep.subr.mxu0 0.0
        %2782 = vmatpush1.msra.mxu0 0.0
        %2783 = vmatprep.subr.mxu0 0.0
        %2784 = vmatpush1.msra.mxu0 0.0
        %2785 = vmatprep.subr.mxu0 0.0
        %2786 = vmatpush1.msra.mxu0 0.0
        %2787 = vmatprep.subr.mxu0 0.0
        %2788 = vmatpush1.msra.mxu0 0.0
        %2789 = vmatprep.subr.mxu0 0.0
        %2790 = vmatpush1.msra.mxu0 0.0
        %2791 = vmatprep.subr.mxu0 0.0
        %2792 = vmatpush1.msra.mxu0 0.0
        %2793 = vmatprep.subr.mxu0 0.0
        %2794 = vmatpush1.msra.mxu0 0.0
        %2795 = vmatprep.subr.mxu0 0.0
        %2796 = vmatpush1.msra.mxu0 0.0
        %2797 = vmatprep.subr.mxu0 0.0
        %2798 = vmatpush1.msra.mxu0 0.0
        %2799 = vmatprep.subr.mxu0 0.0
        %2800 = vmatpush1.msra.mxu0 0.0
        %2801 = vmatprep.subr.mxu0 0.0
        %2802 = vmatpush1.msra.mxu0 0.0
        %2803 = vmatprep.subr.mxu0 0.0
        %2804 = vmatpush1.msra.mxu0 0.0
        %2805 = vmatprep.subr.mxu0 0.0
        %2806 = vmatpush1.msra.mxu0 0.0
        %2807 = vmatprep.mubr.f32.mxu0 0.0
        %2808 = vmatmul.mubr.f32.gmra.mrb[0].mxu0 %v626
        %v2809 = vpop.f32.mrb[0].mxu0
        %v2810 = vadd.f32 0.0, %v2809
        %v2811 = vpop.f32.mrb[0].mxu0
        %v2812 = vadd.f32 0.0, %v2811
        %2813 = vdwg.mxu0
        %2814 = vmatprep.subr.mxu0 %v2581
        %2815 = vmatpush1.msra.mxu0 %v2580
        %2816 = vmatprep.subr.mxu0 %v2597
        %2817 = vmatpush1.msra.mxu0 %v2596
        %2818 = vmatprep.subr.mxu0 %v2640
        %2819 = vmatpush1.msra.mxu0 %v2637
        %2820 = vmatprep.subr.mxu0 0.0
        %2821 = vmatpush1.msra.mxu0 0.0
        %2822 = vmatprep.subr.mxu0 0.0
        %2823 = vmatpush1.msra.mxu0 0.0
        %2824 = vmatprep.subr.mxu0 0.0
        %2825 = vmatpush1.msra.mxu0 0.0
        %2826 = vmatprep.subr.mxu0 0.0
        %2827 = vmatpush1.msra.mxu0 0.0
        %2828 = vmatprep.subr.mxu0 0.0
        %2829 = vmatpush1.msra.mxu0 0.0
        %2830 = vmatprep.subr.mxu0 0.0
        %2831 = vmatpush1.msra.mxu0 0.0
        %2832 = vmatprep.subr.mxu0 0.0
        %2833 = vmatpush1.msra.mxu0 0.0
        %2834 = vmatprep.subr.mxu0 0.0
        %2835 = vmatpush1.msra.mxu0 0.0
        %2836 = vmatprep.subr.mxu0 0.0
        %2837 = vmatpush1.msra.mxu0 0.0
        %2838 = vmatprep.subr.mxu0 0.0
        %2839 = vmatpush1.msra.mxu0 0.0
        %2840 = vmatprep.subr.mxu0 0.0
        %2841 = vmatpush1.msra.mxu0 0.0
        %2842 = vmatprep.subr.mxu0 0.0
        %2843 = vmatpush1.msra.mxu0 0.0
        %2844 = vmatprep.subr.mxu0 0.0
        %2845 = vmatpush1.msra.mxu0 0.0
        %2846 = vmatprep.subr.mxu0 0.0
        %2847 = vmatpush1.msra.mxu0 0.0
        %2848 = vmatprep.subr.mxu0 0.0
        %2849 = vmatpush1.msra.mxu0 0.0
        %2850 = vmatprep.subr.mxu0 0.0
        %2851 = vmatpush1.msra.mxu0 0.0
        %2852 = vmatprep.subr.mxu0 0.0
        %2853 = vmatpush1.msra.mxu0 0.0
        %2854 = vmatprep.subr.mxu0 0.0
        %2855 = vmatpush1.msra.mxu0 0.0
        %2856 = vmatprep.subr.mxu0 0.0
        %2857 = vmatpush1.msra.mxu0 0.0
        %2858 = vmatprep.subr.mxu0 0.0
        %2859 = vmatpush1.msra.mxu0 0.0
        %2860 = vmatprep.subr.mxu0 0.0
        %2861 = vmatpush1.msra.mxu0 0.0
        %2862 = vmatprep.subr.mxu0 0.0
        %2863 = vmatpush1.msra.mxu0 0.0
        %2864 = vmatprep.subr.mxu0 0.0
        %2865 = vmatpush1.msra.mxu0 0.0
        %2866 = vmatprep.subr.mxu0 0.0
        %2867 = vmatpush1.msra.mxu0 0.0
        %2868 = vmatprep.subr.mxu0 0.0
        %2869 = vmatpush1.msra.mxu0 0.0
        %2870 = vmatprep.subr.mxu0 0.0
        %2871 = vmatpush1.msra.mxu0 0.0
        %2872 = vmatprep.subr.mxu0 0.0
        %2873 = vmatpush1.msra.mxu0 0.0
        %2874 = vmatprep.subr.mxu0 0.0
        %2875 = vmatpush1.msra.mxu0 0.0
        %2876 = vmatprep.subr.mxu0 0.0
        %2877 = vmatpush1.msra.mxu0 0.0
        %2878 = vmatprep.mubr.f32.mxu0 0.0
        %2879 = vmatmul.mubr.f32.gmra.mrb[0].mxu0 %v626
        %v2880 = vpop.f32.mrb[0].mxu0
        %v2881 = vadd.f32 0.0, %v2880
        %v2882 = vpop.f32.mrb[0].mxu0
        %v2883 = vadd.f32 0.0, %v2882
        %2884 = vdwg.mxu0
        %2885 = vmatprep.subr.mxu0 %v2583
        %2886 = vmatpush1.msra.mxu0 %v2582
        %2887 = vmatprep.subr.mxu0 %v2599
        %2888 = vmatpush1.msra.mxu0 %v2598
        %2889 = vmatprep.subr.mxu0 %v2646
        %2890 = vmatpush1.msra.mxu0 %v2643
        %2891 = vmatprep.subr.mxu0 0.0
        %2892 = vmatpush1.msra.mxu0 0.0
        %2893 = vmatprep.subr.mxu0 0.0
        %2894 = vmatpush1.msra.mxu0 0.0
        %2895 = vmatprep.subr.mxu0 0.0
        %2896 = vmatpush1.msra.mxu0 0.0
        %2897 = vmatprep.subr.mxu0 0.0
        %2898 = vmatpush1.msra.mxu0 0.0
        %2899 = vmatprep.subr.mxu0 0.0
        %2900 = vmatpush1.msra.mxu0 0.0
        %2901 = vmatprep.subr.mxu0 0.0
        %2902 = vmatpush1.msra.mxu0 0.0
        %2903 = vmatprep.subr.mxu0 0.0
        %2904 = vmatpush1.msra.mxu0 0.0
        %2905 = vmatprep.subr.mxu0 0.0
        %2906 = vmatpush1.msra.mxu0 0.0
        %2907 = vmatprep.subr.mxu0 0.0
        %2908 = vmatpush1.msra.mxu0 0.0
        %2909 = vmatprep.subr.mxu0 0.0
        %2910 = vmatpush1.msra.mxu0 0.0
        %2911 = vmatprep.subr.mxu0 0.0
        %2912 = vmatpush1.msra.mxu0 0.0
        %2913 = vmatprep.subr.mxu0 0.0
        %2914 = vmatpush1.msra.mxu0 0.0
        %2915 = vmatprep.subr.mxu0 0.0
        %2916 = vmatpush1.msra.mxu0 0.0
        %2917 = vmatprep.subr.mxu0 0.0
        %2918 = vmatpush1.msra.mxu0 0.0
        %2919 = vmatprep.subr.mxu0 0.0
        %2920 = vmatpush1.msra.mxu0 0.0
        %2921 = vmatprep.subr.mxu0 0.0
        %2922 = vmatpush1.msra.mxu0 0.0
        %2923 = vmatprep.subr.mxu0 0.0
        %2924 = vmatpush1.msra.mxu0 0.0
        %2925 = vmatprep.subr.mxu0 0.0
        %2926 = vmatpush1.msra.mxu0 0.0
        %2927 = vmatprep.subr.mxu0 0.0
        %2928 = vmatpush1.msra.mxu0 0.0
        %2929 = vmatprep.subr.mxu0 0.0
        %2930 = vmatpush1.msra.mxu0 0.0
        %2931 = vmatprep.subr.mxu0 0.0
        %2932 = vmatpush1.msra.mxu0 0.0
        %2933 = vmatprep.subr.mxu0 0.0
        %2934 = vmatpush1.msra.mxu0 0.0
        %2935 = vmatprep.subr.mxu0 0.0
        %2936 = vmatpush1.msra.mxu0 0.0
        %2937 = vmatprep.subr.mxu0 0.0
        %2938 = vmatpush1.msra.mxu0 0.0
        %2939 = vmatprep.subr.mxu0 0.0
        %2940 = vmatpush1.msra.mxu0 0.0
        %2941 = vmatprep.subr.mxu0 0.0
        %2942 = vmatpush1.msra.mxu0 0.0
        %2943 = vmatprep.subr.mxu0 0.0
        %2944 = vmatpush1.msra.mxu0 0.0
        %2945 = vmatprep.subr.mxu0 0.0
        %2946 = vmatpush1.msra.mxu0 0.0
        %2947 = vmatprep.subr.mxu0 0.0
        %2948 = vmatpush1.msra.mxu0 0.0
        %2949 = vmatprep.mubr.f32.mxu0 0.0
        %2950 = vmatmul.mubr.f32.gmra.mrb[0].mxu0 %v626
        %v2951 = vpop.f32.mrb[0].mxu0
        %v2952 = vadd.f32 0.0, %v2951
        %v2953 = vpop.f32.mrb[0].mxu0
        %v2954 = vadd.f32 0.0, %v2953
        %2955 = vdwg.mxu0
        %2956 = vmatprep.subr.mxu0 %v2585
        %2957 = vmatpush1.msra.mxu0 %v2584
        %2958 = vmatprep.subr.mxu0 %v2601
        %2959 = vmatpush1.msra.mxu0 %v2600
        %2960 = vmatprep.subr.mxu0 %v2652
        %2961 = vmatpush1.msra.mxu0 %v2649
        %2962 = vmatprep.subr.mxu0 0.0
        %2963 = vmatpush1.msra.mxu0 0.0
        %2964 = vmatprep.subr.mxu0 0.0
        %2965 = vmatpush1.msra.mxu0 0.0
        %2966 = vmatprep.subr.mxu0 0.0
        %2967 = vmatpush1.msra.mxu0 0.0
        %2968 = vmatprep.subr.mxu0 0.0
        %2969 = vmatpush1.msra.mxu0 0.0
        %2970 = vmatprep.subr.mxu0 0.0
        %2971 = vmatpush1.msra.mxu0 0.0
        %2972 = vmatprep.subr.mxu0 0.0
        %2973 = vmatpush1.msra.mxu0 0.0
        %2974 = vmatprep.subr.mxu0 0.0
        %2975 = vmatpush1.msra.mxu0 0.0
        %2976 = vmatprep.subr.mxu0 0.0
        %2977 = vmatpush1.msra.mxu0 0.0
        %2978 = vmatprep.subr.mxu0 0.0
        %2979 = vmatpush1.msra.mxu0 0.0
        %2980 = vmatprep.subr.mxu0 0.0
        %2981 = vmatpush1.msra.mxu0 0.0
        %2982 = vmatprep.subr.mxu0 0.0
        %2983 = vmatpush1.msra.mxu0 0.0
        %2984 = vmatprep.subr.mxu0 0.0
        %2985 = vmatpush1.msra.mxu0 0.0
        %2986 = vmatprep.subr.mxu0 0.0
        %2987 = vmatpush1.msra.mxu0 0.0
        %2988 = vmatprep.subr.mxu0 0.0
        %2989 = vmatpush1.msra.mxu0 0.0
        %2990 = vmatprep.subr.mxu0 0.0
        %2991 = vmatpush1.msra.mxu0 0.0
        %2992 = vmatprep.subr.mxu0 0.0
        %2993 = vmatpush1.msra.mxu0 0.0
        %2994 = vmatprep.subr.mxu0 0.0
        %2995 = vmatpush1.msra.mxu0 0.0
        %2996 = vmatprep.subr.mxu0 0.0
        %2997 = vmatpush1.msra.mxu0 0.0
        %2998 = vmatprep.subr.mxu0 0.0
        %2999 = vmatpush1.msra.mxu0 0.0
        %3000 = vmatprep.subr.mxu0 0.0
        %3001 = vmatpush1.msra.mxu0 0.0
        %3002 = vmatprep.subr.mxu0 0.0
        %3003 = vmatpush1.msra.mxu0 0.0
        %3004 = vmatprep.subr.mxu0 0.0
        %3005 = vmatpush1.msra.mxu0 0.0
        %3006 = vmatprep.subr.mxu0 0.0
        %3007 = vmatpush1.msra.mxu0 0.0
        %3008 = vmatprep.subr.mxu0 0.0
        %3009 = vmatpush1.msra.mxu0 0.0
        %3010 = vmatprep.subr.mxu0 0.0
        %3011 = vmatpush1.msra.mxu0 0.0
        %3012 = vmatprep.subr.mxu0 0.0
        %3013 = vmatpush1.msra.mxu0 0.0
        %3014 = vmatprep.subr.mxu0 0.0
        %3015 = vmatpush1.msra.mxu0 0.0
        %3016 = vmatprep.subr.mxu0 0.0
        %3017 = vmatpush1.msra.mxu0 0.0
        %3018 = vmatprep.subr.mxu0 0.0
        %3019 = vmatpush1.msra.mxu0 0.0
        %3020 = vmatprep.mubr.f32.mxu0 0.0
        %3021 = vmatmul.mubr.f32.gmra.mrb[0].mxu0 %v626
        %v3022 = vpop.f32.mrb[0].mxu0
        %v3023 = vadd.f32 0.0, %v3022
        %v3024 = vpop.f32.mrb[0].mxu0
        %v3025 = vadd.f32 0.0, %v3024
        %3026 = vdwg.mxu0
        %3027 = vmatprep.subr.mxu0 %v2587
        %3028 = vmatpush1.msra.mxu0 %v2586
        %3029 = vmatprep.subr.mxu0 %v2603
        %3030 = vmatpush1.msra.mxu0 %v2602
        %3031 = vmatprep.subr.mxu0 %v2658
        %3032 = vmatpush1.msra.mxu0 %v2655
        %3033 = vmatprep.subr.mxu0 0.0
        %3034 = vmatpush1.msra.mxu0 0.0
        %3035 = vmatprep.subr.mxu0 0.0
        %3036 = vmatpush1.msra.mxu0 0.0
        %3037 = vmatprep.subr.mxu0 0.0
        %3038 = vmatpush1.msra.mxu0 0.0
        %3039 = vmatprep.subr.mxu0 0.0
        %3040 = vmatpush1.msra.mxu0 0.0
        %3041 = vmatprep.subr.mxu0 0.0
        %3042 = vmatpush1.msra.mxu0 0.0
        %3043 = vmatprep.subr.mxu0 0.0
        %3044 = vmatpush1.msra.mxu0 0.0
        %3045 = vmatprep.subr.mxu0 0.0
        %3046 = vmatpush1.msra.mxu0 0.0
        %3047 = vmatprep.subr.mxu0 0.0
        %3048 = vmatpush1.msra.mxu0 0.0
        %3049 = vmatprep.subr.mxu0 0.0
        %3050 = vmatpush1.msra.mxu0 0.0
        %3051 = vmatprep.subr.mxu0 0.0
        %3052 = vmatpush1.msra.mxu0 0.0
        %3053 = vmatprep.subr.mxu0 0.0
        %3054 = vmatpush1.msra.mxu0 0.0
        %3055 = vmatprep.subr.mxu0 0.0
        %3056 = vmatpush1.msra.mxu0 0.0
        %3057 = vmatprep.subr.mxu0 0.0
        %3058 = vmatpush1.msra.mxu0 0.0
        %3059 = vmatprep.subr.mxu0 0.0
        %3060 = vmatpush1.msra.mxu0 0.0
        %3061 = vmatprep.subr.mxu0 0.0
        %3062 = vmatpush1.msra.mxu0 0.0
        %3063 = vmatprep.subr.mxu0 0.0
        %3064 = vmatpush1.msra.mxu0 0.0
        %3065 = vmatprep.subr.mxu0 0.0
        %3066 = vmatpush1.msra.mxu0 0.0
        %3067 = vmatprep.subr.mxu0 0.0
        %3068 = vmatpush1.msra.mxu0 0.0
        %3069 = vmatprep.subr.mxu0 0.0
        %3070 = vmatpush1.msra.mxu0 0.0
        %3071 = vmatprep.subr.mxu0 0.0
        %3072 = vmatpush1.msra.mxu0 0.0
        %3073 = vmatprep.subr.mxu0 0.0
        %3074 = vmatpush1.msra.mxu0 0.0
        %3075 = vmatprep.subr.mxu0 0.0
        %3076 = vmatpush1.msra.mxu0 0.0
        %3077 = vmatprep.subr.mxu0 0.0
        %3078 = vmatpush1.msra.mxu0 0.0
        %3079 = vmatprep.subr.mxu0 0.0
        %3080 = vmatpush1.msra.mxu0 0.0
        %3081 = vmatprep.subr.mxu0 0.0
        %3082 = vmatpush1.msra.mxu0 0.0
        %3083 = vmatprep.subr.mxu0 0.0
        %3084 = vmatpush1.msra.mxu0 0.0
        %3085 = vmatprep.subr.mxu0 0.0
        %3086 = vmatpush1.msra.mxu0 0.0
        %3087 = vmatprep.subr.mxu0 0.0
        %3088 = vmatpush1.msra.mxu0 0.0
        %3089 = vmatprep.subr.mxu0 0.0
        %3090 = vmatpush1.msra.mxu0 0.0
        %3091 = vmatprep.mubr.f32.mxu0 0.0
        %3092 = vmatmul.mubr.f32.gmra.mrb[0].mxu0 %v626
        %v3093 = vpop.f32.mrb[0].mxu0
        %v3094 = vadd.f32 0.0, %v3093
        %v3095 = vpop.f32.mrb[0].mxu0
        %v3096 = vadd.f32 0.0, %v3095
        %3097 = vdwg.mxu0
        %3098 = vmatprep.subr.mxu0 %v2589
        %3099 = vmatpush1.msra.mxu0 %v2588
        %3100 = vmatprep.subr.mxu0 %v2605
        %3101 = vmatpush1.msra.mxu0 %v2604
        %3102 = vmatprep.subr.mxu0 %v2664
        %3103 = vmatpush1.msra.mxu0 %v2661
        %3104 = vmatprep.subr.mxu0 0.0
        %3105 = vmatpush1.msra.mxu0 0.0
        %3106 = vmatprep.subr.mxu0 0.0
        %3107 = vmatpush1.msra.mxu0 0.0
        %3108 = vmatprep.subr.mxu0 0.0
        %3109 = vmatpush1.msra.mxu0 0.0
        %3110 = vmatprep.subr.mxu0 0.0
        %3111 = vmatpush1.msra.mxu0 0.0
        %3112 = vmatprep.subr.mxu0 0.0
        %3113 = vmatpush1.msra.mxu0 0.0
        %3114 = vmatprep.subr.mxu0 0.0
        %3115 = vmatpush1.msra.mxu0 0.0
        %3116 = vmatprep.subr.mxu0 0.0
        %3117 = vmatpush1.msra.mxu0 0.0
        %3118 = vmatprep.subr.mxu0 0.0
        %3119 = vmatpush1.msra.mxu0 0.0
        %3120 = vmatprep.subr.mxu0 0.0
        %3121 = vmatpush1.msra.mxu0 0.0
        %3122 = vmatprep.subr.mxu0 0.0
        %3123 = vmatpush1.msra.mxu0 0.0
        %3124 = vmatprep.subr.mxu0 0.0
        %3125 = vmatpush1.msra.mxu0 0.0
        %3126 = vmatprep.subr.mxu0 0.0
        %3127 = vmatpush1.msra.mxu0 0.0
        %3128 = vmatprep.subr.mxu0 0.0
        %3129 = vmatpush1.msra.mxu0 0.0
        %3130 = vmatprep.subr.mxu0 0.0
        %3131 = vmatpush1.msra.mxu0 0.0
        %3132 = vmatprep.subr.mxu0 0.0
        %3133 = vmatpush1.msra.mxu0 0.0
        %3134 = vmatprep.subr.mxu0 0.0
        %3135 = vmatpush1.msra.mxu0 0.0
        %3136 = vmatprep.subr.mxu0 0.0
        %3137 = vmatpush1.msra.mxu0 0.0
        %3138 = vmatprep.subr.mxu0 0.0
        %3139 = vmatpush1.msra.mxu0 0.0
        %3140 = vmatprep.subr.mxu0 0.0
        %3141 = vmatpush1.msra.mxu0 0.0
        %3142 = vmatprep.subr.mxu0 0.0
        %3143 = vmatpush1.msra.mxu0 0.0
        %3144 = vmatprep.subr.mxu0 0.0
        %3145 = vmatpush1.msra.mxu0 0.0
        %3146 = vmatprep.subr.mxu0 0.0
        %3147 = vmatpush1.msra.mxu0 0.0
        %3148 = vmatprep.subr.mxu0 0.0
        %3149 = vmatpush1.msra.mxu0 0.0
        %3150 = vmatprep.subr.mxu0 0.0
        %3151 = vmatpush1.msra.mxu0 0.0
        %3152 = vmatprep.subr.mxu0 0.0
        %3153 = vmatpush1.msra.mxu0 0.0
        %3154 = vmatprep.subr.mxu0 0.0
        %3155 = vmatpush1.msra.mxu0 0.0
        %3156 = vmatprep.subr.mxu0 0.0
        %3157 = vmatpush1.msra.mxu0 0.0
        %3158 = vmatprep.subr.mxu0 0.0
        %3159 = vmatpush1.msra.mxu0 0.0
        %3160 = vmatprep.subr.mxu0 0.0
        %3161 = vmatpush1.msra.mxu0 0.0
        %3162 = vmatprep.mubr.f32.mxu0 0.0
        %3163 = vmatmul.mubr.f32.gmra.mrb[0].mxu0 %v626
        %v3164 = vpop.f32.mrb[0].mxu0
        %v3165 = vadd.f32 0.0, %v3164
        %v3166 = vpop.f32.mrb[0].mxu0
        %v3167 = vadd.f32 0.0, %v3166
        %3168 = vdwg.mxu0
        %3169 = vmatprep.subr.mxu0 %v2591
        %3170 = vmatpush1.msra.mxu0 %v2590
        %3171 = vmatprep.subr.mxu0 %v2607
        %3172 = vmatpush1.msra.mxu0 %v2606
        %3173 = vmatprep.subr.mxu0 %v2670
        %3174 = vmatpush1.msra.mxu0 %v2667
        %3175 = vmatprep.subr.mxu0 0.0
        %3176 = vmatpush1.msra.mxu0 0.0
        %3177 = vmatprep.subr.mxu0 0.0
        %3178 = vmatpush1.msra.mxu0 0.0
        %3179 = vmatprep.subr.mxu0 0.0
        %3180 = vmatpush1.msra.mxu0 0.0
        %3181 = vmatprep.subr.mxu0 0.0
        %3182 = vmatpush1.msra.mxu0 0.0
        %3183 = vmatprep.subr.mxu0 0.0
        %3184 = vmatpush1.msra.mxu0 0.0
        %3185 = vmatprep.subr.mxu0 0.0
        %3186 = vmatpush1.msra.mxu0 0.0
        %3187 = vmatprep.subr.mxu0 0.0
        %3188 = vmatpush1.msra.mxu0 0.0
        %3189 = vmatprep.subr.mxu0 0.0
        %3190 = vmatpush1.msra.mxu0 0.0
        %3191 = vmatprep.subr.mxu0 0.0
        %3192 = vmatpush1.msra.mxu0 0.0
        %3193 = vmatprep.subr.mxu0 0.0
        %3194 = vmatpush1.msra.mxu0 0.0
        %3195 = vmatprep.subr.mxu0 0.0
        %3196 = vmatpush1.msra.mxu0 0.0
        %3197 = vmatprep.subr.mxu0 0.0
        %3198 = vmatpush1.msra.mxu0 0.0
        %3199 = vmatprep.subr.mxu0 0.0
        %3200 = vmatpush1.msra.mxu0 0.0
        %3201 = vmatprep.subr.mxu0 0.0
        %3202 = vmatpush1.msra.mxu0 0.0
        %3203 = vmatprep.subr.mxu0 0.0
        %3204 = vmatpush1.msra.mxu0 0.0
        %3205 = vmatprep.subr.mxu0 0.0
        %3206 = vmatpush1.msra.mxu0 0.0
        %3207 = vmatprep.subr.mxu0 0.0
        %3208 = vmatpush1.msra.mxu0 0.0
        %3209 = vmatprep.subr.mxu0 0.0
        %3210 = vmatpush1.msra.mxu0 0.0
        %3211 = vmatprep.subr.mxu0 0.0
        %3212 = vmatpush1.msra.mxu0 0.0
        %3213 = vmatprep.subr.mxu0 0.0
        %3214 = vmatpush1.msra.mxu0 0.0
        %3215 = vmatprep.subr.mxu0 0.0
        %3216 = vmatpush1.msra.mxu0 0.0
        %3217 = vmatprep.subr.mxu0 0.0
        %3218 = vmatpush1.msra.mxu0 0.0
        %3219 = vmatprep.subr.mxu0 0.0
        %3220 = vmatpush1.msra.mxu0 0.0
        %3221 = vmatprep.subr.mxu0 0.0
        %3222 = vmatpush1.msra.mxu0 0.0
        %3223 = vmatprep.subr.mxu0 0.0
        %3224 = vmatpush1.msra.mxu0 0.0
        %3225 = vmatprep.subr.mxu0 0.0
        %3226 = vmatpush1.msra.mxu0 0.0
        %3227 = vmatprep.subr.mxu0 0.0
        %3228 = vmatpush1.msra.mxu0 0.0
        %3229 = vmatprep.subr.mxu0 0.0
        %3230 = vmatpush1.msra.mxu0 0.0
        %3231 = vmatprep.subr.mxu0 0.0
        %3232 = vmatpush1.msra.mxu0 0.0
        %3233 = vmatprep.mubr.f32.mxu0 0.0
        %3234 = vmatmul.mubr.f32.gmra.mrb[0].mxu0 %v626
        %v3235 = vpop.f32.mrb[0].mxu0
        %v3236 = vadd.f32 0.0, %v3235
        %v3237 = vpop.f32.mrb[0].mxu0
        %v3238 = vadd.f32 0.0, %v3237
        %3239 = vdwg.mxu0
        %v3240 = vmax.f32 %v744, %v1409
        %v3241 = vmax.f32 %v746, %v1411
        %v3242 = vmax.f32 %v815, %v1480
        %v3243 = vmax.f32 %v817, %v1482
        %v3244 = vmax.f32 %v886, %v1551
        %v3245 = vmax.f32 %v888, %v1553
        %v3246 = vmax.f32 %v957, %v1622
        %v3247 = vmax.f32 %v959, %v1624
        %v3248 = vmax.f32 %v1028, %v1693
        %v3249 = vmax.f32 %v1030, %v1695
        %v3250 = vmax.f32 %v1099, %v1764
        %v3251 = vmax.f32 %v1101, %v1766
        %v3252 = vmax.f32 %v1170, %v1835
        %v3253 = vmax.f32 %v1172, %v1837
        %v3254 = vmax.f32 %v1241, %v1906
        %v3255 = vmax.f32 %v1243, %v1908
        %v3256 = vmax.f32 %v2074, %v2739
        %v3257 = vmax.f32 %v2076, %v2741
        %v3258 = vmax.f32 %v2145, %v2810
        %v3259 = vmax.f32 %v2147, %v2812
        %v3260 = vmax.f32 %v2216, %v2881
        %v3261 = vmax.f32 %v2218, %v2883
        %v3262 = vmax.f32 %v2287, %v2952
        %v3263 = vmax.f32 %v2289, %v2954
        %v3264 = vmax.f32 %v2358, %v3023
        %v3265 = vmax.f32 %v2360, %v3025
        %v3266 = vmax.f32 %v2429, %v3094
        %v3267 = vmax.f32 %v2431, %v3096
        %v3268 = vmax.f32 %v2500, %v3165
        %v3269 = vmax.f32 %v2502, %v3167
        %v3270 = vmax.f32 %v2571, %v3236
        %v3271 = vmax.f32 %v2573, %v3238
        %v3272 = vmax.f32 %v3240, %v3256
        %v3273 = vmax.f32 %v3241, %v3257
        %v3274 = vmax.f32 %v3242, %v3258
        %v3275 = vmax.f32 %v3243, %v3259
        %v3276 = vmax.f32 %v3244, %v3260
        %v3277 = vmax.f32 %v3245, %v3261
        %v3278 = vmax.f32 %v3246, %v3262
        %v3279 = vmax.f32 %v3247, %v3263
        %v3280 = vmax.f32 %v3248, %v3264
        %v3281 = vmax.f32 %v3249, %v3265
        %v3282 = vmax.f32 %v3250, %v3266
        %v3283 = vmax.f32 %v3251, %v3267
        %v3284 = vmax.f32 %v3252, %v3268
        %v3285 = vmax.f32 %v3253, %v3269
        %v3286 = vmax.f32 %v3254, %v3270
        %v3287 = vmax.f32 %v3255, %v3271
        %v3288 = vld [vmem:[%s2] sm:$0x1f]
        %3290 = vset.pattern.permute.xlu0 0
        %3291 = vperm.xlu0 %3290, %v3288
        %v3292 = vpop.permute.xlu0 %3291
        %v3294 = vadd.f32 %v3272, %v3292
        %v3295 = vadd.f32 %v3273, %v3292
        %v3296 = vadd.f32 %v3274, %v3292
        %v3297 = vadd.f32 %v3275, %v3292
        %v3298 = vadd.f32 %v3276, %v3292
        %v3299 = vadd.f32 %v3277, %v3292
        %v3300 = vadd.f32 %v3278, %v3292
        %v3301 = vadd.f32 %v3279, %v3292
        %v3302 = vadd.f32 %v3280, %v3292
        %v3303 = vadd.f32 %v3281, %v3292
        %v3304 = vadd.f32 %v3282, %v3292
        %v3305 = vadd.f32 %v3283, %v3292
        %v3306 = vadd.f32 %v3284, %v3292
        %v3307 = vadd.f32 %v3285, %v3292
        %v3308 = vadd.f32 %v3286, %v3292
        %v3309 = vadd.f32 %v3287, %v3292
        %v3310 = vmax.f32 %v3294, 0.0
        %v3311 = vmax.f32 %v3295, 0.0
        %v3312 = vmax.f32 %v3296, 0.0
        %v3313 = vmax.f32 %v3297, 0.0
        %v3314 = vmax.f32 %v3298, 0.0
        %v3315 = vmax.f32 %v3299, 0.0
        %v3316 = vmax.f32 %v3300, 0.0
        %v3317 = vmax.f32 %v3301, 0.0
        %v3318 = vmax.f32 %v3302, 0.0
        %v3319 = vmax.f32 %v3303, 0.0
        %v3320 = vmax.f32 %v3304, 0.0
        %v3321 = vmax.f32 %v3305, 0.0
        %v3322 = vmax.f32 %v3306, 0.0
        %v3323 = vmax.f32 %v3307, 0.0
        %v3324 = vmax.f32 %v3308, 0.0
        %v3325 = vmax.f32 %v3309, 0.0
        %3326 = vst [vmem:[%s573] sm:$0x1f] %v3310
        %3327 = vst [vmem:[%s573 + $0x8] sm:$0x1f] %v3311
        %3328 = vst [vmem:[%s573 + $0x10] sm:$0x1f] %v3312
        %3329 = vst [vmem:[%s573 + $0x18] sm:$0x1f] %v3313
        %3330 = vst [vmem:[%s573 + $0x20] sm:$0x1f] %v3314
        %3331 = vst [vmem:[%s573 + $0x28] sm:$0x1f] %v3315
        %3332 = vst [vmem:[%s573 + $0x30] sm:$0x1f] %v3316
        %3333 = vst [vmem:[%s573 + $0x38] sm:$0x1f] %v3317
        %3334 = vst [vmem:[%s573 + $0x40] sm:$0x1f] %v3318
        %3335 = vst [vmem:[%s573 + $0x48] sm:$0x1f] %v3319
        %3336 = vst [vmem:[%s573 + $0x50] sm:$0x1f] %v3320
        %3337 = vst [vmem:[%s573 + $0x58] sm:$0x1f] %v3321
        %3338 = vst [vmem:[%s573 + $0x60] sm:$0x1f] %v3322
        %3339 = vst [vmem:[%s573 + $0x68] sm:$0x1f] %v3323
        %3340 = vst [vmem:[%s573 + $0x70] sm:$0x1f] %v3324
        %3341 = vst [vmem:[%s573 + $0x78] sm:$0x1f] %v3325
        %s3342 = smul.u32 16, %s14
        %p3343 = scmp.lt.s32.totalorder %s3342, 63
        %s3344 = scalar_select %p3343, %s3342, 63
        %s3345 = smul.addr %s3344, 8
        %s3346 = scalar_lea.vmem %s3, %s3345
        // Predicated region
        $region56: #{cnn_forward.3} parent=50 // pred_check
          %p3347 = pneg %p100
        $region57: #{cnn_forward.3} parent=50 // pred_check_branch
          %3349 = sbr.rel (%p3347) target = $region59
        $region58: #{cnn_forward.3} parent=50 // pred_region
          %s3350 = smul.u32 16, %s14
        $region59: #{cnn_forward.3} parent=50 // pred_fallthru
          _
      $region51: #{cnn_forward.3} parent=5 // pred_fallthru
        _
      %p3351 = scmp.le.s32.totalorder 2, %s9
      // Predicated region
      $region60: #{cnn_forward.3} parent=5 // pred_check
        %p3352 = pneg %p3351
      $region61: #{cnn_forward.3} parent=5 // pred_check_branch
        %3354 = sbr.rel (%p3352) target = $region63
      $region62: #{cnn_forward.3} parent=5 // pred_region
        %s3355 = ssub.s32 %s9, 2
        // Predicated region
        $region64: #{cnn_forward.3} parent=62 // pred_check
          %p3356 = pneg %p106
        $region65: #{cnn_forward.3} parent=62 // pred_check_branch
          %3358 = sbr.rel (%p3356) target = $region67
        $region66: #{cnn_forward.3} parent=62 // pred_region
          %s3359 = smul.u32 16, %s15
          %p3360 = scmp.lt.s32.totalorder %s3359, 63
          %s3361 = scalar_select %p3360, %s3359, 63
          %s3362 = smul.addr %s3361, 8
          %s3363 = scalar_lea.vmem %s3, %s3362
        $region67: #{cnn_forward.3} parent=62 // pred_fallthru
          _
      $region63: #{cnn_forward.3} parent=5 // pred_fallthru
        _
    $region6: #{cnn_forward.3} parent=1 // loop_footer
      %s13 = sadd.s32 1, %s9
    $region7: #{cnn_forward.3} parent=1 // loop_footer_branch
      %8 = sbr.rel target = $region3
    $region8: #{cnn_forward.3} parent=1 // loop_exit
      _

// kernel: cnn_forward.4
$region0: #{cnn_forward.4}
  #allocation0 [shape = 'u32[]', space=smem, size = 0x4, offset = 0x4, fixed_abs, tag = 'smem constant byte address 0x4 - core index']
  #allocation1 [shape = 'u32[144,128]{1,0:T(1,128)}', space=vmem, size = 0x12000, scoped, tag = 'internal scratch']
  %s0 = inlined_call_operand.vmem [shape: f32[4,20,512], index: 0, kind: input, shape index: {}]
  %s1 = inlined_call_operand.vmem [shape: f32[5,20], index: 1, kind: input, shape index: {}]
  %s2 = inlined_call_operand.vmem [shape: f32[5,1], index: 2, kind: input, shape index: {}]
  %s3 = inlined_call_operand.vmem [shape: f32[5,512], index: 3, kind: output, shape index: {}]
  %s4 = sld [smem:[#allocation0]]
  $region68: #{cnn_forward.4} parent=0
    _
  %s6 = ssub.s32 1, %s4
  %s7 = scalar_select 0, %s6, %s4
  $region1: #{cnn_forward.4} parent=0
    #allocation2 [shape = 'u8[196608]{0}', space=vmem, size = 0x30000, scoped, tag = 'input window, operand 0']
    loop: start=0, step=1, limit=4
    $region2: #{cnn_forward.4} parent=1 // loop_pre_header
      _
    $region3: #{cnn_forward.4} parent=1 // loop_header
      %s9 = sphi 0, %s13
      %p10 = scmp.ge.s32.totalorder %s9, 4
      %s19 = sphi 0, %s21
      %s22 = sphi 0, %s19
      %s23 = sphi 0, %s22
      %s39 = sphi 0, %s23
      %s43 = sphi 0, %s43
      %s45 = sphi 0, %s43
      %s46 = sphi 0, %s45
      %s60 = sphi 0, %s46
      %s64 = sphi 0, %s64
      %s66 = sphi 0, %s64
      %s67 = sphi 0, %s66
      %s81 = sphi 0, %s67
      %s87 = sphi 0, %s89
      %s90 = sphi 0, %s87
      %s91 = sphi 0, %s90
      %s107 = sphi 0, %s91
    $region4: #{cnn_forward.4} parent=1 // loop_header_branch
      %12 = sbr.rel (%p10) target = $region8
    $region5: #{cnn_forward.4} parent=1 // loop_body
      %s14 = ssub.s32 %s9, 1
      %s15 = ssub.s32 %s9, 2
      %s16 = sadd.s32 %s9, 1
      %s17 = ssub.s32 %s9, %s16
      %p18 = scmp.eq.s32.totalorder %s17, 0
      %s20 = sadd.s32 %s19, 1
      %s21 = scalar_select %p18, %s19, %s20
      %p24 = pneg %p18
      %p25 = scmp.eq.s32.totalorder %s9, 1
      %p26 = por %p24, %p25
      %p27 = scmp.ne.s32.totalorder %s19, %s22
      %p28 = scmp.eq.s32.totalorder %s9, 0
      %p29 = por %p27, %p28
      %p30 = scmp.ne.s32.totalorder %s19, %s22
      %p31 = scmp.eq.s32.totalorder %s14, 1
      %p32 = por %p30, %p31
      %p33 = scmp.ne.s32.totalorder %s22, %s23
      %p34 = scmp.eq.s32.totalorder %s14, 0
      %p35 = por %p33, %p34
      %p36 = scmp.ne.s32.totalorder %s22, %s23
      %p37 = scmp.eq.s32.totalorder %s15, 1
      %p38 = por %p36, %p37
      %p40 = scmp.ne.s32.totalorder %s23, %s39
      %p41 = scmp.eq.s32.totalorder %s15, 0
      %p42 = por %p40, %p41
      %s44 = sadd.s32 %s43, 1
      %p47 = scmp.eq.s32.totalorder %s9, 1
      %p48 = scmp.ne.s32.totalorder %s43, %s45
      %p49 = scmp.eq.s32.totalorder %s9, 0
      %p50 = por %p48, %p49
      %p51 = scmp.ne.s32.totalorder %s43, %s45
      %p52 = scmp.eq.s32.totalorder %s14, 1
      %p53 = por %p51, %p52
      %p54 = scmp.ne.s32.totalorder %s45, %s46
      %p55 = scmp.eq.s32.totalorder %s14, 0
      %p56 = por %p54, %p55
      %p57 = scmp.ne.s32.totalorder %s45, %s46
      %p58 = scmp.eq.s32.totalorder %s15, 1
      %p59 = por %p57, %p58
      %p61 = scmp.ne.s32.totalorder %s46, %s60
      %p62 = scmp.eq.s32.totalorder %s15, 0
      %p63 = por %p61, %p62
      %s65 = sadd.s32 %s64, 1
      %p68 = scmp.eq.s32.totalorder %s9, 1
      %p69 = scmp.ne.s32.totalorder %s64, %s66
      %p70 = scmp.eq.s32.totalorder %s9, 0
      %p71 = por %p69, %p70
      %p72 = scmp.ne.s32.totalorder %s64, %s66
      %p73 = scmp.eq.s32.totalorder %s14, 1
      %p74 = por %p72, %p73
      %p75 = scmp.ne.s32.totalorder %s66, %s67
      %p76 = scmp.eq.s32.totalorder %s14, 0
      %p77 = por %p75, %p76
      %p78 = scmp.ne.s32.totalorder %s66, %s67
      %p79 = scmp.eq.s32.totalorder %s15, 1
      %p80 = por %p78, %p79
      %p82 = scmp.ne.s32.totalorder %s67, %s81
      %p83 = scmp.eq.s32.totalorder %s15, 0
      %p84 = por %p82, %p83
      %s85 = ssub.s32 %s9, %s16
      %p86 = scmp.eq.s32.totalorder %s85, 0
      %s88 = sadd.s32 %s87, 1
      %s89 = scalar_select %p86, %s87, %s88
      %p92 = pneg %p86
      %p93 = scmp.eq.s32.totalorder %s9, 1
      %p94 = por %p92, %p93
      %p95 = scmp.ne.s32.totalorder %s87, %s90
      %p96 = scmp.eq.s32.totalorder %s9, 0
      %p97 = por %p95, %p96
      %p98 = scmp.ne.s32.totalorder %s87, %s90
      %p99 = scmp.eq.s32.totalorder %s14, 1
      %p100 = por %p98, %p99
      %p101 = scmp.ne.s32.totalorder %s90, %s91
      %p102 = scmp.eq.s32.totalorder %s14, 0
      %p103 = por %p101, %p102
      %p104 = scmp.ne.s32.totalorder %s90, %s91
      %p105 = scmp.eq.s32.totalorder %s15, 1
      %p106 = por %p104, %p105
      %p108 = scmp.ne.s32.totalorder %s91, %s107
      %p109 = scmp.eq.s32.totalorder %s15, 0
      %p110 = por %p108, %p109
      %p111 = scmp.le.s32.totalorder 1, %s9
      %p112 = scmp.lt.s32.totalorder %s9, 3
      %p113 = pnand %p111, %p112
      %p114 = pneg %p113
      // Predicated region
      $region9: #{cnn_forward.4} parent=5 // pred_check
        _
      $region10: #{cnn_forward.4} parent=5 // pred_check_branch
        %116 = sbr.rel (%p113) target = $region12
      $region11: #{cnn_forward.4} parent=5 // pred_region
        %s117 = ssub.s32 %s9, 1
        // Predicated region
        $region13: #{cnn_forward.4} parent=11 // pred_check
          %p118 = pneg %p56
        $region14: #{cnn_forward.4} parent=11 // pred_check_branch
          %120 = sbr.rel (%p118) target = $region16
        $region15: #{cnn_forward.4} parent=11 // pred_region
          _
        $region16: #{cnn_forward.4} parent=11 // pred_fallthru
          _
        // Predicated region
        $region17: #{cnn_forward.4} parent=11 // pred_check
          %p121 = pneg %p77
        $region18: #{cnn_forward.4} parent=11 // pred_check_branch
          %123 = sbr.rel (%p121) target = $region20
        $region19: #{cnn_forward.4} parent=11 // pred_region
          _
        $region20: #{cnn_forward.4} parent=11 // pred_fallthru
          _
      $region12: #{cnn_forward.4} parent=5 // pred_fallthru
        _
      %p124 = scmp.lt.s32.totalorder %s9, 2
      // Predicated region
      $region21: #{cnn_forward.4} parent=5 // pred_check
        %p125 = pneg %p124
      $region22: #{cnn_forward.4} parent=5 // pred_check_branch
        %127 = sbr.rel (%p125) target = $region24
      $region23: #{cnn_forward.4} parent=5 // pred_region
        // Predicated region
        $region25: #{cnn_forward.4} parent=23 // pred_check
          %p128 = pneg %p29
        $region26: #{cnn_forward.4} parent=23 // pred_check_branch
          %130 = sbr.rel (%p128) target = $region28
        $region27: #{cnn_forward.4} parent=23 // pred_region
          %s131 = sand.u32 %s19, 1
          %s132 = sand.u32 %s19, 1
          %s133 = smul.addr %s132, 192
          %s134 = scalar_lea.vmem [#allocation2], %s133
          %s135 = smul.u32 2, %s9
          %s136 = smul.addr %s135, 8
          %s137 = scalar_lea.vmem %s0, %s136
          // Predicated region
          $region29: #{cnn_forward.4} parent=27 // pred_check
            _
          $region30: #{cnn_forward.4} parent=27 // pred_check_branch
            %139 = sbr.rel (0) target = $region32
          $region31: #{cnn_forward.4} parent=27 // pred_region
            // Predicated region
            $region33: #{cnn_forward.4} parent=31 // pred_check
              _
            $region34: #{cnn_forward.4} parent=31 // pred_check_branch
              %141 = sbr.rel (0) target = $region36
            $region35: #{cnn_forward.4} parent=31 // pred_region
              loop: start=0, step=1, limit=1
              $region37: #{cnn_forward.4} parent=35 // loop_pre_header
                _
              $region38: #{cnn_forward.4} parent=35 // loop_header
                %s143 = sphi 0, %s147
                %p144 = scmp.ge.s32.totalorder %s143, 1
                %s148 = sphi %s137, %s137
                %s149 = sphi %s134, %s134
              $region39: #{cnn_forward.4} parent=35 // loop_header_branch
                %146 = sbr.rel (%p144) target = $region43
              $region40: #{cnn_forward.4} parent=35 // loop_body
                %v150 = vld [vmem:[%s148] sm:$0xff]
                %151 = vst [vmem:[%s149] sm:$0xff] %v150
                %v152 = vld [vmem:[%s148 + $0x8] sm:$0xff]
                %153 = vst [vmem:[%s149 + $0x8] sm:$0xff] %v152
                %v154 = vld [vmem:[%s148 + $0x20] sm:$0xff]
                %155 = vst [vmem:[%s149 + $0x10] sm:$0xff] %v154
                %v156 = vld [vmem:[%s148 + $0x28] sm:$0xff]
                %157 = vst [vmem:[%s149 + $0x18] sm:$0xff] %v156
                %v158 = vld [vmem:[%s148 + $0x40] sm:$0xff]
                %159 = vst [vmem:[%s149 + $0x20] sm:$0xff] %v158
                %v160 = vld [vmem:[%s148 + $0x48] sm:$0xff]
                %161 = vst [vmem:[%s149 + $0x28] sm:$0xff] %v160
                %v162 = vld [vmem:[%s148 + $0x60] sm:$0xff]
                %163 = vst [vmem:[%s149 + $0x30] sm:$0xff] %v162
                %v164 = vld [vmem:[%s148 + $0x68] sm:$0xff]
                %165 = vst [vmem:[%s149 + $0x38] sm:$0xff] %v164
                %v166 = vld [vmem:[%s148 + $0x80] sm:$0xff]
                %167 = vst [vmem:[%s149 + $0x40] sm:$0xff] %v166
                %v168 = vld [vmem:[%s148 + $0x88] sm:$0xff]
                %169 = vst [vmem:[%s149 + $0x48] sm:$0xff] %v168
                %v170 = vld [vmem:[%s148 + $0xa0] sm:$0xff]
                %171 = vst [vmem:[%s149 + $0x50] sm:$0xff] %v170
                %v172 = vld [vmem:[%s148 + $0xa8] sm:$0xff]
                %173 = vst [vmem:[%s149 + $0x58] sm:$0xff] %v172
                %v174 = vld [vmem:[%s148 + $0xc0] sm:$0xff]
                %175 = vst [vmem:[%s149 + $0x60] sm:$0xff] %v174
                %v176 = vld [vmem:[%s148 + $0xc8] sm:$0xff]
                %177 = vst [vmem:[%s149 + $0x68] sm:$0xff] %v176
                %v178 = vld [vmem:[%s148 + $0xe0] sm:$0xff]
                %179 = vst [vmem:[%s149 + $0x70] sm:$0xff] %v178
                %v180 = vld [vmem:[%s148 + $0xe8] sm:$0xff]
                %181 = vst [vmem:[%s149 + $0x78] sm:$0xff] %v180
                %v182 = vld [vmem:[%s148 + $0x100] sm:$0xff]
                %183 = vst [vmem:[%s149 + $0x80] sm:$0xff] %v182
                %v184 = vld [vmem:[%s148 + $0x108] sm:$0xff]
                %185 = vst [vmem:[%s149 + $0x88] sm:$0xff] %v184
                %v186 = vld [vmem:[%s148 + $0x120] sm:$0xff]
                %187 = vst [vmem:[%s149 + $0x90] sm:$0xff] %v186
                %v188 = vld [vmem:[%s148 + $0x128] sm:$0xff]
                %189 = vst [vmem:[%s149 + $0x98] sm:$0xff] %v188
                %v190 = vld [vmem:[%s148 + $0x140] sm:$0xff]
                %191 = vst [vmem:[%s149 + $0xa0] sm:$0xff] %v190
                %v192 = vld [vmem:[%s148 + $0x148] sm:$0xff]
                %193 = vst [vmem:[%s149 + $0xa8] sm:$0xff] %v192
                %v194 = vld [vmem:[%s148 + $0x160] sm:$0xff]
                %195 = vst [vmem:[%s149 + $0xb0] sm:$0xff] %v194
                %v196 = vld [vmem:[%s148 + $0x168] sm:$0xff]
                %197 = vst [vmem:[%s149 + $0xb8] sm:$0xff] %v196
              $region41: #{cnn_forward.4} parent=35 // loop_footer
                %s147 = sadd.s32 1, %s143
              $region42: #{cnn_forward.4} parent=35 // loop_footer_branch
                %142 = sbr.rel target = $region38
              $region43: #{cnn_forward.4} parent=35 // loop_exit
                _
            $region36: #{cnn_forward.4} parent=31 // pred_fallthru
              _
            // Predicated region
            $region44: #{cnn_forward.4} parent=31 // pred_check
              _
            $region45: #{cnn_forward.4} parent=31 // pred_check_branch
              %199 = sbr.rel target = $region47
            $region46: #{cnn_forward.4} parent=31 // pred_region
              _
            $region47: #{cnn_forward.4} parent=31 // pred_fallthru
              _
          $region32: #{cnn_forward.4} parent=27 // pred_fallthru
            _
          %200 = vnop
        $region28: #{cnn_forward.4} parent=23 // pred_fallthru
          _
      $region24: #{cnn_forward.4} parent=5 // pred_fallthru
        _
      %p201 = scmp.le.s32.totalorder 1, %s9
      %p202 = scmp.lt.s32.totalorder %s9, 3
      %p203 = pnand %p201, %p202
      %p204 = pneg %p203
      // Predicated region
      $region48: #{cnn_forward.4} parent=5 // pred_check
        _
      $region49: #{cnn_forward.4} parent=5 // pred_check_branch
        %206 = sbr.rel (%p203) target = $region51
      $region50: #{cnn_forward.4} parent=5 // pred_region
        %s207 = ssub.s32 %s9, 1
        %s208 = sand.u32 %s22, 1
        %s209 = sand.u32 %s22, 1
        %s210 = smul.addr %s209, 192
        %s211 = scalar_lea.vmem [#allocation2], %s210
        // Predicated region
        $region52: #{cnn_forward.4} parent=50 // pred_check
          %p212 = pneg %p35
        $region53: #{cnn_forward.4} parent=50 // pred_check_branch
          %214 = sbr.rel (%p212) target = $region55
        $region54: #{cnn_forward.4} parent=50 // pred_region
          _
        $region55: #{cnn_forward.4} parent=50 // pred_fallthru
          _
        %s215 = sand.u32 %s22, 1
        %s216 = sand.u32 %s22, 1
        %s217 = smul.addr %s216, 192
        %s218 = scalar_lea.vmem [#allocation2], %s217
        %p219 = pneg %p35
        %p220 = pneg %p32
        %p221 = pneg %p56
        %p222 = pneg %p53
        %p223 = pneg %p77
        %p224 = pneg %p74
        %p225 = pneg %p103
        %p226 = pneg %p100
        %s227 = smul.u32 2, %s14
        %p228 = scmp.lt.s32.totalorder %s227, 3
        %s229 = scalar_select %p228, %s227, 3
        %s230 = smul.addr %s229, 8
        %s231 = scalar_lea.vmem %s3, %s230
        %s232 = smul.u32 2, %s14
        %s233 = smul.u32 2, %s14
        %p234 = scmp.lt.s32.totalorder %s233, 3
        %s235 = scalar_select %p234, %s233, 3
        %s236 = smul.addr %s235, 8
        %s237 = scalar_lea.vmem %s3, %s236
        %s238 = smul.u32 2, %s14
        %v239 = vld [vmem:[%s1] sm:$0x1f]
        %v240 = vld [vmem:[%s211] sm:$0xff]
        %v241 = vld [vmem:[%s211 + $0x8] sm:$0xff]
        %v242 = vld [vmem:[%s211 + $0x10] sm:$0xff]
        %v243 = vld [vmem:[%s211 + $0x18] sm:$0xff]
        %v244 = vld [vmem:[%s211 + $0x20] sm:$0xf]
        %v245 = vld [vmem:[%s211 + $0x28] sm:$0xf]
        %vm246 = vcmask 162816
        %v248 = vsel %vm246, %v239, 0
        %vm250 = vcmask 1043456
        %v252 = vsel %vm250, %v244, 0
        %v255 = vsel %vm250, %v245, 0
        %257 = vmatprep.subr.mxu0 %v241
        %258 = vmatpush1.msra.mxu0 %v240
        %259 = vmatprep.subr.mxu0 %v243
        %260 = vmatpush1.msra.mxu0 %v242
        %261 = vmatprep.subr.mxu0 %v255
        %262 = vmatpush1.msra.mxu0 %v252
        %263 = vmatprep.subr.mxu0 0.0
        %264 = vmatpush1.msra.mxu0 0.0
        %265 = vmatprep.subr.mxu0 0.0
        %266 = vmatpush1.msra.mxu0 0.0
        %267 = vmatprep.subr.mxu0 0.0
        %268 = vmatpush1.msra.mxu0 0.0
        %269 = vmatprep.subr.mxu0 0.0
        %270 = vmatpush1.msra.mxu0 0.0
        %271 = vmatprep.subr.mxu0 0.0
        %272 = vmatpush1.msra.mxu0 0.0
        %273 = vmatprep.subr.mxu0 0.0
        %274 = vmatpush1.msra.mxu0 0.0
        %275 = vmatprep.subr.mxu0 0.0
        %276 = vmatpush1.msra.mxu0 0.0
        %277 = vmatprep.subr.mxu0 0.0
        %278 = vmatpush1.msra.mxu0 0.0
        %279 = vmatprep.subr.mxu0 0.0
        %280 = vmatpush1.msra.mxu0 0.0
        %281 = vmatprep.subr.mxu0 0.0
        %282 = vmatpush1.msra.mxu0 0.0
        %283 = vmatprep.subr.mxu0 0.0
        %284 = vmatpush1.msra.mxu0 0.0
        %285 = vmatprep.subr.mxu0 0.0
        %286 = vmatpush1.msra.mxu0 0.0
        %287 = vmatprep.subr.mxu0 0.0
        %288 = vmatpush1.msra.mxu0 0.0
        %289 = vmatprep.subr.mxu0 0.0
        %290 = vmatpush1.msra.mxu0 0.0
        %291 = vmatprep.subr.mxu0 0.0
        %292 = vmatpush1.msra.mxu0 0.0
        %293 = vmatprep.subr.mxu0 0.0
        %294 = vmatpush1.msra.mxu0 0.0
        %295 = vmatprep.subr.mxu0 0.0
        %296 = vmatpush1.msra.mxu0 0.0
        %297 = vmatprep.subr.mxu0 0.0
        %298 = vmatpush1.msra.mxu0 0.0
        %299 = vmatprep.subr.mxu0 0.0
        %300 = vmatpush1.msra.mxu0 0.0
        %301 = vmatprep.subr.mxu0 0.0
        %302 = vmatpush1.msra.mxu0 0.0
        %303 = vmatprep.subr.mxu0 0.0
        %304 = vmatpush1.msra.mxu0 0.0
        %305 = vmatprep.subr.mxu0 0.0
        %306 = vmatpush1.msra.mxu0 0.0
        %307 = vmatprep.subr.mxu0 0.0
        %308 = vmatpush1.msra.mxu0 0.0
        %309 = vmatprep.subr.mxu0 0.0
        %310 = vmatpush1.msra.mxu0 0.0
        %311 = vmatprep.subr.mxu0 0.0
        %312 = vmatpush1.msra.mxu0 0.0
        %313 = vmatprep.subr.mxu0 0.0
        %314 = vmatpush1.msra.mxu0 0.0
        %315 = vmatprep.subr.mxu0 0.0
        %316 = vmatpush1.msra.mxu0 0.0
        %317 = vmatprep.subr.mxu0 0.0
        %318 = vmatpush1.msra.mxu0 0.0
        %319 = vmatprep.subr.mxu0 0.0
        %320 = vmatpush1.msra.mxu0 0.0
        %321 = vmatprep.mubr.f32.mxu0 0.0
        %322 = vmatmul.mubr.f32.gmra.mrb[0].mxu0 %v248
        %v323 = vpop.f32.mrb[0].mxu0
        %v324 = vadd.f32 0.0, %v323
        %v325 = vpop.f32.mrb[0].mxu0
        %v326 = vadd.f32 0.0, %v325
        %327 = vdwg.mxu0
        %s328 = scalar_lea.vmem %s211, 48 [#allocation2]
        %v329 = vld [vmem:[%s328] sm:$0xff]
        %v330 = vld [vmem:[%s328 + $0x8] sm:$0xff]
        %v331 = vld [vmem:[%s328 + $0x10] sm:$0xff]
        %v332 = vld [vmem:[%s328 + $0x18] sm:$0xff]
        %v333 = vld [vmem:[%s328 + $0x20] sm:$0xf]
        %v334 = vld [vmem:[%s328 + $0x28] sm:$0xf]
        %v336 = vsel %vm250, %v333, 0
        %v339 = vsel %vm250, %v334, 0
        %341 = vmatprep.subr.mxu0 %v330
        %342 = vmatpush1.msra.mxu0 %v329
        %343 = vmatprep.subr.mxu0 %v332
        %344 = vmatpush1.msra.mxu0 %v331
        %345 = vmatprep.subr.mxu0 %v339
        %346 = vmatpush1.msra.mxu0 %v336
        %347 = vmatprep.subr.mxu0 0.0
        %348 = vmatpush1.msra.mxu0 0.0
        %349 = vmatprep.subr.mxu0 0.0
        %350 = vmatpush1.msra.mxu0 0.0
        %351 = vmatprep.subr.mxu0 0.0
        %352 = vmatpush1.msra.mxu0 0.0
        %353 = vmatprep.subr.mxu0 0.0
        %354 = vmatpush1.msra.mxu0 0.0
        %355 = vmatprep.subr.mxu0 0.0
        %356 = vmatpush1.msra.mxu0 0.0
        %357 = vmatprep.subr.mxu0 0.0
        %358 = vmatpush1.msra.mxu0 0.0
        %359 = vmatprep.subr.mxu0 0.0
        %360 = vmatpush1.msra.mxu0 0.0
        %361 = vmatprep.subr.mxu0 0.0
        %362 = vmatpush1.msra.mxu0 0.0
        %363 = vmatprep.subr.mxu0 0.0
        %364 = vmatpush1.msra.mxu0 0.0
        %365 = vmatprep.subr.mxu0 0.0
        %366 = vmatpush1.msra.mxu0 0.0
        %367 = vmatprep.subr.mxu0 0.0
        %368 = vmatpush1.msra.mxu0 0.0
        %369 = vmatprep.subr.mxu0 0.0
        %370 = vmatpush1.msra.mxu0 0.0
        %371 = vmatprep.subr.mxu0 0.0
        %372 = vmatpush1.msra.mxu0 0.0
        %373 = vmatprep.subr.mxu0 0.0
        %374 = vmatpush1.msra.mxu0 0.0
        %375 = vmatprep.subr.mxu0 0.0
        %376 = vmatpush1.msra.mxu0 0.0
        %377 = vmatprep.subr.mxu0 0.0
        %378 = vmatpush1.msra.mxu0 0.0
        %379 = vmatprep.subr.mxu0 0.0
        %380 = vmatpush1.msra.mxu0 0.0
        %381 = vmatprep.subr.mxu0 0.0
        %382 = vmatpush1.msra.mxu0 0.0
        %383 = vmatprep.subr.mxu0 0.0
        %384 = vmatpush1.msra.mxu0 0.0
        %385 = vmatprep.subr.mxu0 0.0
        %386 = vmatpush1.msra.mxu0 0.0
        %387 = vmatprep.subr.mxu0 0.0
        %388 = vmatpush1.msra.mxu0 0.0
        %389 = vmatprep.subr.mxu0 0.0
        %390 = vmatpush1.msra.mxu0 0.0
        %391 = vmatprep.subr.mxu0 0.0
        %392 = vmatpush1.msra.mxu0 0.0
        %393 = vmatprep.subr.mxu0 0.0
        %394 = vmatpush1.msra.mxu0 0.0
        %395 = vmatprep.subr.mxu0 0.0
        %396 = vmatpush1.msra.mxu0 0.0
        %397 = vmatprep.subr.mxu0 0.0
        %398 = vmatpush1.msra.mxu0 0.0
        %399 = vmatprep.subr.mxu0 0.0
        %400 = vmatpush1.msra.mxu0 0.0
        %401 = vmatprep.subr.mxu0 0.0
        %402 = vmatpush1.msra.mxu0 0.0
        %403 = vmatprep.subr.mxu0 0.0
        %404 = vmatpush1.msra.mxu0 0.0
        %405 = vmatprep.mubr.f32.mxu0 0.0
        %406 = vmatmul.mubr.f32.gmra.mrb[0].mxu0 %v248
        %v407 = vpop.f32.mrb[0].mxu0
        %v408 = vadd.f32 0.0, %v407
        %v409 = vpop.f32.mrb[0].mxu0
        %v410 = vadd.f32 0.0, %v409
        %411 = vdwg.mxu0
        %s412 = scalar_lea.vmem %s211, 96 [#allocation2]
        %v413 = vld [vmem:[%s412] sm:$0xff]
        %v414 = vld [vmem:[%s412 + $0x8] sm:$0xff]
        %v415 = vld [vmem:[%s412 + $0x10] sm:$0xff]
        %v416 = vld [vmem:[%s412 + $0x18] sm:$0xff]
        %v417 = vld [vmem:[%s412 + $0x20] sm:$0xf]
        %v418 = vld [vmem:[%s412 + $0x28] sm:$0xf]
        %v420 = vsel %vm250, %v417, 0
        %v423 = vsel %vm250, %v418, 0
        %425 = vmatprep.subr.mxu0 %v414
        %426 = vmatpush1.msra.mxu0 %v413
        %427 = vmatprep.subr.mxu0 %v416
        %428 = vmatpush1.msra.mxu0 %v415
        %429 = vmatprep.subr.mxu0 %v423
        %430 = vmatpush1.msra.mxu0 %v420
        %431 = vmatprep.subr.mxu0 0.0
        %432 = vmatpush1.msra.mxu0 0.0
        %433 = vmatprep.subr.mxu0 0.0
        %434 = vmatpush1.msra.mxu0 0.0
        %435 = vmatprep.subr.mxu0 0.0
        %436 = vmatpush1.msra.mxu0 0.0
        %437 = vmatprep.subr.mxu0 0.0
        %438 = vmatpush1.msra.mxu0 0.0
        %439 = vmatprep.subr.mxu0 0.0
        %440 = vmatpush1.msra.mxu0 0.0
        %441 = vmatprep.subr.mxu0 0.0
        %442 = vmatpush1.msra.mxu0 0.0
        %443 = vmatprep.subr.mxu0 0.0
        %444 = vmatpush1.msra.mxu0 0.0
        %445 = vmatprep.subr.mxu0 0.0
        %446 = vmatpush1.msra.mxu0 0.0
        %447 = vmatprep.subr.mxu0 0.0
        %448 = vmatpush1.msra.mxu0 0.0
        %449 = vmatprep.subr.mxu0 0.0
        %450 = vmatpush1.msra.mxu0 0.0
        %451 = vmatprep.subr.mxu0 0.0
        %452 = vmatpush1.msra.mxu0 0.0
        %453 = vmatprep.subr.mxu0 0.0
        %454 = vmatpush1.msra.mxu0 0.0
        %455 = vmatprep.subr.mxu0 0.0
        %456 = vmatpush1.msra.mxu0 0.0
        %457 = vmatprep.subr.mxu0 0.0
        %458 = vmatpush1.msra.mxu0 0.0
        %459 = vmatprep.subr.mxu0 0.0
        %460 = vmatpush1.msra.mxu0 0.0
        %461 = vmatprep.subr.mxu0 0.0
        %462 = vmatpush1.msra.mxu0 0.0
        %463 = vmatprep.subr.mxu0 0.0
        %464 = vmatpush1.msra.mxu0 0.0
        %465 = vmatprep.subr.mxu0 0.0
        %466 = vmatpush1.msra.mxu0 0.0
        %467 = vmatprep.subr.mxu0 0.0
        %468 = vmatpush1.msra.mxu0 0.0
        %469 = vmatprep.subr.mxu0 0.0
        %470 = vmatpush1.msra.mxu0 0.0
        %471 = vmatprep.subr.mxu0 0.0
        %472 = vmatpush1.msra.mxu0 0.0
        %473 = vmatprep.subr.mxu0 0.0
        %474 = vmatpush1.msra.mxu0 0.0
        %475 = vmatprep.subr.mxu0 0.0
        %476 = vmatpush1.msra.mxu0 0.0
        %477 = vmatprep.subr.mxu0 0.0
        %478 = vmatpush1.msra.mxu0 0.0
        %479 = vmatprep.subr.mxu0 0.0
        %480 = vmatpush1.msra.mxu0 0.0
        %481 = vmatprep.subr.mxu0 0.0
        %482 = vmatpush1.msra.mxu0 0.0
        %483 = vmatprep.subr.mxu0 0.0
        %484 = vmatpush1.msra.mxu0 0.0
        %485 = vmatprep.subr.mxu0 0.0
        %486 = vmatpush1.msra.mxu0 0.0
        %487 = vmatprep.subr.mxu0 0.0
        %488 = vmatpush1.msra.mxu0 0.0
        %489 = vmatprep.mubr.f32.mxu0 0.0
        %490 = vmatmul.mubr.f32.gmra.mrb[0].mxu0 %v248
        %v491 = vpop.f32.mrb[0].mxu0
        %v492 = vadd.f32 0.0, %v491
        %v493 = vpop.f32.mrb[0].mxu0
        %v494 = vadd.f32 0.0, %v493
        %495 = vdwg.mxu0
        %s496 = scalar_lea.vmem %s211, 144 [#allocation2]
        %v497 = vld [vmem:[%s496] sm:$0xff]
        %v498 = vld [vmem:[%s496 + $0x8] sm:$0xff]
        %v499 = vld [vmem:[%s496 + $0x10] sm:$0xff]
        %v500 = vld [vmem:[%s496 + $0x18] sm:$0xff]
        %v501 = vld [vmem:[%s496 + $0x20] sm:$0xf]
        %v502 = vld [vmem:[%s496 + $0x28] sm:$0xf]
        %v504 = vsel %vm250, %v501, 0
        %v507 = vsel %vm250, %v502, 0
        %509 = vmatprep.subr.mxu0 %v498
        %510 = vmatpush1.msra.mxu0 %v497
        %511 = vmatprep.subr.mxu0 %v500
        %512 = vmatpush1.msra.mxu0 %v499
        %513 = vmatprep.subr.mxu0 %v507
        %514 = vmatpush1.msra.mxu0 %v504
        %515 = vmatprep.subr.mxu0 0.0
        %516 = vmatpush1.msra.mxu0 0.0
        %517 = vmatprep.subr.mxu0 0.0
        %518 = vmatpush1.msra.mxu0 0.0
        %519 = vmatprep.subr.mxu0 0.0
        %520 = vmatpush1.msra.mxu0 0.0
        %521 = vmatprep.subr.mxu0 0.0
        %522 = vmatpush1.msra.mxu0 0.0
        %523 = vmatprep.subr.mxu0 0.0
        %524 = vmatpush1.msra.mxu0 0.0
        %525 = vmatprep.subr.mxu0 0.0
        %526 = vmatpush1.msra.mxu0 0.0
        %527 = vmatprep.subr.mxu0 0.0
        %528 = vmatpush1.msra.mxu0 0.0
        %529 = vmatprep.subr.mxu0 0.0
        %530 = vmatpush1.msra.mxu0 0.0
        %531 = vmatprep.subr.mxu0 0.0
        %532 = vmatpush1.msra.mxu0 0.0
        %533 = vmatprep.subr.mxu0 0.0
        %534 = vmatpush1.msra.mxu0 0.0
        %535 = vmatprep.subr.mxu0 0.0
        %536 = vmatpush1.msra.mxu0 0.0
        %537 = vmatprep.subr.mxu0 0.0
        %538 = vmatpush1.msra.mxu0 0.0
        %539 = vmatprep.subr.mxu0 0.0
        %540 = vmatpush1.msra.mxu0 0.0
        %541 = vmatprep.subr.mxu0 0.0
        %542 = vmatpush1.msra.mxu0 0.0
        %543 = vmatprep.subr.mxu0 0.0
        %544 = vmatpush1.msra.mxu0 0.0
        %545 = vmatprep.subr.mxu0 0.0
        %546 = vmatpush1.msra.mxu0 0.0
        %547 = vmatprep.subr.mxu0 0.0
        %548 = vmatpush1.msra.mxu0 0.0
        %549 = vmatprep.subr.mxu0 0.0
        %550 = vmatpush1.msra.mxu0 0.0
        %551 = vmatprep.subr.mxu0 0.0
        %552 = vmatpush1.msra.mxu0 0.0
        %553 = vmatprep.subr.mxu0 0.0
        %554 = vmatpush1.msra.mxu0 0.0
        %555 = vmatprep.subr.mxu0 0.0
        %556 = vmatpush1.msra.mxu0 0.0
        %557 = vmatprep.subr.mxu0 0.0
        %558 = vmatpush1.msra.mxu0 0.0
        %559 = vmatprep.subr.mxu0 0.0
        %560 = vmatpush1.msra.mxu0 0.0
        %561 = vmatprep.subr.mxu0 0.0
        %562 = vmatpush1.msra.mxu0 0.0
        %563 = vmatprep.subr.mxu0 0.0
        %564 = vmatpush1.msra.mxu0 0.0
        %565 = vmatprep.subr.mxu0 0.0
        %566 = vmatpush1.msra.mxu0 0.0
        %567 = vmatprep.subr.mxu0 0.0
        %568 = vmatpush1.msra.mxu0 0.0
        %569 = vmatprep.subr.mxu0 0.0
        %570 = vmatpush1.msra.mxu0 0.0
        %571 = vmatprep.subr.mxu0 0.0
        %572 = vmatpush1.msra.mxu0 0.0
        %573 = vmatprep.mubr.f32.mxu0 0.0
        %574 = vmatmul.mubr.f32.gmra.mrb[0].mxu0 %v248
        %v575 = vpop.f32.mrb[0].mxu0
        %v576 = vadd.f32 0.0, %v575
        %v577 = vpop.f32.mrb[0].mxu0
        %v578 = vadd.f32 0.0, %v577
        %579 = vdwg.mxu0
        %v580 = vmax.f32 %v324, %v408
        %v581 = vmax.f32 %v326, %v410
        %v582 = vmax.f32 %v492, %v576
        %v583 = vmax.f32 %v494, %v578
        %v584 = vmax.f32 %v580, %v582
        %v585 = vmax.f32 %v581, %v583
        %v586 = vld [vmem:[%s2] sm:$0x1f]
        %588 = vset.pattern.permute.xlu0 0
        %589 = vperm.xlu0 %588, %v586
        %v590 = vpop.permute.xlu0 %589
        %v592 = vadd.f32 %v584, %v590
        %v593 = vadd.f32 %v585, %v590
        %v594 = vmax.f32 %v592, 0.0
        %v595 = vmax.f32 %v593, 0.0
        %596 = vst [vmem:[%s237] sm:$0x1f] %v594
        %597 = vst [vmem:[%s237 + $0x8] sm:$0x1f] %v595
        %s598 = smul.u32 2, %s14
        %p599 = scmp.lt.s32.totalorder %s598, 3
        %s600 = scalar_select %p599, %s598, 3
        %s601 = smul.addr %s600, 8
        %s602 = scalar_lea.vmem %s3, %s601
        // Predicated region
        $region56: #{cnn_forward.4} parent=50 // pred_check
          %p603 = pneg %p100
        $region57: #{cnn_forward.4} parent=50 // pred_check_branch
          %605 = sbr.rel (%p603) target = $region59
        $region58: #{cnn_forward.4} parent=50 // pred_region
          %s606 = smul.u32 2, %s14
        $region59: #{cnn_forward.4} parent=50 // pred_fallthru
          _
      $region51: #{cnn_forward.4} parent=5 // pred_fallthru
        _
      %p607 = scmp.le.s32.totalorder 2, %s9
      // Predicated region
      $region60: #{cnn_forward.4} parent=5 // pred_check
        %p608 = pneg %p607
      $region61: #{cnn_forward.4} parent=5 // pred_check_branch
        %610 = sbr.rel (%p608) target = $region63
      $region62: #{cnn_forward.4} parent=5 // pred_region
        %s611 = ssub.s32 %s9, 2
        // Predicated region
        $region64: #{cnn_forward.4} parent=62 // pred_check
          %p612 = pneg %p106
        $region65: #{cnn_forward.4} parent=62 // pred_check_branch
          %614 = sbr.rel (%p612) target = $region67
        $region66: #{cnn_forward.4} parent=62 // pred_region
          %s615 = smul.u32 2, %s15
          %p616 = scmp.lt.s32.totalorder %s615, 3
          %s617 = scalar_select %p616, %s615, 3
          %s618 = smul.addr %s617, 8
          %s619 = scalar_lea.vmem %s3, %s618
        $region67: #{cnn_forward.4} parent=62 // pred_fallthru
          _
      $region63: #{cnn_forward.4} parent=5 // pred_fallthru
        _
    $region6: #{cnn_forward.4} parent=1 // loop_footer
      %s13 = sadd.s32 1, %s9
    $region7: #{cnn_forward.4} parent=1 // loop_footer_branch
      %8 = sbr.rel target = $region3
    $region8: #{cnn_forward.4} parent=1 // loop_exit
      _

// kernel: cnn_forward.5
$region0: #{cnn_forward.5}
  #allocation0 [shape = 'u32[]', space=smem, size = 0x4, offset = 0x4, fixed_abs, tag = 'smem constant byte address 0x4 - core index']
  #allocation1 [shape = 'u32[144,128]{1,0:T(1,128)}', space=vmem, size = 0x12000, scoped, tag = 'internal scratch']
  #allocation2 [shape = 'f32[1,1]{1,0:T(1,128)S(1)}', space=vmem, size = 0x200, scoped, tag = 'scoped memory for cnn_forward.5']
  %s0 = inlined_call_operand.vmem [shape: f32[2,1280], index: 0, kind: input, shape index: {}]
  %s1 = inlined_call_operand.vmem [shape: f32[1280,512], index: 1, kind: input, shape index: {}]
  %s2 = inlined_call_operand.vmem [shape: f32[1,512], index: 2, kind: input, shape index: {}]
  %s3 = inlined_call_operand.vmem [shape: f32[512,128], index: 3, kind: input, shape index: {}]
  %s4 = inlined_call_operand.vmem [shape: f32[1,128], index: 4, kind: input, shape index: {}]
  %s5 = inlined_call_operand.vmem [shape: f32[128,1], index: 5, kind: input, shape index: {}]
  %s6 = inlined_call_operand.<no memory space> [shape: f32[1,1], index: 6, kind: input, shape index: {}]
  %s7 = inlined_call_operand.vmem [shape: f32[2,1], index: 7, kind: output, shape index: {}]
  %s8 = sld [smem:[#allocation0]]
  $region38: #{cnn_forward.5} parent=0
    _
  %s10 = ssub.s32 1, %s8
  %s11 = scalar_select 0, %s10, %s8
  %v12 = vstv %s6
  %13 = vst [vmem:[#allocation2] sm:$0x1] %v12
  // Predicated region
  $region2: #{cnn_forward.5} parent=0 // pred_check
    _
  $region3: #{cnn_forward.5} parent=0 // pred_check_branch
    %15 = sbr.rel (0) target = $region5
  $region4: #{cnn_forward.5} parent=0 // pred_region
    _
  $region5: #{cnn_forward.5} parent=0 // pred_fallthru
    _
  // Predicated region
  $region6: #{cnn_forward.5} parent=0 // pred_check
    _
  $region7: #{cnn_forward.5} parent=0 // pred_check_branch
    %17 = sbr.rel (0) target = $region9
  $region8: #{cnn_forward.5} parent=0 // pred_region
    _
  $region9: #{cnn_forward.5} parent=0 // pred_fallthru
    _
  // Predicated region
  $region10: #{cnn_forward.5} parent=0 // pred_check
    _
  $region11: #{cnn_forward.5} parent=0 // pred_check_branch
    %19 = sbr.rel (0) target = $region13
  $region12: #{cnn_forward.5} parent=0 // pred_region
    _
  $region13: #{cnn_forward.5} parent=0 // pred_fallthru
    _
  // Predicated region
  $region14: #{cnn_forward.5} parent=0 // pred_check
    _
  $region15: #{cnn_forward.5} parent=0 // pred_check_branch
    %21 = sbr.rel (0) target = $region17
  $region16: #{cnn_forward.5} parent=0 // pred_region
    _
  $region17: #{cnn_forward.5} parent=0 // pred_fallthru
    _
  // Predicated region
  $region18: #{cnn_forward.5} parent=0 // pred_check
    _
  $region19: #{cnn_forward.5} parent=0 // pred_check_branch
    %23 = sbr.rel (0) target = $region21
  $region20: #{cnn_forward.5} parent=0 // pred_region
    _
  $region21: #{cnn_forward.5} parent=0 // pred_fallthru
    _
  // Predicated region
  $region22: #{cnn_forward.5} parent=0 // pred_check
    _
  $region23: #{cnn_forward.5} parent=0 // pred_check_branch
    %25 = sbr.rel (0) target = $region25
  $region24: #{cnn_forward.5} parent=0 // pred_region
    _
  $region25: #{cnn_forward.5} parent=0 // pred_fallthru
    _
  // Predicated region
  $region26: #{cnn_forward.5} parent=0 // pred_check
    _
  $region27: #{cnn_forward.5} parent=0 // pred_check_branch
    %27 = sbr.rel (0) target = $region29
  $region28: #{cnn_forward.5} parent=0 // pred_region
    _
  $region29: #{cnn_forward.5} parent=0 // pred_fallthru
    _
  %v28 = vld [vmem:[%s0] sm:$0xff]
  %v29 = vld [vmem:[%s0 + $0x8] sm:$0xff]
  %v30 = vld [vmem:[%s0 + $0x10] sm:$0xf]
  %v31 = vld [vmem:[%s1] sm:$0xff]
  %v32 = vld [vmem:[%s1 + $0x8] sm:$0xff]
  %v33 = vld [vmem:[%s1 + $0x10] sm:$0xff]
  %v34 = vld [vmem:[%s1 + $0x18] sm:$0xff]
  %v35 = vld [vmem:[%s1 + $0x20] sm:$0xff]
  %v36 = vld [vmem:[%s1 + $0x28] sm:$0xff]
  %v37 = vld [vmem:[%s1 + $0x30] sm:$0xff]
  %v38 = vld [vmem:[%s1 + $0x38] sm:$0xff]
  %v39 = vld [vmem:[%s1 + $0x40] sm:$0xff]
  %v40 = vld [vmem:[%s1 + $0x48] sm:$0xff]
  %v41 = vld [vmem:[%s1 + $0x50] sm:$0xff]
  %v42 = vld [vmem:[%s1 + $0x58] sm:$0xff]
  %v43 = vld [vmem:[%s1 + $0x60] sm:$0xff]
  %v44 = vld [vmem:[%s1 + $0x68] sm:$0xff]
  %v45 = vld [vmem:[%s1 + $0x70] sm:$0xff]
  %v46 = vld [vmem:[%s1 + $0x78] sm:$0xff]
  %v47 = vld [vmem:[%s1 + $0x80] sm:$0xff]
  %v48 = vld [vmem:[%s1 + $0x88] sm:$0xff]
  %v49 = vld [vmem:[%s1 + $0x90] sm:$0xff]
  %v50 = vld [vmem:[%s1 + $0x98] sm:$0xff]
  %v51 = vld [vmem:[%s1 + $0xa0] sm:$0xff]
  %v52 = vld [vmem:[%s1 + $0xa8] sm:$0xff]
  %v53 = vld [vmem:[%s1 + $0xb0] sm:$0xff]
  %v54 = vld [vmem:[%s1 + $0xb8] sm:$0xff]
  %v55 = vld [vmem:[%s1 + $0xc0] sm:$0xff]
  %v56 = vld [vmem:[%s1 + $0xc8] sm:$0xff]
  %v57 = vld [vmem:[%s1 + $0xd0] sm:$0xff]
  %v58 = vld [vmem:[%s1 + $0xd8] sm:$0xff]
  %v59 = vld [vmem:[%s1 + $0xe0] sm:$0xff]
  %v60 = vld [vmem:[%s1 + $0xe8] sm:$0xff]
  %v61 = vld [vmem:[%s1 + $0xf0] sm:$0xff]
  %v62 = vld [vmem:[%s1 + $0xf8] sm:$0xff]
  %v63 = vld [vmem:[%s1 + $0x100] sm:$0xff]
  %v64 = vld [vmem:[%s1 + $0x108] sm:$0xff]
  %v65 = vld [vmem:[%s1 + $0x110] sm:$0xff]
  %v66 = vld [vmem:[%s1 + $0x118] sm:$0xff]
  %v67 = vld [vmem:[%s1 + $0x120] sm:$0xff]
  %v68 = vld [vmem:[%s1 + $0x128] sm:$0xff]
  %v69 = vld [vmem:[%s1 + $0x130] sm:$0xff]
  %v70 = vld [vmem:[%s1 + $0x138] sm:$0xff]
  %v71 = vld [vmem:[%s1 + $0x140] sm:$0xff]
  %v72 = vld [vmem:[%s1 + $0x148] sm:$0xff]
  %v73 = vld [vmem:[%s1 + $0x150] sm:$0xff]
  %v74 = vld [vmem:[%s1 + $0x158] sm:$0xff]
  %v75 = vld [vmem:[%s1 + $0x160] sm:$0xff]
  %v76 = vld [vmem:[%s1 + $0x168] sm:$0xff]
  %v77 = vld [vmem:[%s1 + $0x170] sm:$0xff]
  %v78 = vld [vmem:[%s1 + $0x178] sm:$0xff]
  %v79 = vld [vmem:[%s1 + $0x180] sm:$0xff]
  %v80 = vld [vmem:[%s1 + $0x188] sm:$0xff]
  %v81 = vld [vmem:[%s1 + $0x190] sm:$0xff]
  %v82 = vld [vmem:[%s1 + $0x198] sm:$0xff]
  %v83 = vld [vmem:[%s1 + $0x1a0] sm:$0xff]
  %v84 = vld [vmem:[%s1 + $0x1a8] sm:$0xff]
  %v85 = vld [vmem:[%s1 + $0x1b0] sm:$0xff]
  %v86 = vld [vmem:[%s1 + $0x1b8] sm:$0xff]
  %v87 = vld [vmem:[%s1 + $0x1c0] sm:$0xff]
  %v88 = vld [vmem:[%s1 + $0x1c8] sm:$0xff]
  %v89 = vld [vmem:[%s1 + $0x1d0] sm:$0xff]
  %v90 = vld [vmem:[%s1 + $0x1d8] sm:$0xff]
  %v91 = vld [vmem:[%s1 + $0x1e0] sm:$0xff]
  %v92 = vld [vmem:[%s1 + $0x1e8] sm:$0xff]
  %v93 = vld [vmem:[%s1 + $0x1f0] sm:$0xff]
  %v94 = vld [vmem:[%s1 + $0x1f8] sm:$0xff]
  %v95 = vld [vmem:[%s1 + $0x200] sm:$0xff]
  %v96 = vld [vmem:[%s1 + $0x208] sm:$0xff]
  %v97 = vld [vmem:[%s1 + $0x210] sm:$0xff]
  %v98 = vld [vmem:[%s1 + $0x218] sm:$0xff]
  %v99 = vld [vmem:[%s1 + $0x220] sm:$0xff]
  %v100 = vld [vmem:[%s1 + $0x228] sm:$0xff]
  %v101 = vld [vmem:[%s1 + $0x230] sm:$0xff]
  %v102 = vld [vmem:[%s1 + $0x238] sm:$0xff]
  %v103 = vld [vmem:[%s1 + $0x240] sm:$0xff]
  %v104 = vld [vmem:[%s1 + $0x248] sm:$0xff]
  %v105 = vld [vmem:[%s1 + $0x250] sm:$0xff]
  %v106 = vld [vmem:[%s1 + $0x258] sm:$0xff]
  %v107 = vld [vmem:[%s1 + $0x260] sm:$0xff]
  %v108 = vld [vmem:[%s1 + $0x268] sm:$0xff]
  %v109 = vld [vmem:[%s1 + $0x270] sm:$0xff]
  %v110 = vld [vmem:[%s1 + $0x278] sm:$0xff]
  %v111 = vld [vmem:[%s1 + $0x280] sm:$0xff]
  %v112 = vld [vmem:[%s1 + $0x288] sm:$0xff]
  %v113 = vld [vmem:[%s1 + $0x290] sm:$0xff]
  %v114 = vld [vmem:[%s1 + $0x298] sm:$0xff]
  %v115 = vld [vmem:[%s1 + $0x2a0] sm:$0xff]
  %v116 = vld [vmem:[%s1 + $0x2a8] sm:$0xff]
  %v117 = vld [vmem:[%s1 + $0x2b0] sm:$0xff]
  %v118 = vld [vmem:[%s1 + $0x2b8] sm:$0xff]
  %v119 = vld [vmem:[%s1 + $0x2c0] sm:$0xff]
  %v120 = vld [vmem:[%s1 + $0x2c8] sm:$0xff]
  %v121 = vld [vmem:[%s1 + $0x2d0] sm:$0xff]
  %v122 = vld [vmem:[%s1 + $0x2d8] sm:$0xff]
  %v123 = vld [vmem:[%s1 + $0x2e0] sm:$0xff]
  %v124 = vld [vmem:[%s1 + $0x2e8] sm:$0xff]
  %v125 = vld [vmem:[%s1 + $0x2f0] sm:$0xff]
  %v126 = vld [vmem:[%s1 + $0x2f8] sm:$0xff]
  %v127 = vld [vmem:[%s1 + $0x300] sm:$0xff]
  %v128 = vld [vmem:[%s1 + $0x308] sm:$0xff]
  %v129 = vld [vmem:[%s1 + $0x310] sm:$0xff]
  %v130 = vld [vmem:[%s1 + $0x318] sm:$0xff]
  %v131 = vld [vmem:[%s1 + $0x320] sm:$0xff]
  %v132 = vld [vmem:[%s1 + $0x328] sm:$0xff]
  %v133 = vld [vmem:[%s1 + $0x330] sm:$0xff]
  %v134 = vld [vmem:[%s1 + $0x338] sm:$0xff]
  %v135 = vld [vmem:[%s1 + $0x340] sm:$0xff]
  %v136 = vld [vmem:[%s1 + $0x348] sm:$0xff]
  %v137 = vld [vmem:[%s1 + $0x350] sm:$0xff]
  %v138 = vld [vmem:[%s1 + $0x358] sm:$0xff]
  %v139 = vld [vmem:[%s1 + $0x360] sm:$0xff]
  %v140 = vld [vmem:[%s1 + $0x368] sm:$0xff]
  %v141 = vld [vmem:[%s1 + $0x370] sm:$0xff]
  %v142 = vld [vmem:[%s1 + $0x378] sm:$0xff]
  %v143 = vld [vmem:[%s1 + $0x380] sm:$0xff]
  %v144 = vld [vmem:[%s1 + $0x388] sm:$0xff]
  %v145 = vld [vmem:[%s1 + $0x390] sm:$0xff]
  %v146 = vld [vmem:[%s1 + $0x398] sm:$0xff]
  %v147 = vld [vmem:[%s1 + $0x3a0] sm:$0xff]
  %v148 = vld [vmem:[%s1 + $0x3a8] sm:$0xff]
  %v149 = vld [vmem:[%s1 + $0x3b0] sm:$0xff]
  %v150 = vld [vmem:[%s1 + $0x3b8] sm:$0xff]
  %v151 = vld [vmem:[%s1 + $0x3c0] sm:$0xff]
  %v152 = vld [vmem:[%s1 + $0x3c8] sm:$0xff]
  %v153 = vld [vmem:[%s1 + $0x3d0] sm:$0xff]
  %v154 = vld [vmem:[%s1 + $0x3d8] sm:$0xff]
  %v155 = vld [vmem:[%s1 + $0x3e0] sm:$0xff]
  %v156 = vld [vmem:[%s1 + $0x3e8] sm:$0xff]
  %v157 = vld [vmem:[%s1 + $0x3f0] sm:$0xff]
  %v158 = vld [vmem:[%s1 + $0x3f8] sm:$0xff]
  %v159 = vld [vmem:[%s1 + $0x400] sm:$0xff]
  %v160 = vld [vmem:[%s1 + $0x408] sm:$0xff]
  %v161 = vld [vmem:[%s1 + $0x410] sm:$0xff]
  %v162 = vld [vmem:[%s1 + $0x418] sm:$0xff]
  %v163 = vld [vmem:[%s1 + $0x420] sm:$0xff]
  %v164 = vld [vmem:[%s1 + $0x428] sm:$0xff]
  %v165 = vld [vmem:[%s1 + $0x430] sm:$0xff]
  %v166 = vld [vmem:[%s1 + $0x438] sm:$0xff]
  %v167 = vld [vmem:[%s1 + $0x440] sm:$0xff]
  %v168 = vld [vmem:[%s1 + $0x448] sm:$0xff]
  %v169 = vld [vmem:[%s1 + $0x450] sm:$0xff]
  %v170 = vld [vmem:[%s1 + $0x458] sm:$0xff]
  %v171 = vld [vmem:[%s1 + $0x460] sm:$0xff]
  %v172 = vld [vmem:[%s1 + $0x468] sm:$0xff]
  %v173 = vld [vmem:[%s1 + $0x470] sm:$0xff]
  %v174 = vld [vmem:[%s1 + $0x478] sm:$0xff]
  %v175 = vld [vmem:[%s1 + $0x480] sm:$0xff]
  %v176 = vld [vmem:[%s1 + $0x488] sm:$0xff]
  %v177 = vld [vmem:[%s1 + $0x490] sm:$0xff]
  %v178 = vld [vmem:[%s1 + $0x498] sm:$0xff]
  %v179 = vld [vmem:[%s1 + $0x4a0] sm:$0xff]
  %v180 = vld [vmem:[%s1 + $0x4a8] sm:$0xff]
  %v181 = vld [vmem:[%s1 + $0x4b0] sm:$0xff]
  %v182 = vld [vmem:[%s1 + $0x4b8] sm:$0xff]
  %v183 = vld [vmem:[%s1 + $0x4c0] sm:$0xff]
  %v184 = vld [vmem:[%s1 + $0x4c8] sm:$0xff]
  %v185 = vld [vmem:[%s1 + $0x4d0] sm:$0xff]
  %v186 = vld [vmem:[%s1 + $0x4d8] sm:$0xff]
  %v187 = vld [vmem:[%s1 + $0x4e0] sm:$0xff]
  %v188 = vld [vmem:[%s1 + $0x4e8] sm:$0xff]
  %v189 = vld [vmem:[%s1 + $0x4f0] sm:$0xff]
  %v190 = vld [vmem:[%s1 + $0x4f8] sm:$0xff]
  %v191 = vld [vmem:[%s1 + $0x500] sm:$0xff]
  %v192 = vld [vmem:[%s1 + $0x508] sm:$0xff]
  %v193 = vld [vmem:[%s1 + $0x510] sm:$0xff]
  %v194 = vld [vmem:[%s1 + $0x518] sm:$0xff]
  %v195 = vld [vmem:[%s1 + $0x520] sm:$0xff]
  %v196 = vld [vmem:[%s1 + $0x528] sm:$0xff]
  %v197 = vld [vmem:[%s1 + $0x530] sm:$0xff]
  %v198 = vld [vmem:[%s1 + $0x538] sm:$0xff]
  %v199 = vld [vmem:[%s1 + $0x540] sm:$0xff]
  %v200 = vld [vmem:[%s1 + $0x548] sm:$0xff]
  %v201 = vld [vmem:[%s1 + $0x550] sm:$0xff]
  %v202 = vld [vmem:[%s1 + $0x558] sm:$0xff]
  %v203 = vld [vmem:[%s1 + $0x560] sm:$0xff]
  %v204 = vld [vmem:[%s1 + $0x568] sm:$0xff]
  %v205 = vld [vmem:[%s1 + $0x570] sm:$0xff]
  %v206 = vld [vmem:[%s1 + $0x578] sm:$0xff]
  %v207 = vld [vmem:[%s1 + $0x580] sm:$0xff]
  %v208 = vld [vmem:[%s1 + $0x588] sm:$0xff]
  %v209 = vld [vmem:[%s1 + $0x590] sm:$0xff]
  %v210 = vld [vmem:[%s1 + $0x598] sm:$0xff]
  %v211 = vld [vmem:[%s1 + $0x5a0] sm:$0xff]
  %v212 = vld [vmem:[%s1 + $0x5a8] sm:$0xff]
  %v213 = vld [vmem:[%s1 + $0x5b0] sm:$0xff]
  %v214 = vld [vmem:[%s1 + $0x5b8] sm:$0xff]
  %v215 = vld [vmem:[%s1 + $0x5c0] sm:$0xff]
  %v216 = vld [vmem:[%s1 + $0x5c8] sm:$0xff]
  %v217 = vld [vmem:[%s1 + $0x5d0] sm:$0xff]
  %v218 = vld [vmem:[%s1 + $0x5d8] sm:$0xff]
  %v219 = vld [vmem:[%s1 + $0x5e0] sm:$0xff]
  %v220 = vld [vmem:[%s1 + $0x5e8] sm:$0xff]
  %v221 = vld [vmem:[%s1 + $0x5f0] sm:$0xff]
  %v222 = vld [vmem:[%s1 + $0x5f8] sm:$0xff]
  %v223 = vld [vmem:[%s1 + $0x600] sm:$0xff]
  %v224 = vld [vmem:[%s1 + $0x608] sm:$0xff]
  %v225 = vld [vmem:[%s1 + $0x610] sm:$0xff]
  %v226 = vld [vmem:[%s1 + $0x618] sm:$0xff]
  %v227 = vld [vmem:[%s1 + $0x620] sm:$0xff]
  %v228 = vld [vmem:[%s1 + $0x628] sm:$0xff]
  %v229 = vld [vmem:[%s1 + $0x630] sm:$0xff]
  %v230 = vld [vmem:[%s1 + $0x638] sm:$0xff]
  %v231 = vld [vmem:[%s1 + $0x640] sm:$0xff]
  %v232 = vld [vmem:[%s1 + $0x648] sm:$0xff]
  %v233 = vld [vmem:[%s1 + $0x650] sm:$0xff]
  %v234 = vld [vmem:[%s1 + $0x658] sm:$0xff]
  %v235 = vld [vmem:[%s1 + $0x660] sm:$0xff]
  %v236 = vld [vmem:[%s1 + $0x668] sm:$0xff]
  %v237 = vld [vmem:[%s1 + $0x670] sm:$0xff]
  %v238 = vld [vmem:[%s1 + $0x678] sm:$0xff]
  %v239 = vld [vmem:[%s1 + $0x680] sm:$0xff]
  %v240 = vld [vmem:[%s1 + $0x688] sm:$0xff]
  %v241 = vld [vmem:[%s1 + $0x690] sm:$0xff]
  %v242 = vld [vmem:[%s1 + $0x698] sm:$0xff]
  %v243 = vld [vmem:[%s1 + $0x6a0] sm:$0xff]
  %v244 = vld [vmem:[%s1 + $0x6a8] sm:$0xff]
  %v245 = vld [vmem:[%s1 + $0x6b0] sm:$0xff]
  %v246 = vld [vmem:[%s1 + $0x6b8] sm:$0xff]
  %v247 = vld [vmem:[%s1 + $0x6c0] sm:$0xff]
  %v248 = vld [vmem:[%s1 + $0x6c8] sm:$0xff]
  %v249 = vld [vmem:[%s1 + $0x6d0] sm:$0xff]
  %v250 = vld [vmem:[%s1 + $0x6d8] sm:$0xff]
  %v251 = vld [vmem:[%s1 + $0x6e0] sm:$0xff]
  %v252 = vld [vmem:[%s1 + $0x6e8] sm:$0xff]
  %v253 = vld [vmem:[%s1 + $0x6f0] sm:$0xff]
  %v254 = vld [vmem:[%s1 + $0x6f8] sm:$0xff]
  %v255 = vld [vmem:[%s1 + $0x700] sm:$0xff]
  %v256 = vld [vmem:[%s1 + $0x708] sm:$0xff]
  %v257 = vld [vmem:[%s1 + $0x710] sm:$0xff]
  %v258 = vld [vmem:[%s1 + $0x718] sm:$0xff]
  %v259 = vld [vmem:[%s1 + $0x720] sm:$0xff]
  %v260 = vld [vmem:[%s1 + $0x728] sm:$0xff]
  %v261 = vld [vmem:[%s1 + $0x730] sm:$0xff]
  %v262 = vld [vmem:[%s1 + $0x738] sm:$0xff]
  %v263 = vld [vmem:[%s1 + $0x740] sm:$0xff]
  %v264 = vld [vmem:[%s1 + $0x748] sm:$0xff]
  %v265 = vld [vmem:[%s1 + $0x750] sm:$0xff]
  %v266 = vld [vmem:[%s1 + $0x758] sm:$0xff]
  %v267 = vld [vmem:[%s1 + $0x760] sm:$0xff]
  %v268 = vld [vmem:[%s1 + $0x768] sm:$0xff]
  %v269 = vld [vmem:[%s1 + $0x770] sm:$0xff]
  %v270 = vld [vmem:[%s1 + $0x778] sm:$0xff]
  %v271 = vld [vmem:[%s1 + $0x780] sm:$0xff]
  %v272 = vld [vmem:[%s1 + $0x788] sm:$0xff]
  %v273 = vld [vmem:[%s1 + $0x790] sm:$0xff]
  %v274 = vld [vmem:[%s1 + $0x798] sm:$0xff]
  %v275 = vld [vmem:[%s1 + $0x7a0] sm:$0xff]
  %v276 = vld [vmem:[%s1 + $0x7a8] sm:$0xff]
  %v277 = vld [vmem:[%s1 + $0x7b0] sm:$0xff]
  %v278 = vld [vmem:[%s1 + $0x7b8] sm:$0xff]
  %v279 = vld [vmem:[%s1 + $0x7c0] sm:$0xff]
  %v280 = vld [vmem:[%s1 + $0x7c8] sm:$0xff]
  %v281 = vld [vmem:[%s1 + $0x7d0] sm:$0xff]
  %v282 = vld [vmem:[%s1 + $0x7d8] sm:$0xff]
  %v283 = vld [vmem:[%s1 + $0x7e0] sm:$0xff]
  %v284 = vld [vmem:[%s1 + $0x7e8] sm:$0xff]
  %v285 = vld [vmem:[%s1 + $0x7f0] sm:$0xff]
  %v286 = vld [vmem:[%s1 + $0x7f8] sm:$0xff]
  %v287 = vld [vmem:[%s1 + $0x800] sm:$0xff]
  %v288 = vld [vmem:[%s1 + $0x808] sm:$0xff]
  %v289 = vld [vmem:[%s1 + $0x810] sm:$0xff]
  %v290 = vld [vmem:[%s1 + $0x818] sm:$0xff]
  %v291 = vld [vmem:[%s1 + $0x820] sm:$0xff]
  %v292 = vld [vmem:[%s1 + $0x828] sm:$0xff]
  %v293 = vld [vmem:[%s1 + $0x830] sm:$0xff]
  %v294 = vld [vmem:[%s1 + $0x838] sm:$0xff]
  %v295 = vld [vmem:[%s1 + $0x840] sm:$0xff]
  %v296 = vld [vmem:[%s1 + $0x848] sm:$0xff]
  %v297 = vld [vmem:[%s1 + $0x850] sm:$0xff]
  %v298 = vld [vmem:[%s1 + $0x858] sm:$0xff]
  %v299 = vld [vmem:[%s1 + $0x860] sm:$0xff]
  %v300 = vld [vmem:[%s1 + $0x868] sm:$0xff]
  %v301 = vld [vmem:[%s1 + $0x870] sm:$0xff]
  %v302 = vld [vmem:[%s1 + $0x878] sm:$0xff]
  %v303 = vld [vmem:[%s1 + $0x880] sm:$0xff]
  %v304 = vld [vmem:[%s1 + $0x888] sm:$0xff]
  %v305 = vld [vmem:[%s1 + $0x890] sm:$0xff]
  %v306 = vld [vmem:[%s1 + $0x898] sm:$0xff]
  %v307 = vld [vmem:[%s1 + $0x8a0] sm:$0xff]
  %v308 = vld [vmem:[%s1 + $0x8a8] sm:$0xff]
  %v309 = vld [vmem:[%s1 + $0x8b0] sm:$0xff]
  %v310 = vld [vmem:[%s1 + $0x8b8] sm:$0xff]
  %v311 = vld [vmem:[%s1 + $0x8c0] sm:$0xff]
  %v312 = vld [vmem:[%s1 + $0x8c8] sm:$0xff]
  %v313 = vld [vmem:[%s1 + $0x8d0] sm:$0xff]
  %v314 = vld [vmem:[%s1 + $0x8d8] sm:$0xff]
  %v315 = vld [vmem:[%s1 + $0x8e0] sm:$0xff]
  %v316 = vld [vmem:[%s1 + $0x8e8] sm:$0xff]
  %v317 = vld [vmem:[%s1 + $0x8f0] sm:$0xff]
  %v318 = vld [vmem:[%s1 + $0x8f8] sm:$0xff]
  %v319 = vld [vmem:[%s1 + $0x900] sm:$0xff]
  %v320 = vld [vmem:[%s1 + $0x908] sm:$0xff]
  %v321 = vld [vmem:[%s1 + $0x910] sm:$0xff]
  %v322 = vld [vmem:[%s1 + $0x918] sm:$0xff]
  %v323 = vld [vmem:[%s1 + $0x920] sm:$0xff]
  %v324 = vld [vmem:[%s1 + $0x928] sm:$0xff]
  %v325 = vld [vmem:[%s1 + $0x930] sm:$0xff]
  %v326 = vld [vmem:[%s1 + $0x938] sm:$0xff]
  %v327 = vld [vmem:[%s1 + $0x940] sm:$0xff]
  %v328 = vld [vmem:[%s1 + $0x948] sm:$0xff]
  %v329 = vld [vmem:[%s1 + $0x950] sm:$0xff]
  %v330 = vld [vmem:[%s1 + $0x958] sm:$0xff]
  %v331 = vld [vmem:[%s1 + $0x960] sm:$0xff]
  %v332 = vld [vmem:[%s1 + $0x968] sm:$0xff]
  %v333 = vld [vmem:[%s1 + $0x970] sm:$0xff]
  %v334 = vld [vmem:[%s1 + $0x978] sm:$0xff]
  %v335 = vld [vmem:[%s1 + $0x980] sm:$0xff]
  %v336 = vld [vmem:[%s1 + $0x988] sm:$0xff]
  %v337 = vld [vmem:[%s1 + $0x990] sm:$0xff]
  %v338 = vld [vmem:[%s1 + $0x998] sm:$0xff]
  %v339 = vld [vmem:[%s1 + $0x9a0] sm:$0xff]
  %v340 = vld [vmem:[%s1 + $0x9a8] sm:$0xff]
  %v341 = vld [vmem:[%s1 + $0x9b0] sm:$0xff]
  %v342 = vld [vmem:[%s1 + $0x9b8] sm:$0xff]
  %v343 = vld [vmem:[%s1 + $0x9c0] sm:$0xff]
  %v344 = vld [vmem:[%s1 + $0x9c8] sm:$0xff]
  %v345 = vld [vmem:[%s1 + $0x9d0] sm:$0xff]
  %v346 = vld [vmem:[%s1 + $0x9d8] sm:$0xff]
  %v347 = vld [vmem:[%s1 + $0x9e0] sm:$0xff]
  %v348 = vld [vmem:[%s1 + $0x9e8] sm:$0xff]
  %v349 = vld [vmem:[%s1 + $0x9f0] sm:$0xff]
  %v350 = vld [vmem:[%s1 + $0x9f8] sm:$0xff]
  %v351 = vld [vmem:[%s1 + $0xa00] sm:$0xff]
  %v352 = vld [vmem:[%s1 + $0xa08] sm:$0xff]
  %v353 = vld [vmem:[%s1 + $0xa10] sm:$0xff]
  %v354 = vld [vmem:[%s1 + $0xa18] sm:$0xff]
  %v355 = vld [vmem:[%s1 + $0xa20] sm:$0xff]
  %v356 = vld [vmem:[%s1 + $0xa28] sm:$0xff]
  %v357 = vld [vmem:[%s1 + $0xa30] sm:$0xff]
  %v358 = vld [vmem:[%s1 + $0xa38] sm:$0xff]
  %v359 = vld [vmem:[%s1 + $0xa40] sm:$0xff]
  %v360 = vld [vmem:[%s1 + $0xa48] sm:$0xff]
  %v361 = vld [vmem:[%s1 + $0xa50] sm:$0xff]
  %v362 = vld [vmem:[%s1 + $0xa58] sm:$0xff]
  %v363 = vld [vmem:[%s1 + $0xa60] sm:$0xff]
  %v364 = vld [vmem:[%s1 + $0xa68] sm:$0xff]
  %v365 = vld [vmem:[%s1 + $0xa70] sm:$0xff]
  %v366 = vld [vmem:[%s1 + $0xa78] sm:$0xff]
  %v367 = vld [vmem:[%s1 + $0xa80] sm:$0xff]
  %v368 = vld [vmem:[%s1 + $0xa88] sm:$0xff]
  %v369 = vld [vmem:[%s1 + $0xa90] sm:$0xff]
  %v370 = vld [vmem:[%s1 + $0xa98] sm:$0xff]
  %v371 = vld [vmem:[%s1 + $0xaa0] sm:$0xff]
  %v372 = vld [vmem:[%s1 + $0xaa8] sm:$0xff]
  %v373 = vld [vmem:[%s1 + $0xab0] sm:$0xff]
  %v374 = vld [vmem:[%s1 + $0xab8] sm:$0xff]
  %v375 = vld [vmem:[%s1 + $0xac0] sm:$0xff]
  %v376 = vld [vmem:[%s1 + $0xac8] sm:$0xff]
  %v377 = vld [vmem:[%s1 + $0xad0] sm:$0xff]
  %v378 = vld [vmem:[%s1 + $0xad8] sm:$0xff]
  %v379 = vld [vmem:[%s1 + $0xae0] sm:$0xff]
  %v380 = vld [vmem:[%s1 + $0xae8] sm:$0xff]
  %v381 = vld [vmem:[%s1 + $0xaf0] sm:$0xff]
  %v382 = vld [vmem:[%s1 + $0xaf8] sm:$0xff]
  %v383 = vld [vmem:[%s1 + $0xb00] sm:$0xff]
  %v384 = vld [vmem:[%s1 + $0xb08] sm:$0xff]
  %v385 = vld [vmem:[%s1 + $0xb10] sm:$0xff]
  %v386 = vld [vmem:[%s1 + $0xb18] sm:$0xff]
  %v387 = vld [vmem:[%s1 + $0xb20] sm:$0xff]
  %v388 = vld [vmem:[%s1 + $0xb28] sm:$0xff]
  %v389 = vld [vmem:[%s1 + $0xb30] sm:$0xff]
  %v390 = vld [vmem:[%s1 + $0xb38] sm:$0xff]
  %v391 = vld [vmem:[%s1 + $0xb40] sm:$0xff]
  %v392 = vld [vmem:[%s1 + $0xb48] sm:$0xff]
  %v393 = vld [vmem:[%s1 + $0xb50] sm:$0xff]
  %v394 = vld [vmem:[%s1 + $0xb58] sm:$0xff]
  %v395 = vld [vmem:[%s1 + $0xb60] sm:$0xff]
  %v396 = vld [vmem:[%s1 + $0xb68] sm:$0xff]
  %v397 = vld [vmem:[%s1 + $0xb70] sm:$0xff]
  %v398 = vld [vmem:[%s1 + $0xb78] sm:$0xff]
  %v399 = vld [vmem:[%s1 + $0xb80] sm:$0xff]
  %v400 = vld [vmem:[%s1 + $0xb88] sm:$0xff]
  %v401 = vld [vmem:[%s1 + $0xb90] sm:$0xff]
  %v402 = vld [vmem:[%s1 + $0xb98] sm:$0xff]
  %v403 = vld [vmem:[%s1 + $0xba0] sm:$0xff]
  %v404 = vld [vmem:[%s1 + $0xba8] sm:$0xff]
  %v405 = vld [vmem:[%s1 + $0xbb0] sm:$0xff]
  %v406 = vld [vmem:[%s1 + $0xbb8] sm:$0xff]
  %v407 = vld [vmem:[%s1 + $0xbc0] sm:$0xff]
  %v408 = vld [vmem:[%s1 + $0xbc8] sm:$0xff]
  %v409 = vld [vmem:[%s1 + $0xbd0] sm:$0xff]
  %v410 = vld [vmem:[%s1 + $0xbd8] sm:$0xff]
  %v411 = vld [vmem:[%s1 + $0xbe0] sm:$0xff]
  %v412 = vld [vmem:[%s1 + $0xbe8] sm:$0xff]
  %v413 = vld [vmem:[%s1 + $0xbf0] sm:$0xff]
  %v414 = vld [vmem:[%s1 + $0xbf8] sm:$0xff]
  %v415 = vld [vmem:[%s1 + $0xc00] sm:$0xff]
  %v416 = vld [vmem:[%s1 + $0xc08] sm:$0xff]
  %v417 = vld [vmem:[%s1 + $0xc10] sm:$0xff]
  %v418 = vld [vmem:[%s1 + $0xc18] sm:$0xff]
  %v419 = vld [vmem:[%s1 + $0xc20] sm:$0xff]
  %v420 = vld [vmem:[%s1 + $0xc28] sm:$0xff]
  %v421 = vld [vmem:[%s1 + $0xc30] sm:$0xff]
  %v422 = vld [vmem:[%s1 + $0xc38] sm:$0xff]
  %v423 = vld [vmem:[%s1 + $0xc40] sm:$0xff]
  %v424 = vld [vmem:[%s1 + $0xc48] sm:$0xff]
  %v425 = vld [vmem:[%s1 + $0xc50] sm:$0xff]
  %v426 = vld [vmem:[%s1 + $0xc58] sm:$0xff]
  %v427 = vld [vmem:[%s1 + $0xc60] sm:$0xff]
  %v428 = vld [vmem:[%s1 + $0xc68] sm:$0xff]
  %v429 = vld [vmem:[%s1 + $0xc70] sm:$0xff]
  %v430 = vld [vmem:[%s1 + $0xc78] sm:$0xff]
  %v431 = vld [vmem:[%s1 + $0xc80] sm:$0xff]
  %v432 = vld [vmem:[%s1 + $0xc88] sm:$0xff]
  %v433 = vld [vmem:[%s1 + $0xc90] sm:$0xff]
  %v434 = vld [vmem:[%s1 + $0xc98] sm:$0xff]
  %v435 = vld [vmem:[%s1 + $0xca0] sm:$0xff]
  %v436 = vld [vmem:[%s1 + $0xca8] sm:$0xff]
  %v437 = vld [vmem:[%s1 + $0xcb0] sm:$0xff]
  %v438 = vld [vmem:[%s1 + $0xcb8] sm:$0xff]
  %v439 = vld [vmem:[%s1 + $0xcc0] sm:$0xff]
  %v440 = vld [vmem:[%s1 + $0xcc8] sm:$0xff]
  %v441 = vld [vmem:[%s1 + $0xcd0] sm:$0xff]
  %v442 = vld [vmem:[%s1 + $0xcd8] sm:$0xff]
  %v443 = vld [vmem:[%s1 + $0xce0] sm:$0xff]
  %v444 = vld [vmem:[%s1 + $0xce8] sm:$0xff]
  %v445 = vld [vmem:[%s1 + $0xcf0] sm:$0xff]
  %v446 = vld [vmem:[%s1 + $0xcf8] sm:$0xff]
  %v447 = vld [vmem:[%s1 + $0xd00] sm:$0xff]
  %v448 = vld [vmem:[%s1 + $0xd08] sm:$0xff]
  %v449 = vld [vmem:[%s1 + $0xd10] sm:$0xff]
  %v450 = vld [vmem:[%s1 + $0xd18] sm:$0xff]
  %v451 = vld [vmem:[%s1 + $0xd20] sm:$0xff]
  %v452 = vld [vmem:[%s1 + $0xd28] sm:$0xff]
  %v453 = vld [vmem:[%s1 + $0xd30] sm:$0xff]
  %v454 = vld [vmem:[%s1 + $0xd38] sm:$0xff]
  %v455 = vld [vmem:[%s1 + $0xd40] sm:$0xff]
  %v456 = vld [vmem:[%s1 + $0xd48] sm:$0xff]
  %v457 = vld [vmem:[%s1 + $0xd50] sm:$0xff]
  %v458 = vld [vmem:[%s1 + $0xd58] sm:$0xff]
  %v459 = vld [vmem:[%s1 + $0xd60] sm:$0xff]
  %v460 = vld [vmem:[%s1 + $0xd68] sm:$0xff]
  %v461 = vld [vmem:[%s1 + $0xd70] sm:$0xff]
  %v462 = vld [vmem:[%s1 + $0xd78] sm:$0xff]
  %v463 = vld [vmem:[%s1 + $0xd80] sm:$0xff]
  %v464 = vld [vmem:[%s1 + $0xd88] sm:$0xff]
  %v465 = vld [vmem:[%s1 + $0xd90] sm:$0xff]
  %v466 = vld [vmem:[%s1 + $0xd98] sm:$0xff]
  %v467 = vld [vmem:[%s1 + $0xda0] sm:$0xff]
  %v468 = vld [vmem:[%s1 + $0xda8] sm:$0xff]
  %v469 = vld [vmem:[%s1 + $0xdb0] sm:$0xff]
  %v470 = vld [vmem:[%s1 + $0xdb8] sm:$0xff]
  %v471 = vld [vmem:[%s1 + $0xdc0] sm:$0xff]
  %v472 = vld [vmem:[%s1 + $0xdc8] sm:$0xff]
  %v473 = vld [vmem:[%s1 + $0xdd0] sm:$0xff]
  %v474 = vld [vmem:[%s1 + $0xdd8] sm:$0xff]
  %v475 = vld [vmem:[%s1 + $0xde0] sm:$0xff]
  %v476 = vld [vmem:[%s1 + $0xde8] sm:$0xff]
  %v477 = vld [vmem:[%s1 + $0xdf0] sm:$0xff]
  %v478 = vld [vmem:[%s1 + $0xdf8] sm:$0xff]
  %v479 = vld [vmem:[%s1 + $0xe00] sm:$0xff]
  %v480 = vld [vmem:[%s1 + $0xe08] sm:$0xff]
  %v481 = vld [vmem:[%s1 + $0xe10] sm:$0xff]
  %v482 = vld [vmem:[%s1 + $0xe18] sm:$0xff]
  %v483 = vld [vmem:[%s1 + $0xe20] sm:$0xff]
  %v484 = vld [vmem:[%s1 + $0xe28] sm:$0xff]
  %v485 = vld [vmem:[%s1 + $0xe30] sm:$0xff]
  %v486 = vld [vmem:[%s1 + $0xe38] sm:$0xff]
  %v487 = vld [vmem:[%s1 + $0xe40] sm:$0xff]
  %v488 = vld [vmem:[%s1 + $0xe48] sm:$0xff]
  %v489 = vld [vmem:[%s1 + $0xe50] sm:$0xff]
  %v490 = vld [vmem:[%s1 + $0xe58] sm:$0xff]
  %v491 = vld [vmem:[%s1 + $0xe60] sm:$0xff]
  %v492 = vld [vmem:[%s1 + $0xe68] sm:$0xff]
  %v493 = vld [vmem:[%s1 + $0xe70] sm:$0xff]
  %v494 = vld [vmem:[%s1 + $0xe78] sm:$0xff]
  %v495 = vld [vmem:[%s1 + $0xe80] sm:$0xff]
  %v496 = vld [vmem:[%s1 + $0xe88] sm:$0xff]
  %v497 = vld [vmem:[%s1 + $0xe90] sm:$0xff]
  %v498 = vld [vmem:[%s1 + $0xe98] sm:$0xff]
  %v499 = vld [vmem:[%s1 + $0xea0] sm:$0xff]
  %v500 = vld [vmem:[%s1 + $0xea8] sm:$0xff]
  %v501 = vld [vmem:[%s1 + $0xeb0] sm:$0xff]
  %v502 = vld [vmem:[%s1 + $0xeb8] sm:$0xff]
  %v503 = vld [vmem:[%s1 + $0xec0] sm:$0xff]
  %v504 = vld [vmem:[%s1 + $0xec8] sm:$0xff]
  %v505 = vld [vmem:[%s1 + $0xed0] sm:$0xff]
  %v506 = vld [vmem:[%s1 + $0xed8] sm:$0xff]
  %v507 = vld [vmem:[%s1 + $0xee0] sm:$0xff]
  %v508 = vld [vmem:[%s1 + $0xee8] sm:$0xff]
  %v509 = vld [vmem:[%s1 + $0xef0] sm:$0xff]
  %v510 = vld [vmem:[%s1 + $0xef8] sm:$0xff]
  %v511 = vld [vmem:[%s1 + $0xf00] sm:$0xff]
  %v512 = vld [vmem:[%s1 + $0xf08] sm:$0xff]
  %v513 = vld [vmem:[%s1 + $0xf10] sm:$0xff]
  %v514 = vld [vmem:[%s1 + $0xf18] sm:$0xff]
  %v515 = vld [vmem:[%s1 + $0xf20] sm:$0xff]
  %v516 = vld [vmem:[%s1 + $0xf28] sm:$0xff]
  %v517 = vld [vmem:[%s1 + $0xf30] sm:$0xff]
  %v518 = vld [vmem:[%s1 + $0xf38] sm:$0xff]
  %v519 = vld [vmem:[%s1 + $0xf40] sm:$0xff]
  %v520 = vld [vmem:[%s1 + $0xf48] sm:$0xff]
  %v521 = vld [vmem:[%s1 + $0xf50] sm:$0xff]
  %v522 = vld [vmem:[%s1 + $0xf58] sm:$0xff]
  %v523 = vld [vmem:[%s1 + $0xf60] sm:$0xff]
  %v524 = vld [vmem:[%s1 + $0xf68] sm:$0xff]
  %v525 = vld [vmem:[%s1 + $0xf70] sm:$0xff]
  %v526 = vld [vmem:[%s1 + $0xf78] sm:$0xff]
  %v527 = vld [vmem:[%s1 + $0xf80] sm:$0xff]
  %v528 = vld [vmem:[%s1 + $0xf88] sm:$0xff]
  %v529 = vld [vmem:[%s1 + $0xf90] sm:$0xff]
  %v530 = vld [vmem:[%s1 + $0xf98] sm:$0xff]
  %v531 = vld [vmem:[%s1 + $0xfa0] sm:$0xff]
  %v532 = vld [vmem:[%s1 + $0xfa8] sm:$0xff]
  %v533 = vld [vmem:[%s1 + $0xfb0] sm:$0xff]
  %v534 = vld [vmem:[%s1 + $0xfb8] sm:$0xff]
  %v535 = vld [vmem:[%s1 + $0xfc0] sm:$0xff]
  %v536 = vld [vmem:[%s1 + $0xfc8] sm:$0xff]
  %v537 = vld [vmem:[%s1 + $0xfd0] sm:$0xff]
  %v538 = vld [vmem:[%s1 + $0xfd8] sm:$0xff]
  %v539 = vld [vmem:[%s1 + $0xfe0] sm:$0xff]
  %v540 = vld [vmem:[%s1 + $0xfe8] sm:$0xff]
  %v541 = vld [vmem:[%s1 + $0xff0] sm:$0xff]
  %v542 = vld [vmem:[%s1 + $0xff8] sm:$0xff]
  %v543 = vld [vmem:[%s1 + $0x1000] sm:$0xff]
  %v544 = vld [vmem:[%s1 + $0x1008] sm:$0xff]
  %v545 = vld [vmem:[%s1 + $0x1010] sm:$0xff]
  %v546 = vld [vmem:[%s1 + $0x1018] sm:$0xff]
  %v547 = vld [vmem:[%s1 + $0x1020] sm:$0xff]
  %v548 = vld [vmem:[%s1 + $0x1028] sm:$0xff]
  %v549 = vld [vmem:[%s1 + $0x1030] sm:$0xff]
  %v550 = vld [vmem:[%s1 + $0x1038] sm:$0xff]
  %v551 = vld [vmem:[%s1 + $0x1040] sm:$0xff]
  %v552 = vld [vmem:[%s1 + $0x1048] sm:$0xff]
  %v553 = vld [vmem:[%s1 + $0x1050] sm:$0xff]
  %v554 = vld [vmem:[%s1 + $0x1058] sm:$0xff]
  %v555 = vld [vmem:[%s1 + $0x1060] sm:$0xff]
  %v556 = vld [vmem:[%s1 + $0x1068] sm:$0xff]
  %v557 = vld [vmem:[%s1 + $0x1070] sm:$0xff]
  %v558 = vld [vmem:[%s1 + $0x1078] sm:$0xff]
  %v559 = vld [vmem:[%s1 + $0x1080] sm:$0xff]
  %v560 = vld [vmem:[%s1 + $0x1088] sm:$0xff]
  %v561 = vld [vmem:[%s1 + $0x1090] sm:$0xff]
  %v562 = vld [vmem:[%s1 + $0x1098] sm:$0xff]
  %v563 = vld [vmem:[%s1 + $0x10a0] sm:$0xff]
  %v564 = vld [vmem:[%s1 + $0x10a8] sm:$0xff]
  %v565 = vld [vmem:[%s1 + $0x10b0] sm:$0xff]
  %v566 = vld [vmem:[%s1 + $0x10b8] sm:$0xff]
  %v567 = vld [vmem:[%s1 + $0x10c0] sm:$0xff]
  %v568 = vld [vmem:[%s1 + $0x10c8] sm:$0xff]
  %v569 = vld [vmem:[%s1 + $0x10d0] sm:$0xff]
  %v570 = vld [vmem:[%s1 + $0x10d8] sm:$0xff]
  %v571 = vld [vmem:[%s1 + $0x10e0] sm:$0xff]
  %v572 = vld [vmem:[%s1 + $0x10e8] sm:$0xff]
  %v573 = vld [vmem:[%s1 + $0x10f0] sm:$0xff]
  %v574 = vld [vmem:[%s1 + $0x10f8] sm:$0xff]
  %v575 = vld [vmem:[%s1 + $0x1100] sm:$0xff]
  %v576 = vld [vmem:[%s1 + $0x1108] sm:$0xff]
  %v577 = vld [vmem:[%s1 + $0x1110] sm:$0xff]
  %v578 = vld [vmem:[%s1 + $0x1118] sm:$0xff]
  %v579 = vld [vmem:[%s1 + $0x1120] sm:$0xff]
  %v580 = vld [vmem:[%s1 + $0x1128] sm:$0xff]
  %v581 = vld [vmem:[%s1 + $0x1130] sm:$0xff]
  %v582 = vld [vmem:[%s1 + $0x1138] sm:$0xff]
  %v583 = vld [vmem:[%s1 + $0x1140] sm:$0xff]
  %v584 = vld [vmem:[%s1 + $0x1148] sm:$0xff]
  %v585 = vld [vmem:[%s1 + $0x1150] sm:$0xff]
  %v586 = vld [vmem:[%s1 + $0x1158] sm:$0xff]
  %v587 = vld [vmem:[%s1 + $0x1160] sm:$0xff]
  %v588 = vld [vmem:[%s1 + $0x1168] sm:$0xff]
  %v589 = vld [vmem:[%s1 + $0x1170] sm:$0xff]
  %v590 = vld [vmem:[%s1 + $0x1178] sm:$0xff]
  %v591 = vld [vmem:[%s1 + $0x1180] sm:$0xff]
  %v592 = vld [vmem:[%s1 + $0x1188] sm:$0xff]
  %v593 = vld [vmem:[%s1 + $0x1190] sm:$0xff]
  %v594 = vld [vmem:[%s1 + $0x1198] sm:$0xff]
  %v595 = vld [vmem:[%s1 + $0x11a0] sm:$0xff]
  %v596 = vld [vmem:[%s1 + $0x11a8] sm:$0xff]
  %v597 = vld [vmem:[%s1 + $0x11b0] sm:$0xff]
  %v598 = vld [vmem:[%s1 + $0x11b8] sm:$0xff]
  %v599 = vld [vmem:[%s1 + $0x11c0] sm:$0xff]
  %v600 = vld [vmem:[%s1 + $0x11c8] sm:$0xff]
  %v601 = vld [vmem:[%s1 + $0x11d0] sm:$0xff]
  %v602 = vld [vmem:[%s1 + $0x11d8] sm:$0xff]
  %v603 = vld [vmem:[%s1 + $0x11e0] sm:$0xff]
  %v604 = vld [vmem:[%s1 + $0x11e8] sm:$0xff]
  %v605 = vld [vmem:[%s1 + $0x11f0] sm:$0xff]
  %v606 = vld [vmem:[%s1 + $0x11f8] sm:$0xff]
  %v607 = vld [vmem:[%s1 + $0x1200] sm:$0xff]
  %v608 = vld [vmem:[%s1 + $0x1208] sm:$0xff]
  %v609 = vld [vmem:[%s1 + $0x1210] sm:$0xff]
  %v610 = vld [vmem:[%s1 + $0x1218] sm:$0xff]
  %v611 = vld [vmem:[%s1 + $0x1220] sm:$0xff]
  %v612 = vld [vmem:[%s1 + $0x1228] sm:$0xff]
  %v613 = vld [vmem:[%s1 + $0x1230] sm:$0xff]
  %v614 = vld [vmem:[%s1 + $0x1238] sm:$0xff]
  %v615 = vld [vmem:[%s1 + $0x1240] sm:$0xff]
  %v616 = vld [vmem:[%s1 + $0x1248] sm:$0xff]
  %v617 = vld [vmem:[%s1 + $0x1250] sm:$0xff]
  %v618 = vld [vmem:[%s1 + $0x1258] sm:$0xff]
  %v619 = vld [vmem:[%s1 + $0x1260] sm:$0xff]
  %v620 = vld [vmem:[%s1 + $0x1268] sm:$0xff]
  %v621 = vld [vmem:[%s1 + $0x1270] sm:$0xff]
  %v622 = vld [vmem:[%s1 + $0x1278] sm:$0xff]
  %v623 = vld [vmem:[%s1 + $0x1280] sm:$0xff]
  %v624 = vld [vmem:[%s1 + $0x1288] sm:$0xff]
  %v625 = vld [vmem:[%s1 + $0x1290] sm:$0xff]
  %v626 = vld [vmem:[%s1 + $0x1298] sm:$0xff]
  %v627 = vld [vmem:[%s1 + $0x12a0] sm:$0xff]
  %v628 = vld [vmem:[%s1 + $0x12a8] sm:$0xff]
  %v629 = vld [vmem:[%s1 + $0x12b0] sm:$0xff]
  %v630 = vld [vmem:[%s1 + $0x12b8] sm:$0xff]
  %v631 = vld [vmem:[%s1 + $0x12c0] sm:$0xff]
  %v632 = vld [vmem:[%s1 + $0x12c8] sm:$0xff]
  %v633 = vld [vmem:[%s1 + $0x12d0] sm:$0xff]
  %v634 = vld [vmem:[%s1 + $0x12d8] sm:$0xff]
  %v635 = vld [vmem:[%s1 + $0x12e0] sm:$0xff]
  %v636 = vld [vmem:[%s1 + $0x12e8] sm:$0xff]
  %v637 = vld [vmem:[%s1 + $0x12f0] sm:$0xff]
  %v638 = vld [vmem:[%s1 + $0x12f8] sm:$0xff]
  %v639 = vld [vmem:[%s1 + $0x1300] sm:$0xff]
  %v640 = vld [vmem:[%s1 + $0x1308] sm:$0xff]
  %v641 = vld [vmem:[%s1 + $0x1310] sm:$0xff]
  %v642 = vld [vmem:[%s1 + $0x1318] sm:$0xff]
  %v643 = vld [vmem:[%s1 + $0x1320] sm:$0xff]
  %v644 = vld [vmem:[%s1 + $0x1328] sm:$0xff]
  %v645 = vld [vmem:[%s1 + $0x1330] sm:$0xff]
  %v646 = vld [vmem:[%s1 + $0x1338] sm:$0xff]
  %v647 = vld [vmem:[%s1 + $0x1340] sm:$0xff]
  %v648 = vld [vmem:[%s1 + $0x1348] sm:$0xff]
  %v649 = vld [vmem:[%s1 + $0x1350] sm:$0xff]
  %v650 = vld [vmem:[%s1 + $0x1358] sm:$0xff]
  %v651 = vld [vmem:[%s1 + $0x1360] sm:$0xff]
  %v652 = vld [vmem:[%s1 + $0x1368] sm:$0xff]
  %v653 = vld [vmem:[%s1 + $0x1370] sm:$0xff]
  %v654 = vld [vmem:[%s1 + $0x1378] sm:$0xff]
  %v655 = vld [vmem:[%s1 + $0x1380] sm:$0xff]
  %v656 = vld [vmem:[%s1 + $0x1388] sm:$0xff]
  %v657 = vld [vmem:[%s1 + $0x1390] sm:$0xff]
  %v658 = vld [vmem:[%s1 + $0x1398] sm:$0xff]
  %v659 = vld [vmem:[%s1 + $0x13a0] sm:$0xff]
  %v660 = vld [vmem:[%s1 + $0x13a8] sm:$0xff]
  %v661 = vld [vmem:[%s1 + $0x13b0] sm:$0xff]
  %v662 = vld [vmem:[%s1 + $0x13b8] sm:$0xff]
  %v663 = vld [vmem:[%s1 + $0x13c0] sm:$0xff]
  %v664 = vld [vmem:[%s1 + $0x13c8] sm:$0xff]
  %v665 = vld [vmem:[%s1 + $0x13d0] sm:$0xff]
  %v666 = vld [vmem:[%s1 + $0x13d8] sm:$0xff]
  %v667 = vld [vmem:[%s1 + $0x13e0] sm:$0xff]
  %v668 = vld [vmem:[%s1 + $0x13e8] sm:$0xff]
  %v669 = vld [vmem:[%s1 + $0x13f0] sm:$0xff]
  %v670 = vld [vmem:[%s1 + $0x13f8] sm:$0xff]
  %v671 = vld [vmem:[%s2] sm:$0xf]
  %v673 = vlaneseq
  %v674 = vshrl.u32 %v673, 7
  %v675 = vsub.s32 0, %v674
  %v676 = vrot.slane %v671, %v675
  %v677 = vlaneseq
  %v678 = vshrl.u32 %v677, 7
  %v679 = vsub.s32 1, %v678
  %v680 = vrot.slane %v671, %v679
  %v681 = vlaneseq
  %v682 = vshrl.u32 %v681, 7
  %v683 = vsub.s32 2, %v682
  %v684 = vrot.slane %v671, %v683
  %v685 = vlaneseq
  %v686 = vshrl.u32 %v685, 7
  %v687 = vsub.s32 3, %v686
  %v688 = vrot.slane %v671, %v687
  %v696 = vcombine.high %v28, %v28
  %v698 = vunpack.c.l.s4 1983009808
  %v699 = vunpack.c.0.s8 %v698
  %v700 = vlaneseq
  %v701 = vshrl.u32 %v700, 7
  %v702 = vsub.s32 %v699, %v701
  %v703 = vrot.slane %v28, %v702
  %v705 = vunpack.c.l.s4 1983009808
  %v706 = vunpack.c.0.s8 %v705
  %v707 = vlaneseq
  %v708 = vshrl.u32 %v707, 7
  %v709 = vsub.s32 %v706, %v708
  %v710 = vrot.slane %v696, %v709
  %v711 = vcombine.high %v703, %v703
  %v712 = vcombine.high %v710, %v710
  %v713 = vcombine.high %v29, %v29
  %v715 = vunpack.c.l.s4 1983009808
  %v716 = vunpack.c.0.s8 %v715
  %v717 = vlaneseq
  %v718 = vshrl.u32 %v717, 7
  %v719 = vsub.s32 %v716, %v718
  %v720 = vrot.slane %v29, %v719
  %v722 = vunpack.c.l.s4 1983009808
  %v723 = vunpack.c.0.s8 %v722
  %v724 = vlaneseq
  %v725 = vshrl.u32 %v724, 7
  %v726 = vsub.s32 %v723, %v725
  %v727 = vrot.slane %v713, %v726
  %v728 = vcombine.high %v720, %v720
  %v729 = vcombine.high %v727, %v727
  %v731 = vunpack.c.l.s4 1983009808
  %v732 = vunpack.c.0.s8 %v731
  %v733 = vlaneseq
  %v734 = vshrl.u32 %v733, 7
  %v735 = vsub.s32 %v732, %v734
  %v736 = vrot.slane %v30, %v735
  %v737 = vcombine.high %v736, %v736
  %748 = vmatprep.subr.mxu0 %v32
  %749 = vmatpush1.msra.mxu0 %v31
  %750 = vmatprep.subr.mxu0 %v36
  %751 = vmatpush1.msra.mxu0 %v35
  %752 = vmatprep.subr.mxu0 %v40
  %753 = vmatpush1.msra.mxu0 %v39
  %754 = vmatprep.subr.mxu0 %v44
  %755 = vmatpush1.msra.mxu0 %v43
  %756 = vmatprep.subr.mxu0 %v48
  %757 = vmatpush1.msra.mxu0 %v47
  %758 = vmatprep.subr.mxu0 %v52
  %759 = vmatpush1.msra.mxu0 %v51
  %760 = vmatprep.subr.mxu0 %v56
  %761 = vmatpush1.msra.mxu0 %v55
  %762 = vmatprep.subr.mxu0 %v60
  %763 = vmatpush1.msra.mxu0 %v59
  %764 = vmatprep.subr.mxu0 %v64
  %765 = vmatpush1.msra.mxu0 %v63
  %766 = vmatprep.subr.mxu0 %v68
  %767 = vmatpush1.msra.mxu0 %v67
  %768 = vmatprep.subr.mxu0 %v72
  %769 = vmatpush1.msra.mxu0 %v71
  %770 = vmatprep.subr.mxu0 %v76
  %771 = vmatpush1.msra.mxu0 %v75
  %772 = vmatprep.subr.mxu0 %v80
  %773 = vmatpush1.msra.mxu0 %v79
  %774 = vmatprep.subr.mxu0 %v84
  %775 = vmatpush1.msra.mxu0 %v83
  %776 = vmatprep.subr.mxu0 %v88
  %777 = vmatpush1.msra.mxu0 %v87
  %778 = vmatprep.subr.mxu0 %v92
  %779 = vmatpush1.msra.mxu0 %v91
  %780 = vmatprep.subr.mxu0 %v96
  %781 = vmatpush1.msra.mxu0 %v95
  %782 = vmatprep.subr.mxu0 %v100
  %783 = vmatpush1.msra.mxu0 %v99
  %784 = vmatprep.subr.mxu0 %v104
  %785 = vmatpush1.msra.mxu0 %v103
  %786 = vmatprep.subr.mxu0 %v108
  %787 = vmatpush1.msra.mxu0 %v107
  %788 = vmatprep.subr.mxu0 %v112
  %789 = vmatpush1.msra.mxu0 %v111
  %790 = vmatprep.subr.mxu0 %v116
  %791 = vmatpush1.msra.mxu0 %v115
  %792 = vmatprep.subr.mxu0 %v120
  %793 = vmatpush1.msra.mxu0 %v119
  %794 = vmatprep.subr.mxu0 %v124
  %795 = vmatpush1.msra.mxu0 %v123
  %796 = vmatprep.subr.mxu0 %v128
  %797 = vmatpush1.msra.mxu0 %v127
  %798 = vmatprep.subr.mxu0 %v132
  %799 = vmatpush1.msra.mxu0 %v131
  %800 = vmatprep.subr.mxu0 %v136
  %801 = vmatpush1.msra.mxu0 %v135
  %802 = vmatprep.subr.mxu0 %v140
  %803 = vmatpush1.msra.mxu0 %v139
  %804 = vmatprep.subr.mxu0 %v144
  %805 = vmatpush1.msra.mxu0 %v143
  %806 = vmatprep.subr.mxu0 %v148
  %807 = vmatpush1.msra.mxu0 %v147
  %808 = vmatprep.subr.mxu0 %v152
  %809 = vmatpush1.msra.mxu0 %v151
  %810 = vmatprep.subr.mxu0 %v156
  %811 = vmatpush1.msra.mxu0 %v155
  %812 = vmatprep.mubr.f32.mxu0 %v711
  %813 = vmatmul.mubr.f32.gmra.mrb[0].mxu0 %v703
  %v814 = vpop.f32.mrb[0].mxu0
  %v815 = vadd.f32 %v676, %v814
  %v816 = vpop.f32.mrb[0].mxu0
  %v817 = vadd.f32 %v680, %v816
  %818 = vdwg.mxu0
  %819 = vmatprep.subr.mxu0 %v160
  %820 = vmatpush1.msra.mxu0 %v159
  %821 = vmatprep.subr.mxu0 %v164
  %822 = vmatpush1.msra.mxu0 %v163
  %823 = vmatprep.subr.mxu0 %v168
  %824 = vmatpush1.msra.mxu0 %v167
  %825 = vmatprep.subr.mxu0 %v172
  %826 = vmatpush1.msra.mxu0 %v171
  %827 = vmatprep.subr.mxu0 %v176
  %828 = vmatpush1.msra.mxu0 %v175
  %829 = vmatprep.subr.mxu0 %v180
  %830 = vmatpush1.msra.mxu0 %v179
  %831 = vmatprep.subr.mxu0 %v184
  %832 = vmatpush1.msra.mxu0 %v183
  %833 = vmatprep.subr.mxu0 %v188
  %834 = vmatpush1.msra.mxu0 %v187
  %835 = vmatprep.subr.mxu0 %v192
  %836 = vmatpush1.msra.mxu0 %v191
  %837 = vmatprep.subr.mxu0 %v196
  %838 = vmatpush1.msra.mxu0 %v195
  %839 = vmatprep.subr.mxu0 %v200
  %840 = vmatpush1.msra.mxu0 %v199
  %841 = vmatprep.subr.mxu0 %v204
  %842 = vmatpush1.msra.mxu0 %v203
  %843 = vmatprep.subr.mxu0 %v208
  %844 = vmatpush1.msra.mxu0 %v207
  %845 = vmatprep.subr.mxu0 %v212
  %846 = vmatpush1.msra.mxu0 %v211
  %847 = vmatprep.subr.mxu0 %v216
  %848 = vmatpush1.msra.mxu0 %v215
  %849 = vmatprep.subr.mxu0 %v220
  %850 = vmatpush1.msra.mxu0 %v219
  %851 = vmatprep.subr.mxu0 %v224
  %852 = vmatpush1.msra.mxu0 %v223
  %853 = vmatprep.subr.mxu0 %v228
  %854 = vmatpush1.msra.mxu0 %v227
  %855 = vmatprep.subr.mxu0 %v232
  %856 = vmatpush1.msra.mxu0 %v231
  %857 = vmatprep.subr.mxu0 %v236
  %858 = vmatpush1.msra.mxu0 %v235
  %859 = vmatprep.subr.mxu0 %v240
  %860 = vmatpush1.msra.mxu0 %v239
  %861 = vmatprep.subr.mxu0 %v244
  %862 = vmatpush1.msra.mxu0 %v243
  %863 = vmatprep.subr.mxu0 %v248
  %864 = vmatpush1.msra.mxu0 %v247
  %865 = vmatprep.subr.mxu0 %v252
  %866 = vmatpush1.msra.mxu0 %v251
  %867 = vmatprep.subr.mxu0 %v256
  %868 = vmatpush1.msra.mxu0 %v255
  %869 = vmatprep.subr.mxu0 %v260
  %870 = vmatpush1.msra.mxu0 %v259
  %871 = vmatprep.subr.mxu0 %v264
  %872 = vmatpush1.msra.mxu0 %v263
  %873 = vmatprep.subr.mxu0 %v268
  %874 = vmatpush1.msra.mxu0 %v267
  %875 = vmatprep.subr.mxu0 %v272
  %876 = vmatpush1.msra.mxu0 %v271
  %877 = vmatprep.subr.mxu0 %v276
  %878 = vmatpush1.msra.mxu0 %v275
  %879 = vmatprep.subr.mxu0 %v280
  %880 = vmatpush1.msra.mxu0 %v279
  %881 = vmatprep.subr.mxu0 %v284
  %882 = vmatpush1.msra.mxu0 %v283
  %883 = vmatprep.mubr.f32.mxu0 %v712
  %884 = vmatmul.mubr.f32.gmra.mrb[0].mxu0 %v710
  %v885 = vpop.f32.mrb[0].mxu0
  %v886 = vadd.f32 %v815, %v885
  %v887 = vpop.f32.mrb[0].mxu0
  %v888 = vadd.f32 %v817, %v887
  %889 = vdwg.mxu0
  %890 = vmatprep.subr.mxu0 %v288
  %891 = vmatpush1.msra.mxu0 %v287
  %892 = vmatprep.subr.mxu0 %v292
  %893 = vmatpush1.msra.mxu0 %v291
  %894 = vmatprep.subr.mxu0 %v296
  %895 = vmatpush1.msra.mxu0 %v295
  %896 = vmatprep.subr.mxu0 %v300
  %897 = vmatpush1.msra.mxu0 %v299
  %898 = vmatprep.subr.mxu0 %v304
  %899 = vmatpush1.msra.mxu0 %v303
  %900 = vmatprep.subr.mxu0 %v308
  %901 = vmatpush1.msra.mxu0 %v307
  %902 = vmatprep.subr.mxu0 %v312
  %903 = vmatpush1.msra.mxu0 %v311
  %904 = vmatprep.subr.mxu0 %v316
  %905 = vmatpush1.msra.mxu0 %v315
  %906 = vmatprep.subr.mxu0 %v320
  %907 = vmatpush1.msra.mxu0 %v319
  %908 = vmatprep.subr.mxu0 %v324
  %909 = vmatpush1.msra.mxu0 %v323
  %910 = vmatprep.subr.mxu0 %v328
  %911 = vmatpush1.msra.mxu0 %v327
  %912 = vmatprep.subr.mxu0 %v332
  %913 = vmatpush1.msra.mxu0 %v331
  %914 = vmatprep.subr.mxu0 %v336
  %915 = vmatpush1.msra.mxu0 %v335
  %916 = vmatprep.subr.mxu0 %v340
  %917 = vmatpush1.msra.mxu0 %v339
  %918 = vmatprep.subr.mxu0 %v344
  %919 = vmatpush1.msra.mxu0 %v343
  %920 = vmatprep.subr.mxu0 %v348
  %921 = vmatpush1.msra.mxu0 %v347
  %922 = vmatprep.subr.mxu0 %v352
  %923 = vmatpush1.msra.mxu0 %v351
  %924 = vmatprep.subr.mxu0 %v356
  %925 = vmatpush1.msra.mxu0 %v355
  %926 = vmatprep.subr.mxu0 %v360
  %927 = vmatpush1.msra.mxu0 %v359
  %928 = vmatprep.subr.mxu0 %v364
  %929 = vmatpush1.msra.mxu0 %v363
  %930 = vmatprep.subr.mxu0 %v368
  %931 = vmatpush1.msra.mxu0 %v367
  %932 = vmatprep.subr.mxu0 %v372
  %933 = vmatpush1.msra.mxu0 %v371
  %934 = vmatprep.subr.mxu0 %v376
  %935 = vmatpush1.msra.mxu0 %v375
  %936 = vmatprep.subr.mxu0 %v380
  %937 = vmatpush1.msra.mxu0 %v379
  %938 = vmatprep.subr.mxu0 %v384
  %939 = vmatpush1.msra.mxu0 %v383
  %940 = vmatprep.subr.mxu0 %v388
  %941 = vmatpush1.msra.mxu0 %v387
  %942 = vmatprep.subr.mxu0 %v392
  %943 = vmatpush1.msra.mxu0 %v391
  %944 = vmatprep.subr.mxu0 %v396
  %945 = vmatpush1.msra.mxu0 %v395
  %946 = vmatprep.subr.mxu0 %v400
  %947 = vmatpush1.msra.mxu0 %v399
  %948 = vmatprep.subr.mxu0 %v404
  %949 = vmatpush1.msra.mxu0 %v403
  %950 = vmatprep.subr.mxu0 %v408
  %951 = vmatpush1.msra.mxu0 %v407
  %952 = vmatprep.subr.mxu0 %v412
  %953 = vmatpush1.msra.mxu0 %v411
  %954 = vmatprep.mubr.f32.mxu0 %v728
  %955 = vmatmul.mubr.f32.gmra.mrb[0].mxu0 %v720
  %v956 = vpop.f32.mrb[0].mxu0
  %v957 = vadd.f32 %v886, %v956
  %v958 = vpop.f32.mrb[0].mxu0
  %v959 = vadd.f32 %v888, %v958
  %960 = vdwg.mxu0
  %961 = vmatprep.subr.mxu0 %v416
  %962 = vmatpush1.msra.mxu0 %v415
  %963 = vmatprep.subr.mxu0 %v420
  %964 = vmatpush1.msra.mxu0 %v419
  %965 = vmatprep.subr.mxu0 %v424
  %966 = vmatpush1.msra.mxu0 %v423
  %967 = vmatprep.subr.mxu0 %v428
  %968 = vmatpush1.msra.mxu0 %v427
  %969 = vmatprep.subr.mxu0 %v432
  %970 = vmatpush1.msra.mxu0 %v431
  %971 = vmatprep.subr.mxu0 %v436
  %972 = vmatpush1.msra.mxu0 %v435
  %973 = vmatprep.subr.mxu0 %v440
  %974 = vmatpush1.msra.mxu0 %v439
  %975 = vmatprep.subr.mxu0 %v444
  %976 = vmatpush1.msra.mxu0 %v443
  %977 = vmatprep.subr.mxu0 %v448
  %978 = vmatpush1.msra.mxu0 %v447
  %979 = vmatprep.subr.mxu0 %v452
  %980 = vmatpush1.msra.mxu0 %v451
  %981 = vmatprep.subr.mxu0 %v456
  %982 = vmatpush1.msra.mxu0 %v455
  %983 = vmatprep.subr.mxu0 %v460
  %984 = vmatpush1.msra.mxu0 %v459
  %985 = vmatprep.subr.mxu0 %v464
  %986 = vmatpush1.msra.mxu0 %v463
  %987 = vmatprep.subr.mxu0 %v468
  %988 = vmatpush1.msra.mxu0 %v467
  %989 = vmatprep.subr.mxu0 %v472
  %990 = vmatpush1.msra.mxu0 %v471
  %991 = vmatprep.subr.mxu0 %v476
  %992 = vmatpush1.msra.mxu0 %v475
  %993 = vmatprep.subr.mxu0 %v480
  %994 = vmatpush1.msra.mxu0 %v479
  %995 = vmatprep.subr.mxu0 %v484
  %996 = vmatpush1.msra.mxu0 %v483
  %997 = vmatprep.subr.mxu0 %v488
  %998 = vmatpush1.msra.mxu0 %v487
  %999 = vmatprep.subr.mxu0 %v492
  %1000 = vmatpush1.msra.mxu0 %v491
  %1001 = vmatprep.subr.mxu0 %v496
  %1002 = vmatpush1.msra.mxu0 %v495
  %1003 = vmatprep.subr.mxu0 %v500
  %1004 = vmatpush1.msra.mxu0 %v499
  %1005 = vmatprep.subr.mxu0 %v504
  %1006 = vmatpush1.msra.mxu0 %v503
  %1007 = vmatprep.subr.mxu0 %v508
  %1008 = vmatpush1.msra.mxu0 %v507
  %1009 = vmatprep.subr.mxu0 %v512
  %1010 = vmatpush1.msra.mxu0 %v511
  %1011 = vmatprep.subr.mxu0 %v516
  %1012 = vmatpush1.msra.mxu0 %v515
  %1013 = vmatprep.subr.mxu0 %v520
  %1014 = vmatpush1.msra.mxu0 %v519
  %1015 = vmatprep.subr.mxu0 %v524
  %1016 = vmatpush1.msra.mxu0 %v523
  %1017 = vmatprep.subr.mxu0 %v528
  %1018 = vmatpush1.msra.mxu0 %v527
  %1019 = vmatprep.subr.mxu0 %v532
  %1020 = vmatpush1.msra.mxu0 %v531
  %1021 = vmatprep.subr.mxu0 %v536
  %1022 = vmatpush1.msra.mxu0 %v535
  %1023 = vmatprep.subr.mxu0 %v540
  %1024 = vmatpush1.msra.mxu0 %v539
  %1025 = vmatprep.mubr.f32.mxu0 %v729
  %1026 = vmatmul.mubr.f32.gmra.mrb[0].mxu0 %v727
  %v1027 = vpop.f32.mrb[0].mxu0
  %v1028 = vadd.f32 %v957, %v1027
  %v1029 = vpop.f32.mrb[0].mxu0
  %v1030 = vadd.f32 %v959, %v1029
  %1031 = vdwg.mxu0
  %1032 = vmatprep.subr.mxu0 %v544
  %1033 = vmatpush1.msra.mxu0 %v543
  %1034 = vmatprep.subr.mxu0 %v548
  %1035 = vmatpush1.msra.mxu0 %v547
  %1036 = vmatprep.subr.mxu0 %v552
  %1037 = vmatpush1.msra.mxu0 %v551
  %1038 = vmatprep.subr.mxu0 %v556
  %1039 = vmatpush1.msra.mxu0 %v555
  %1040 = vmatprep.subr.mxu0 %v560
  %1041 = vmatpush1.msra.mxu0 %v559
  %1042 = vmatprep.subr.mxu0 %v564
  %1043 = vmatpush1.msra.mxu0 %v563
  %1044 = vmatprep.subr.mxu0 %v568
  %1045 = vmatpush1.msra.mxu0 %v567
  %1046 = vmatprep.subr.mxu0 %v572
  %1047 = vmatpush1.msra.mxu0 %v571
  %1048 = vmatprep.subr.mxu0 %v576
  %1049 = vmatpush1.msra.mxu0 %v575
  %1050 = vmatprep.subr.mxu0 %v580
  %1051 = vmatpush1.msra.mxu0 %v579
  %1052 = vmatprep.subr.mxu0 %v584
  %1053 = vmatpush1.msra.mxu0 %v583
  %1054 = vmatprep.subr.mxu0 %v588
  %1055 = vmatpush1.msra.mxu0 %v587
  %1056 = vmatprep.subr.mxu0 %v592
  %1057 = vmatpush1.msra.mxu0 %v591
  %1058 = vmatprep.subr.mxu0 %v596
  %1059 = vmatpush1.msra.mxu0 %v595
  %1060 = vmatprep.subr.mxu0 %v600
  %1061 = vmatpush1.msra.mxu0 %v599
  %1062 = vmatprep.subr.mxu0 %v604
  %1063 = vmatpush1.msra.mxu0 %v603
  %1064 = vmatprep.subr.mxu0 %v608
  %1065 = vmatpush1.msra.mxu0 %v607
  %1066 = vmatprep.subr.mxu0 %v612
  %1067 = vmatpush1.msra.mxu0 %v611
  %1068 = vmatprep.subr.mxu0 %v616
  %1069 = vmatpush1.msra.mxu0 %v615
  %1070 = vmatprep.subr.mxu0 %v620
  %1071 = vmatpush1.msra.mxu0 %v619
  %1072 = vmatprep.subr.mxu0 %v624
  %1073 = vmatpush1.msra.mxu0 %v623
  %1074 = vmatprep.subr.mxu0 %v628
  %1075 = vmatpush1.msra.mxu0 %v627
  %1076 = vmatprep.subr.mxu0 %v632
  %1077 = vmatpush1.msra.mxu0 %v631
  %1078 = vmatprep.subr.mxu0 %v636
  %1079 = vmatpush1.msra.mxu0 %v635
  %1080 = vmatprep.subr.mxu0 %v640
  %1081 = vmatpush1.msra.mxu0 %v639
  %1082 = vmatprep.subr.mxu0 %v644
  %1083 = vmatpush1.msra.mxu0 %v643
  %1084 = vmatprep.subr.mxu0 %v648
  %1085 = vmatpush1.msra.mxu0 %v647
  %1086 = vmatprep.subr.mxu0 %v652
  %1087 = vmatpush1.msra.mxu0 %v651
  %1088 = vmatprep.subr.mxu0 %v656
  %1089 = vmatpush1.msra.mxu0 %v655
  %1090 = vmatprep.subr.mxu0 %v660
  %1091 = vmatpush1.msra.mxu0 %v659
  %1092 = vmatprep.subr.mxu0 %v664
  %1093 = vmatpush1.msra.mxu0 %v663
  %1094 = vmatprep.subr.mxu0 %v668
  %1095 = vmatpush1.msra.mxu0 %v667
  %1096 = vmatprep.mubr.f32.mxu0 %v737
  %1097 = vmatmul.mubr.f32.gmra.mrb[0].mxu0 %v736
  %v1098 = vpop.f32.mrb[0].mxu0
  %v1099 = vadd.f32 %v1028, %v1098
  %v1100 = vpop.f32.mrb[0].mxu0
  %v1101 = vadd.f32 %v1030, %v1100
  %1102 = vdwg.mxu0
  %1103 = vmatprep.subr.mxu0 %v34
  %1104 = vmatpush1.msra.mxu0 %v33
  %1105 = vmatprep.subr.mxu0 %v38
  %1106 = vmatpush1.msra.mxu0 %v37
  %1107 = vmatprep.subr.mxu0 %v42
  %1108 = vmatpush1.msra.mxu0 %v41
  %1109 = vmatprep.subr.mxu0 %v46
  %1110 = vmatpush1.msra.mxu0 %v45
  %1111 = vmatprep.subr.mxu0 %v50
  %1112 = vmatpush1.msra.mxu0 %v49
  %1113 = vmatprep.subr.mxu0 %v54
  %1114 = vmatpush1.msra.mxu0 %v53
  %1115 = vmatprep.subr.mxu0 %v58
  %1116 = vmatpush1.msra.mxu0 %v57
  %1117 = vmatprep.subr.mxu0 %v62
  %1118 = vmatpush1.msra.mxu0 %v61
  %1119 = vmatprep.subr.mxu0 %v66
  %1120 = vmatpush1.msra.mxu0 %v65
  %1121 = vmatprep.subr.mxu0 %v70
  %1122 = vmatpush1.msra.mxu0 %v69
  %1123 = vmatprep.subr.mxu0 %v74
  %1124 = vmatpush1.msra.mxu0 %v73
  %1125 = vmatprep.subr.mxu0 %v78
  %1126 = vmatpush1.msra.mxu0 %v77
  %1127 = vmatprep.subr.mxu0 %v82
  %1128 = vmatpush1.msra.mxu0 %v81
  %1129 = vmatprep.subr.mxu0 %v86
  %1130 = vmatpush1.msra.mxu0 %v85
  %1131 = vmatprep.subr.mxu0 %v90
  %1132 = vmatpush1.msra.mxu0 %v89
  %1133 = vmatprep.subr.mxu0 %v94
  %1134 = vmatpush1.msra.mxu0 %v93
  %1135 = vmatprep.subr.mxu0 %v98
  %1136 = vmatpush1.msra.mxu0 %v97
  %1137 = vmatprep.subr.mxu0 %v102
  %1138 = vmatpush1.msra.mxu0 %v101
  %1139 = vmatprep.subr.mxu0 %v106
  %1140 = vmatpush1.msra.mxu0 %v105
  %1141 = vmatprep.subr.mxu0 %v110
  %1142 = vmatpush1.msra.mxu0 %v109
  %1143 = vmatprep.subr.mxu0 %v114
  %1144 = vmatpush1.msra.mxu0 %v113
  %1145 = vmatprep.subr.mxu0 %v118
  %1146 = vmatpush1.msra.mxu0 %v117
  %1147 = vmatprep.subr.mxu0 %v122
  %1148 = vmatpush1.msra.mxu0 %v121
  %1149 = vmatprep.subr.mxu0 %v126
  %1150 = vmatpush1.msra.mxu0 %v125
  %1151 = vmatprep.subr.mxu0 %v130
  %1152 = vmatpush1.msra.mxu0 %v129
  %1153 = vmatprep.subr.mxu0 %v134
  %1154 = vmatpush1.msra.mxu0 %v133
  %1155 = vmatprep.subr.mxu0 %v138
  %1156 = vmatpush1.msra.mxu0 %v137
  %1157 = vmatprep.subr.mxu0 %v142
  %1158 = vmatpush1.msra.mxu0 %v141
  %1159 = vmatprep.subr.mxu0 %v146
  %1160 = vmatpush1.msra.mxu0 %v145
  %1161 = vmatprep.subr.mxu0 %v150
  %1162 = vmatpush1.msra.mxu0 %v149
  %1163 = vmatprep.subr.mxu0 %v154
  %1164 = vmatpush1.msra.mxu0 %v153
  %1165 = vmatprep.subr.mxu0 %v158
  %1166 = vmatpush1.msra.mxu0 %v157
  %1167 = vmatprep.mubr.f32.mxu0 %v711
  %1168 = vmatmul.mubr.f32.gmra.mrb[0].mxu0 %v703
  %v1169 = vpop.f32.mrb[0].mxu0
  %v1170 = vadd.f32 %v684, %v1169
  %v1171 = vpop.f32.mrb[0].mxu0
  %v1172 = vadd.f32 %v688, %v1171
  %1173 = vdwg.mxu0
  %1174 = vmatprep.subr.mxu0 %v162
  %1175 = vmatpush1.msra.mxu0 %v161
  %1176 = vmatprep.subr.mxu0 %v166
  %1177 = vmatpush1.msra.mxu0 %v165
  %1178 = vmatprep.subr.mxu0 %v170
  %1179 = vmatpush1.msra.mxu0 %v169
  %1180 = vmatprep.subr.mxu0 %v174
  %1181 = vmatpush1.msra.mxu0 %v173
  %1182 = vmatprep.subr.mxu0 %v178
  %1183 = vmatpush1.msra.mxu0 %v177
  %1184 = vmatprep.subr.mxu0 %v182
  %1185 = vmatpush1.msra.mxu0 %v181
  %1186 = vmatprep.subr.mxu0 %v186
  %1187 = vmatpush1.msra.mxu0 %v185
  %1188 = vmatprep.subr.mxu0 %v190
  %1189 = vmatpush1.msra.mxu0 %v189
  %1190 = vmatprep.subr.mxu0 %v194
  %1191 = vmatpush1.msra.mxu0 %v193
  %1192 = vmatprep.subr.mxu0 %v198
  %1193 = vmatpush1.msra.mxu0 %v197
  %1194 = vmatprep.subr.mxu0 %v202
  %1195 = vmatpush1.msra.mxu0 %v201
  %1196 = vmatprep.subr.mxu0 %v206
  %1197 = vmatpush1.msra.mxu0 %v205
  %1198 = vmatprep.subr.mxu0 %v210
  %1199 = vmatpush1.msra.mxu0 %v209
  %1200 = vmatprep.subr.mxu0 %v214
  %1201 = vmatpush1.msra.mxu0 %v213
  %1202 = vmatprep.subr.mxu0 %v218
  %1203 = vmatpush1.msra.mxu0 %v217
  %1204 = vmatprep.subr.mxu0 %v222
  %1205 = vmatpush1.msra.mxu0 %v221
  %1206 = vmatprep.subr.mxu0 %v226
  %1207 = vmatpush1.msra.mxu0 %v225
  %1208 = vmatprep.subr.mxu0 %v230
  %1209 = vmatpush1.msra.mxu0 %v229
  %1210 = vmatprep.subr.mxu0 %v234
  %1211 = vmatpush1.msra.mxu0 %v233
  %1212 = vmatprep.subr.mxu0 %v238
  %1213 = vmatpush1.msra.mxu0 %v237
  %1214 = vmatprep.subr.mxu0 %v242
  %1215 = vmatpush1.msra.mxu0 %v241
  %1216 = vmatprep.subr.mxu0 %v246
  %1217 = vmatpush1.msra.mxu0 %v245
  %1218 = vmatprep.subr.mxu0 %v250
  %1219 = vmatpush1.msra.mxu0 %v249
  %1220 = vmatprep.subr.mxu0 %v254
  %1221 = vmatpush1.msra.mxu0 %v253
  %1222 = vmatprep.subr.mxu0 %v258
  %1223 = vmatpush1.msra.mxu0 %v257
  %1224 = vmatprep.subr.mxu0 %v262
  %1225 = vmatpush1.msra.mxu0 %v261
  %1226 = vmatprep.subr.mxu0 %v266
  %1227 = vmatpush1.msra.mxu0 %v265
  %1228 = vmatprep.subr.mxu0 %v270
  %1229 = vmatpush1.msra.mxu0 %v269
  %1230 = vmatprep.subr.mxu0 %v274
  %1231 = vmatpush1.msra.mxu0 %v273
  %1232 = vmatprep.subr.mxu0 %v278
  %1233 = vmatpush1.msra.mxu0 %v277
  %1234 = vmatprep.subr.mxu0 %v282
  %1235 = vmatpush1.msra.mxu0 %v281
  %1236 = vmatprep.subr.mxu0 %v286
  %1237 = vmatpush1.msra.mxu0 %v285
  %1238 = vmatprep.mubr.f32.mxu0 %v712
  %1239 = vmatmul.mubr.f32.gmra.mrb[0].mxu0 %v710
  %v1240 = vpop.f32.mrb[0].mxu0
  %v1241 = vadd.f32 %v1170, %v1240
  %v1242 = vpop.f32.mrb[0].mxu0
  %v1243 = vadd.f32 %v1172, %v1242
  %1244 = vdwg.mxu0
  %1245 = vmatprep.subr.mxu0 %v290
  %1246 = vmatpush1.msra.mxu0 %v289
  %1247 = vmatprep.subr.mxu0 %v294
  %1248 = vmatpush1.msra.mxu0 %v293
  %1249 = vmatprep.subr.mxu0 %v298
  %1250 = vmatpush1.msra.mxu0 %v297
  %1251 = vmatprep.subr.mxu0 %v302
  %1252 = vmatpush1.msra.mxu0 %v301
  %1253 = vmatprep.subr.mxu0 %v306
  %1254 = vmatpush1.msra.mxu0 %v305
  %1255 = vmatprep.subr.mxu0 %v310
  %1256 = vmatpush1.msra.mxu0 %v309
  %1257 = vmatprep.subr.mxu0 %v314
  %1258 = vmatpush1.msra.mxu0 %v313
  %1259 = vmatprep.subr.mxu0 %v318
  %1260 = vmatpush1.msra.mxu0 %v317
  %1261 = vmatprep.subr.mxu0 %v322
  %1262 = vmatpush1.msra.mxu0 %v321
  %1263 = vmatprep.subr.mxu0 %v326
  %1264 = vmatpush1.msra.mxu0 %v325
  %1265 = vmatprep.subr.mxu0 %v330
  %1266 = vmatpush1.msra.mxu0 %v329
  %1267 = vmatprep.subr.mxu0 %v334
  %1268 = vmatpush1.msra.mxu0 %v333
  %1269 = vmatprep.subr.mxu0 %v338
  %1270 = vmatpush1.msra.mxu0 %v337
  %1271 = vmatprep.subr.mxu0 %v342
  %1272 = vmatpush1.msra.mxu0 %v341
  %1273 = vmatprep.subr.mxu0 %v346
  %1274 = vmatpush1.msra.mxu0 %v345
  %1275 = vmatprep.subr.mxu0 %v350
  %1276 = vmatpush1.msra.mxu0 %v349
  %1277 = vmatprep.subr.mxu0 %v354
  %1278 = vmatpush1.msra.mxu0 %v353
  %1279 = vmatprep.subr.mxu0 %v358
  %1280 = vmatpush1.msra.mxu0 %v357
  %1281 = vmatprep.subr.mxu0 %v362
  %1282 = vmatpush1.msra.mxu0 %v361
  %1283 = vmatprep.subr.mxu0 %v366
  %1284 = vmatpush1.msra.mxu0 %v365
  %1285 = vmatprep.subr.mxu0 %v370
  %1286 = vmatpush1.msra.mxu0 %v369
  %1287 = vmatprep.subr.mxu0 %v374
  %1288 = vmatpush1.msra.mxu0 %v373
  %1289 = vmatprep.subr.mxu0 %v378
  %1290 = vmatpush1.msra.mxu0 %v377
  %1291 = vmatprep.subr.mxu0 %v382
  %1292 = vmatpush1.msra.mxu0 %v381
  %1293 = vmatprep.subr.mxu0 %v386
  %1294 = vmatpush1.msra.mxu0 %v385
  %1295 = vmatprep.subr.mxu0 %v390
  %1296 = vmatpush1.msra.mxu0 %v389
  %1297 = vmatprep.subr.mxu0 %v394
  %1298 = vmatpush1.msra.mxu0 %v393
  %1299 = vmatprep.subr.mxu0 %v398
  %1300 = vmatpush1.msra.mxu0 %v397
  %1301 = vmatprep.subr.mxu0 %v402
  %1302 = vmatpush1.msra.mxu0 %v401
  %1303 = vmatprep.subr.mxu0 %v406
  %1304 = vmatpush1.msra.mxu0 %v405
  %1305 = vmatprep.subr.mxu0 %v410
  %1306 = vmatpush1.msra.mxu0 %v409
  %1307 = vmatprep.subr.mxu0 %v414
  %1308 = vmatpush1.msra.mxu0 %v413
  %1309 = vmatprep.mubr.f32.mxu0 %v728
  %1310 = vmatmul.mubr.f32.gmra.mrb[0].mxu0 %v720
  %v1311 = vpop.f32.mrb[0].mxu0
  %v1312 = vadd.f32 %v1241, %v1311
  %v1313 = vpop.f32.mrb[0].mxu0
  %v1314 = vadd.f32 %v1243, %v1313
  %1315 = vdwg.mxu0
  %1316 = vmatprep.subr.mxu0 %v418
  %1317 = vmatpush1.msra.mxu0 %v417
  %1318 = vmatprep.subr.mxu0 %v422
  %1319 = vmatpush1.msra.mxu0 %v421
  %1320 = vmatprep.subr.mxu0 %v426
  %1321 = vmatpush1.msra.mxu0 %v425
  %1322 = vmatprep.subr.mxu0 %v430
  %1323 = vmatpush1.msra.mxu0 %v429
  %1324 = vmatprep.subr.mxu0 %v434
  %1325 = vmatpush1.msra.mxu0 %v433
  %1326 = vmatprep.subr.mxu0 %v438
  %1327 = vmatpush1.msra.mxu0 %v437
  %1328 = vmatprep.subr.mxu0 %v442
  %1329 = vmatpush1.msra.mxu0 %v441
  %1330 = vmatprep.subr.mxu0 %v446
  %1331 = vmatpush1.msra.mxu0 %v445
  %1332 = vmatprep.subr.mxu0 %v450
  %1333 = vmatpush1.msra.mxu0 %v449
  %1334 = vmatprep.subr.mxu0 %v454
  %1335 = vmatpush1.msra.mxu0 %v453
  %1336 = vmatprep.subr.mxu0 %v458
  %1337 = vmatpush1.msra.mxu0 %v457
  %1338 = vmatprep.subr.mxu0 %v462
  %1339 = vmatpush1.msra.mxu0 %v461
  %1340 = vmatprep.subr.mxu0 %v466
  %1341 = vmatpush1.msra.mxu0 %v465
  %1342 = vmatprep.subr.mxu0 %v470
  %1343 = vmatpush1.msra.mxu0 %v469
  %1344 = vmatprep.subr.mxu0 %v474
  %1345 = vmatpush1.msra.mxu0 %v473
  %1346 = vmatprep.subr.mxu0 %v478
  %1347 = vmatpush1.msra.mxu0 %v477
  %1348 = vmatprep.subr.mxu0 %v482
  %1349 = vmatpush1.msra.mxu0 %v481
  %1350 = vmatprep.subr.mxu0 %v486
  %1351 = vmatpush1.msra.mxu0 %v485
  %1352 = vmatprep.subr.mxu0 %v490
  %1353 = vmatpush1.msra.mxu0 %v489
  %1354 = vmatprep.subr.mxu0 %v494
  %1355 = vmatpush1.msra.mxu0 %v493
  %1356 = vmatprep.subr.mxu0 %v498
  %1357 = vmatpush1.msra.mxu0 %v497
  %1358 = vmatprep.subr.mxu0 %v502
  %1359 = vmatpush1.msra.mxu0 %v501
  %1360 = vmatprep.subr.mxu0 %v506
  %1361 = vmatpush1.msra.mxu0 %v505
  %1362 = vmatprep.subr.mxu0 %v510
  %1363 = vmatpush1.msra.mxu0 %v509
  %1364 = vmatprep.subr.mxu0 %v514
  %1365 = vmatpush1.msra.mxu0 %v513
  %1366 = vmatprep.subr.mxu0 %v518
  %1367 = vmatpush1.msra.mxu0 %v517
  %1368 = vmatprep.subr.mxu0 %v522
  %1369 = vmatpush1.msra.mxu0 %v521
  %1370 = vmatprep.subr.mxu0 %v526
  %1371 = vmatpush1.msra.mxu0 %v525
  %1372 = vmatprep.subr.mxu0 %v530
  %1373 = vmatpush1.msra.mxu0 %v529
  %1374 = vmatprep.subr.mxu0 %v534
  %1375 = vmatpush1.msra.mxu0 %v533
  %1376 = vmatprep.subr.mxu0 %v538
  %1377 = vmatpush1.msra.mxu0 %v537
  %1378 = vmatprep.subr.mxu0 %v542
  %1379 = vmatpush1.msra.mxu0 %v541
  %1380 = vmatprep.mubr.f32.mxu0 %v729
  %1381 = vmatmul.mubr.f32.gmra.mrb[0].mxu0 %v727
  %v1382 = vpop.f32.mrb[0].mxu0
  %v1383 = vadd.f32 %v1312, %v1382
  %v1384 = vpop.f32.mrb[0].mxu0
  %v1385 = vadd.f32 %v1314, %v1384
  %1386 = vdwg.mxu0
  %1387 = vmatprep.subr.mxu0 %v546
  %1388 = vmatpush1.msra.mxu0 %v545
  %1389 = vmatprep.subr.mxu0 %v550
  %1390 = vmatpush1.msra.mxu0 %v549
  %1391 = vmatprep.subr.mxu0 %v554
  %1392 = vmatpush1.msra.mxu0 %v553
  %1393 = vmatprep.subr.mxu0 %v558
  %1394 = vmatpush1.msra.mxu0 %v557
  %1395 = vmatprep.subr.mxu0 %v562
  %1396 = vmatpush1.msra.mxu0 %v561
  %1397 = vmatprep.subr.mxu0 %v566
  %1398 = vmatpush1.msra.mxu0 %v565
  %1399 = vmatprep.subr.mxu0 %v570
  %1400 = vmatpush1.msra.mxu0 %v569
  %1401 = vmatprep.subr.mxu0 %v574
  %1402 = vmatpush1.msra.mxu0 %v573
  %1403 = vmatprep.subr.mxu0 %v578
  %1404 = vmatpush1.msra.mxu0 %v577
  %1405 = vmatprep.subr.mxu0 %v582
  %1406 = vmatpush1.msra.mxu0 %v581
  %1407 = vmatprep.subr.mxu0 %v586
  %1408 = vmatpush1.msra.mxu0 %v585
  %1409 = vmatprep.subr.mxu0 %v590
  %1410 = vmatpush1.msra.mxu0 %v589
  %1411 = vmatprep.subr.mxu0 %v594
  %1412 = vmatpush1.msra.mxu0 %v593
  %1413 = vmatprep.subr.mxu0 %v598
  %1414 = vmatpush1.msra.mxu0 %v597
  %1415 = vmatprep.subr.mxu0 %v602
  %1416 = vmatpush1.msra.mxu0 %v601
  %1417 = vmatprep.subr.mxu0 %v606
  %1418 = vmatpush1.msra.mxu0 %v605
  %1419 = vmatprep.subr.mxu0 %v610
  %1420 = vmatpush1.msra.mxu0 %v609
  %1421 = vmatprep.subr.mxu0 %v614
  %1422 = vmatpush1.msra.mxu0 %v613
  %1423 = vmatprep.subr.mxu0 %v618
  %1424 = vmatpush1.msra.mxu0 %v617
  %1425 = vmatprep.subr.mxu0 %v622
  %1426 = vmatpush1.msra.mxu0 %v621
  %1427 = vmatprep.subr.mxu0 %v626
  %1428 = vmatpush1.msra.mxu0 %v625
  %1429 = vmatprep.subr.mxu0 %v630
  %1430 = vmatpush1.msra.mxu0 %v629
  %1431 = vmatprep.subr.mxu0 %v634
  %1432 = vmatpush1.msra.mxu0 %v633
  %1433 = vmatprep.subr.mxu0 %v638
  %1434 = vmatpush1.msra.mxu0 %v637
  %1435 = vmatprep.subr.mxu0 %v642
  %1436 = vmatpush1.msra.mxu0 %v641
  %1437 = vmatprep.subr.mxu0 %v646
  %1438 = vmatpush1.msra.mxu0 %v645
  %1439 = vmatprep.subr.mxu0 %v650
  %1440 = vmatpush1.msra.mxu0 %v649
  %1441 = vmatprep.subr.mxu0 %v654
  %1442 = vmatpush1.msra.mxu0 %v653
  %1443 = vmatprep.subr.mxu0 %v658
  %1444 = vmatpush1.msra.mxu0 %v657
  %1445 = vmatprep.subr.mxu0 %v662
  %1446 = vmatpush1.msra.mxu0 %v661
  %1447 = vmatprep.subr.mxu0 %v666
  %1448 = vmatpush1.msra.mxu0 %v665
  %1449 = vmatprep.subr.mxu0 %v670
  %1450 = vmatpush1.msra.mxu0 %v669
  %1451 = vmatprep.mubr.f32.mxu0 %v737
  %1452 = vmatmul.mubr.f32.gmra.mrb[0].mxu0 %v736
  %v1453 = vpop.f32.mrb[0].mxu0
  %v1454 = vadd.f32 %v1383, %v1453
  %v1455 = vpop.f32.mrb[0].mxu0
  %v1456 = vadd.f32 %v1385, %v1455
  %1457 = vdwg.mxu0
  %v1458 = vld [vmem:[%s3] sm:$0xff]
  %v1459 = vld [vmem:[%s3 + $0x8] sm:$0xff]
  %v1460 = vld [vmem:[%s3 + $0x10] sm:$0xff]
  %v1461 = vld [vmem:[%s3 + $0x18] sm:$0xff]
  %v1462 = vld [vmem:[%s3 + $0x20] sm:$0xff]
  %v1463 = vld [vmem:[%s3 + $0x28] sm:$0xff]
  %v1464 = vld [vmem:[%s3 + $0x30] sm:$0xff]
  %v1465 = vld [vmem:[%s3 + $0x38] sm:$0xff]
  %v1466 = vld [vmem:[%s3 + $0x40] sm:$0xff]
  %v1467 = vld [vmem:[%s3 + $0x48] sm:$0xff]
  %v1468 = vld [vmem:[%s3 + $0x50] sm:$0xff]
  %v1469 = vld [vmem:[%s3 + $0x58] sm:$0xff]
  %v1470 = vld [vmem:[%s3 + $0x60] sm:$0xff]
  %v1471 = vld [vmem:[%s3 + $0x68] sm:$0xff]
  %v1472 = vld [vmem:[%s3 + $0x70] sm:$0xff]
  %v1473 = vld [vmem:[%s3 + $0x78] sm:$0xff]
  %v1474 = vld [vmem:[%s3 + $0x80] sm:$0xff]
  %v1475 = vld [vmem:[%s3 + $0x88] sm:$0xff]
  %v1476 = vld [vmem:[%s3 + $0x90] sm:$0xff]
  %v1477 = vld [vmem:[%s3 + $0x98] sm:$0xff]
  %v1478 = vld [vmem:[%s3 + $0xa0] sm:$0xff]
  %v1479 = vld [vmem:[%s3 + $0xa8] sm:$0xff]
  %v1480 = vld [vmem:[%s3 + $0xb0] sm:$0xff]
  %v1481 = vld [vmem:[%s3 + $0xb8] sm:$0xff]
  %v1482 = vld [vmem:[%s3 + $0xc0] sm:$0xff]
  %v1483 = vld [vmem:[%s3 + $0xc8] sm:$0xff]
  %v1484 = vld [vmem:[%s3 + $0xd0] sm:$0xff]
  %v1485 = vld [vmem:[%s3 + $0xd8] sm:$0xff]
  %v1486 = vld [vmem:[%s3 + $0xe0] sm:$0xff]
  %v1487 = vld [vmem:[%s3 + $0xe8] sm:$0xff]
  %v1488 = vld [vmem:[%s3 + $0xf0] sm:$0xff]
  %v1489 = vld [vmem:[%s3 + $0xf8] sm:$0xff]
  %v1490 = vld [vmem:[%s3 + $0x100] sm:$0xff]
  %v1491 = vld [vmem:[%s3 + $0x108] sm:$0xff]
  %v1492 = vld [vmem:[%s3 + $0x110] sm:$0xff]
  %v1493 = vld [vmem:[%s3 + $0x118] sm:$0xff]
  %v1494 = vld [vmem:[%s3 + $0x120] sm:$0xff]
  %v1495 = vld [vmem:[%s3 + $0x128] sm:$0xff]
  %v1496 = vld [vmem:[%s3 + $0x130] sm:$0xff]
  %v1497 = vld [vmem:[%s3 + $0x138] sm:$0xff]
  %v1498 = vld [vmem:[%s3 + $0x140] sm:$0xff]
  %v1499 = vld [vmem:[%s3 + $0x148] sm:$0xff]
  %v1500 = vld [vmem:[%s3 + $0x150] sm:$0xff]
  %v1501 = vld [vmem:[%s3 + $0x158] sm:$0xff]
  %v1502 = vld [vmem:[%s3 + $0x160] sm:$0xff]
  %v1503 = vld [vmem:[%s3 + $0x168] sm:$0xff]
  %v1504 = vld [vmem:[%s3 + $0x170] sm:$0xff]
  %v1505 = vld [vmem:[%s3 + $0x178] sm:$0xff]
  %v1506 = vld [vmem:[%s3 + $0x180] sm:$0xff]
  %v1507 = vld [vmem:[%s3 + $0x188] sm:$0xff]
  %v1508 = vld [vmem:[%s3 + $0x190] sm:$0xff]
  %v1509 = vld [vmem:[%s3 + $0x198] sm:$0xff]
  %v1510 = vld [vmem:[%s3 + $0x1a0] sm:$0xff]
  %v1511 = vld [vmem:[%s3 + $0x1a8] sm:$0xff]
  %v1512 = vld [vmem:[%s3 + $0x1b0] sm:$0xff]
  %v1513 = vld [vmem:[%s3 + $0x1b8] sm:$0xff]
  %v1514 = vld [vmem:[%s3 + $0x1c0] sm:$0xff]
  %v1515 = vld [vmem:[%s3 + $0x1c8] sm:$0xff]
  %v1516 = vld [vmem:[%s3 + $0x1d0] sm:$0xff]
  %v1517 = vld [vmem:[%s3 + $0x1d8] sm:$0xff]
  %v1518 = vld [vmem:[%s3 + $0x1e0] sm:$0xff]
  %v1519 = vld [vmem:[%s3 + $0x1e8] sm:$0xff]
  %v1520 = vld [vmem:[%s3 + $0x1f0] sm:$0xff]
  %v1521 = vld [vmem:[%s3 + $0x1f8] sm:$0xff]
  %v1522 = vld [vmem:[%s4] sm:$0x1]
  %v1524 = vlaneseq
  %v1525 = vshrl.u32 %v1524, 7
  %v1526 = vsub.s32 0, %v1525
  %v1527 = vrot.slane %v1522, %v1526
  %1529 = vmatprep.subr.mxu0 0.0
  %1530 = vmatpush1.msra.mxu0 %v1458
  %1531 = vmatprep.subr.mxu0 0.0
  %1532 = vmatpush1.msra.mxu0 %v1459
  %1533 = vmatprep.subr.mxu0 0.0
  %1534 = vmatpush1.msra.mxu0 %v1460
  %1535 = vmatprep.subr.mxu0 0.0
  %1536 = vmatpush1.msra.mxu0 %v1461
  %1537 = vmatprep.subr.mxu0 0.0
  %1538 = vmatpush1.msra.mxu0 %v1462
  %1539 = vmatprep.subr.mxu0 0.0
  %1540 = vmatpush1.msra.mxu0 %v1463
  %1541 = vmatprep.subr.mxu0 0.0
  %1542 = vmatpush1.msra.mxu0 %v1464
  %1543 = vmatprep.subr.mxu0 0.0
  %1544 = vmatpush1.msra.mxu0 %v1465
  %1545 = vmatprep.subr.mxu0 0.0
  %1546 = vmatpush1.msra.mxu0 %v1466
  %1547 = vmatprep.subr.mxu0 0.0
  %1548 = vmatpush1.msra.mxu0 %v1467
  %1549 = vmatprep.subr.mxu0 0.0
  %1550 = vmatpush1.msra.mxu0 %v1468
  %1551 = vmatprep.subr.mxu0 0.0
  %1552 = vmatpush1.msra.mxu0 %v1469
  %1553 = vmatprep.subr.mxu0 0.0
  %1554 = vmatpush1.msra.mxu0 %v1470
  %1555 = vmatprep.subr.mxu0 0.0
  %1556 = vmatpush1.msra.mxu0 %v1471
  %1557 = vmatprep.subr.mxu0 0.0
  %1558 = vmatpush1.msra.mxu0 %v1472
  %1559 = vmatprep.subr.mxu0 0.0
  %1560 = vmatpush1.msra.mxu0 %v1473
  %1561 = vmatprep.subr.mxu0 0.0
  %1562 = vmatpush1.msra.mxu0 %v1474
  %1563 = vmatprep.subr.mxu0 0.0
  %1564 = vmatpush1.msra.mxu0 %v1475
  %1565 = vmatprep.subr.mxu0 0.0
  %1566 = vmatpush1.msra.mxu0 %v1476
  %1567 = vmatprep.subr.mxu0 0.0
  %1568 = vmatpush1.msra.mxu0 %v1477
  %1569 = vmatprep.subr.mxu0 0.0
  %1570 = vmatpush1.msra.mxu0 %v1478
  %1571 = vmatprep.subr.mxu0 0.0
  %1572 = vmatpush1.msra.mxu0 %v1479
  %1573 = vmatprep.subr.mxu0 0.0
  %1574 = vmatpush1.msra.mxu0 %v1480
  %1575 = vmatprep.subr.mxu0 0.0
  %1576 = vmatpush1.msra.mxu0 %v1481
  %1577 = vmatprep.subr.mxu0 0.0
  %1578 = vmatpush1.msra.mxu0 %v1482
  %1579 = vmatprep.subr.mxu0 0.0
  %1580 = vmatpush1.msra.mxu0 %v1483
  %1581 = vmatprep.subr.mxu0 0.0
  %1582 = vmatpush1.msra.mxu0 %v1484
  %1583 = vmatprep.subr.mxu0 0.0
  %1584 = vmatpush1.msra.mxu0 %v1485
  %1585 = vmatprep.subr.mxu0 0.0
  %1586 = vmatpush1.msra.mxu0 %v1486
  %1587 = vmatprep.subr.mxu0 0.0
  %1588 = vmatpush1.msra.mxu0 %v1487
  %1589 = vmatprep.subr.mxu0 0.0
  %1590 = vmatpush1.msra.mxu0 %v1488
  %1591 = vmatprep.subr.mxu0 0.0
  %1592 = vmatpush1.msra.mxu0 %v1489
  %1593 = vmatprep.mubr.f32.mxu0 %v1101
  %1594 = vmatmul.mubr.f32.gmra.mrb[0].mxu0 %v1099
  %v1595 = vpop.f32.mrb[0].mxu0
  %v1596 = vadd.f32 %v1527, %v1595
  %v1597 = vpop.f32.mrb[0].mxu0
  %1598 = vdwg.mxu0
  %1599 = vmatprep.subr.mxu0 0.0
  %1600 = vmatpush1.msra.mxu0 %v1490
  %1601 = vmatprep.subr.mxu0 0.0
  %1602 = vmatpush1.msra.mxu0 %v1491
  %1603 = vmatprep.subr.mxu0 0.0
  %1604 = vmatpush1.msra.mxu0 %v1492
  %1605 = vmatprep.subr.mxu0 0.0
  %1606 = vmatpush1.msra.mxu0 %v1493
  %1607 = vmatprep.subr.mxu0 0.0
  %1608 = vmatpush1.msra.mxu0 %v1494
  %1609 = vmatprep.subr.mxu0 0.0
  %1610 = vmatpush1.msra.mxu0 %v1495
  %1611 = vmatprep.subr.mxu0 0.0
  %1612 = vmatpush1.msra.mxu0 %v1496
  %1613 = vmatprep.subr.mxu0 0.0
  %1614 = vmatpush1.msra.mxu0 %v1497
  %1615 = vmatprep.subr.mxu0 0.0
  %1616 = vmatpush1.msra.mxu0 %v1498
  %1617 = vmatprep.subr.mxu0 0.0
  %1618 = vmatpush1.msra.mxu0 %v1499
  %1619 = vmatprep.subr.mxu0 0.0
  %1620 = vmatpush1.msra.mxu0 %v1500
  %1621 = vmatprep.subr.mxu0 0.0
  %1622 = vmatpush1.msra.mxu0 %v1501
  %1623 = vmatprep.subr.mxu0 0.0
  %1624 = vmatpush1.msra.mxu0 %v1502
  %1625 = vmatprep.subr.mxu0 0.0
  %1626 = vmatpush1.msra.mxu0 %v1503
  %1627 = vmatprep.subr.mxu0 0.0
  %1628 = vmatpush1.msra.mxu0 %v1504
  %1629 = vmatprep.subr.mxu0 0.0
  %1630 = vmatpush1.msra.mxu0 %v1505
  %1631 = vmatprep.subr.mxu0 0.0
  %1632 = vmatpush1.msra.mxu0 %v1506
  %1633 = vmatprep.subr.mxu0 0.0
  %1634 = vmatpush1.msra.mxu0 %v1507
  %1635 = vmatprep.subr.mxu0 0.0
  %1636 = vmatpush1.msra.mxu0 %v1508
  %1637 = vmatprep.subr.mxu0 0.0
  %1638 = vmatpush1.msra.mxu0 %v1509
  %1639 = vmatprep.subr.mxu0 0.0
  %1640 = vmatpush1.msra.mxu0 %v1510
  %1641 = vmatprep.subr.mxu0 0.0
  %1642 = vmatpush1.msra.mxu0 %v1511
  %1643 = vmatprep.subr.mxu0 0.0
  %1644 = vmatpush1.msra.mxu0 %v1512
  %1645 = vmatprep.subr.mxu0 0.0
  %1646 = vmatpush1.msra.mxu0 %v1513
  %1647 = vmatprep.subr.mxu0 0.0
  %1648 = vmatpush1.msra.mxu0 %v1514
  %1649 = vmatprep.subr.mxu0 0.0
  %1650 = vmatpush1.msra.mxu0 %v1515
  %1651 = vmatprep.subr.mxu0 0.0
  %1652 = vmatpush1.msra.mxu0 %v1516
  %1653 = vmatprep.subr.mxu0 0.0
  %1654 = vmatpush1.msra.mxu0 %v1517
  %1655 = vmatprep.subr.mxu0 0.0
  %1656 = vmatpush1.msra.mxu0 %v1518
  %1657 = vmatprep.subr.mxu0 0.0
  %1658 = vmatpush1.msra.mxu0 %v1519
  %1659 = vmatprep.subr.mxu0 0.0
  %1660 = vmatpush1.msra.mxu0 %v1520
  %1661 = vmatprep.subr.mxu0 0.0
  %1662 = vmatpush1.msra.mxu0 %v1521
  %1663 = vmatprep.mubr.f32.mxu0 %v1456
  %1664 = vmatmul.mubr.f32.gmra.mrb[0].mxu0 %v1454
  %v1665 = vpop.f32.mrb[0].mxu0
  %v1666 = vadd.f32 %v1596, %v1665
  %v1667 = vpop.f32.mrb[0].mxu0
  %1668 = vdwg.mxu0
  %v1669 = vld [vmem:[%s5] sm:$0xff]
  %v1670 = vld [vmem:[%s5 + $0x8] sm:$0xff]
  %v1671 = vld [vmem:[%s5 + $0x10] sm:$0xff]
  %v1672 = vld [vmem:[%s5 + $0x18] sm:$0xff]
  %v1673 = vld [vmem:[%s5 + $0x20] sm:$0xff]
  %v1674 = vld [vmem:[%s5 + $0x28] sm:$0xff]
  %v1675 = vld [vmem:[%s5 + $0x30] sm:$0xff]
  %v1676 = vld [vmem:[%s5 + $0x38] sm:$0xff]
  %v1677 = vld [vmem:[%s5 + $0x40] sm:$0xff]
  %v1678 = vld [vmem:[%s5 + $0x48] sm:$0xff]
  %v1679 = vld [vmem:[%s5 + $0x50] sm:$0xff]
  %v1680 = vld [vmem:[%s5 + $0x58] sm:$0xff]
  %v1681 = vld [vmem:[%s5 + $0x60] sm:$0xff]
  %v1682 = vld [vmem:[%s5 + $0x68] sm:$0xff]
  %v1683 = vld [vmem:[%s5 + $0x70] sm:$0xff]
  %v1684 = vld [vmem:[%s5 + $0x78] sm:$0xff]
  %v1685 = vld [vmem:[#allocation2] sm:$0x1]
  %v1687 = vlaneseq
  %v1688 = vshrl.u32 %v1687, 7
  %v1689 = vsub.s32 0, %v1688
  %v1690 = vrot.slane %v1685, %v1689
  %1692 = vmatprep.subr.mxu0 0.0
  %1693 = vmatpush1.msra.mxu0 %v1669
  %1694 = vmatprep.subr.mxu0 0.0
  %1695 = vmatpush1.msra.mxu0 %v1670
  %1696 = vmatprep.subr.mxu0 0.0
  %1697 = vmatpush1.msra.mxu0 %v1671
  %1698 = vmatprep.subr.mxu0 0.0
  %1699 = vmatpush1.msra.mxu0 %v1672
  %1700 = vmatprep.subr.mxu0 0.0
  %1701 = vmatpush1.msra.mxu0 %v1673
  %1702 = vmatprep.subr.mxu0 0.0
  %1703 = vmatpush1.msra.mxu0 %v1674
  %1704 = vmatprep.subr.mxu0 0.0
  %1705 = vmatpush1.msra.mxu0 %v1675
  %1706 = vmatprep.subr.mxu0 0.0
  %1707 = vmatpush1.msra.mxu0 %v1676
  %1708 = vmatprep.subr.mxu0 0.0
  %1709 = vmatpush1.msra.mxu0 %v1677
  %1710 = vmatprep.subr.mxu0 0.0
  %1711 = vmatpush1.msra.mxu0 %v1678
  %1712 = vmatprep.subr.mxu0 0.0
  %1713 = vmatpush1.msra.mxu0 %v1679
  %1714 = vmatprep.subr.mxu0 0.0
  %1715 = vmatpush1.msra.mxu0 %v1680
  %1716 = vmatprep.subr.mxu0 0.0
  %1717 = vmatpush1.msra.mxu0 %v1681
  %1718 = vmatprep.subr.mxu0 0.0
  %1719 = vmatpush1.msra.mxu0 %v1682
  %1720 = vmatprep.subr.mxu0 0.0
  %1721 = vmatpush1.msra.mxu0 %v1683
  %1722 = vmatprep.subr.mxu0 0.0
  %1723 = vmatpush1.msra.mxu0 %v1684
  %1724 = vmatprep.subr.mxu0 0.0
  %1725 = vmatpush1.msra.mxu0 0.0
  %1726 = vmatprep.subr.mxu0 0.0
  %1727 = vmatpush1.msra.mxu0 0.0
  %1728 = vmatprep.subr.mxu0 0.0
  %1729 = vmatpush1.msra.mxu0 0.0
  %1730 = vmatprep.subr.mxu0 0.0
  %1731 = vmatpush1.msra.mxu0 0.0
  %1732 = vmatprep.subr.mxu0 0.0
  %1733 = vmatpush1.msra.mxu0 0.0
  %1734 = vmatprep.subr.mxu0 0.0
  %1735 = vmatpush1.msra.mxu0 0.0
  %1736 = vmatprep.subr.mxu0 0.0
  %1737 = vmatpush1.msra.mxu0 0.0
  %1738 = vmatprep.subr.mxu0 0.0
  %1739 = vmatpush1.msra.mxu0 0.0
  %1740 = vmatprep.subr.mxu0 0.0
  %1741 = vmatpush1.msra.mxu0 0.0
  %1742 = vmatprep.subr.mxu0 0.0
  %1743 = vmatpush1.msra.mxu0 0.0
  %1744 = vmatprep.subr.mxu0 0.0
  %1745 = vmatpush1.msra.mxu0 0.0
  %1746 = vmatprep.subr.mxu0 0.0
  %1747 = vmatpush1.msra.mxu0 0.0
  %1748 = vmatprep.subr.mxu0 0.0
  %1749 = vmatpush1.msra.mxu0 0.0
  %1750 = vmatprep.subr.mxu0 0.0
  %1751 = vmatpush1.msra.mxu0 0.0
  %1752 = vmatprep.subr.mxu0 0.0
  %1753 = vmatpush1.msra.mxu0 0.0
  %1754 = vmatprep.subr.mxu0 0.0
  %1755 = vmatpush1.msra.mxu0 0.0
  %1756 = vmatprep.mubr.f32.mxu0 0.0
  %1757 = vmatmul.mubr.f32.gmra.mrb[0].mxu0 %v1666
  %v1758 = vpop.f32.mrb[0].mxu0
  %v1759 = vadd.f32 %v1690, %v1758
  %v1760 = vpop.f32.mrb[0].mxu0
  %1761 = vdwg.mxu0
  %vm1762 = vcmask 1024
  %1763 = vst.msk [vmem:[%s7] sm:$0x3] %vm1762, %v1759
  // Predicated region
  $region30: #{cnn_forward.5} parent=0 // pred_check
    _
  $region31: #{cnn_forward.5} parent=0 // pred_check_branch
    %1765 = sbr.rel (0) target = $region33
  $region32: #{cnn_forward.5} parent=0 // pred_region
    _
  $region33: #{cnn_forward.5} parent=0 // pred_fallthru
    _
  // Predicated region
  $region34: #{cnn_forward.5} parent=0 // pred_check
    _
  $region35: #{cnn_forward.5} parent=0 // pred_check_branch
    %1767 = sbr.rel (0) target = $region37
  $region36: #{cnn_forward.5} parent=0 // pred_region
    _
  $region37: #{cnn_forward.5} parent=0 // pred_fallthru
    _

</llo_original>
